<compile_context>
chip_gen: v5e
topology: v5e:2x2
jax: 0.10.0
libtpu: 0.0.40
codegen_flags: <defaults>
</compile_context>

<pallas_src>
import functools

import jax
import jax.numpy as jnp
import numpy as np
from jax import lax
from jax.experimental import pallas as pl
from jax.experimental.pallas import tpu as pltpu

EPS = 1e-5


def _transition_kernel(x_ref, g_ref, be_ref, w_ref, b_ref, o_ref, scr_ref,
                       *, C, Co, Wo, HWo, PAD):
    n = pl.program_id(0)

    # "output column j == 0" lanes of the flattened (Ho, Wo) image; used to
    # zero the left-pad taps (kw == 0).
    lane = lax.broadcasted_iota(jnp.int32, (1, HWo), 1)
    col0 = (lane % Wo) == 0

    # Zero the staging scratch: the first PAD lanes of every row form the zero
    # halo that implements the conv's pad-by-1 on the top/left edges.
    scr_ref[...] = jnp.zeros((C, 4, PAD + HWo), jnp.float32)

    # This sample's phase-split activations: (C, 4, Ho*Wo).
    xn = x_ref[n]

    # Output accumulators (one per output channel), initialized with the conv
    # bias; they live in vregs until the single store per channel at the end.
    accs = [jnp.full((1, HWo), b_ref[co], jnp.float32) for co in range(Co)]

    for ci in range(C):
        # ---- BatchNorm2d (training-mode batch stats) + ReLU, fused ---------
        data = x_ref[:, ci]                               # (N, 4, HWo), whole batch
        m = jnp.mean(data)
        var = jnp.mean(jnp.square(data - m))              # biased variance
        sc = g_ref[ci] * lax.rsqrt(var + EPS)
        sh = be_ref[ci] - m * sc
        act = jnp.maximum(xn[ci] * sc + sh, 0.0)          # (4, HWo)

        # Stage normalized phases behind the zero halo so every tap below is a
        # uniform full-shape read (single store of this channel's activation).
        scr_ref[ci, :, PAD:] = act

        # ---- stride-2 3x3 conv taps, accumulated in registers --------------
        for kh in range(3):
            for kw in range(3):
                # Phase holding the input rows/cols of the parity this tap needs.
                p = (0 if kh == 1 else 1) * 2 + (0 if kw == 1 else 1)
                # Flattened shift: one output row (Wo lanes) for kh==0,
                # one column for kw==0; the halo provides the zero padding.
                s = (Wo if kh == 0 else 0) + (1 if kw == 0 else 0)
                img = scr_ref[ci, p:p + 1, PAD - s:PAD - s + HWo]   # (1, HWo)
                if kw == 0:
                    # j==0 lanes would read the previous row's last element
                    # through the flattening; the true value is the zero pad.
                    img = jnp.where(col0, 0.0, img)
                for co in range(Co):
                    wv = w_ref[(co * C + ci) * 9 + kh * 3 + kw]
                    accs[co] = accs[co] + wv * img

    # Single store per output channel (no read-modify-write of the output).
    for co in range(Co):
        o_ref[0, co:co + 1, :] = accs[co]


def dense_transition_forward(x, gamma, beta, weight, bias):
    """x: (N, C, H, W) f32; weight: (Co, C, 3, 3); returns (N, Co, H//2, W//2)."""
    N, C, H, W = x.shape
    Co = weight.shape[0]
    assert H % 2 == 0 and W % 2 == 0, "stride-2 transition expects even spatial dims"
    Ho, Wo = H // 2, W // 2
    HWo = Ho * Wo
    PAD = Wo + 1  # zero halo: one output row (Wo lanes) + one column

    # Layout plumbing (wrapper-side reshape/transpose only):
    #   xph[n, c, ph*2+pw, i*Wo+j] = x[n, c, 2*i+ph, 2*j+pw]
    xph = (x.reshape(N, C, Ho, 2, Wo, 2)
             .transpose(0, 1, 3, 5, 2, 4)
             .reshape(N, C, 4, HWo))

    kernel = functools.partial(_transition_kernel,
                               C=C, Co=Co, Wo=Wo, HWo=HWo, PAD=PAD)
    smem = pl.BlockSpec(memory_space=pltpu.MemorySpace.SMEM)

    out = pl.pallas_call(
        kernel,
        out_shape=jax.ShapeDtypeStruct((N, Co, HWo), jnp.float32),
        grid=(N,),
        in_specs=[
            # Whole (tiny) batch stays VMEM-resident (constant index map) so
            # each grid step can compute the BatchNorm batch statistics.
            pl.BlockSpec((N, C, 4, HWo), lambda n: (0, 0, 0, 0)),
            smem, smem, smem, smem,   # gamma, beta, conv weight (flat), conv bias
        ],
        out_specs=pl.BlockSpec((1, Co, HWo), lambda n: (n, 0, 0)),
        scratch_shapes=[pltpu.VMEM((C, 4, PAD + HWo), jnp.float32)],
        compiler_params=pltpu.CompilerParams(
            dimension_semantics=("parallel",),
            vmem_limit_bytes=32 * 1024 * 1024),
    )(xph, gamma, beta, weight.reshape(-1), bias)

    return out.reshape(N, Co, Ho, Wo)


def reference_forward(x, gamma, beta, weight, bias):
    """Pure-JAX (XLA conv) reference for validation."""
    m = jnp.mean(x, axis=(0, 2, 3), keepdims=True)
    var = jnp.mean(jnp.square(x - m), axis=(0, 2, 3), keepdims=True)
    y = (x - m) * lax.rsqrt(var + EPS)
    y = y * gamma[None, :, None, None] + beta[None, :, None, None]
    y = jnp.maximum(y, 0.0)
    out = lax.conv_general_dilated(
        y, weight, window_strides=(2, 2), padding=[(1, 1), (1, 1)],
        dimension_numbers=('NCHW', 'OIHW', 'NCHW'))
    return out + bias[None, :, None, None]


if __name__ == "__main__":
    N, C, H, W = 2, 4, 16, 16     # num_input_features = 4
    Co = 8                        # num_output_features = 8

    key = jax.random.PRNGKey(0)
    ks = jax.random.split(key, 5)
    x = jax.random.normal(ks[0], (N, C, H, W), jnp.float32)
    gamma = 1.0 + 0.1 * jax.random.normal(ks[1], (C,), jnp.float32)
    beta = 0.1 * jax.random.normal(ks[2], (C,), jnp.float32)
    weight = 0.2 * jax.random.normal(ks[3], (Co, C, 3, 3), jnp.float32)
    bias = 0.1 * jax.random.normal(ks[4], (Co,), jnp.float32)

    out = jax.block_until_ready(
        dense_transition_forward(x, gamma, beta, weight, bias))
    ref = jax.block_until_ready(
        reference_forward(x, gamma, beta, weight, bias))

    assert out.shape == (N, Co, H // 2, W // 2), out.shape
    if not np.allclose(np.asarray(out), np.asarray(ref), rtol=1e-4, atol=1e-4):
        max_err = float(np.max(np.abs(np.asarray(out) - np.asarray(ref))))
        raise AssertionError(f"mismatch vs reference, max abs err {max_err}")

    print("KERNEL_OK")
</pallas_src>

<mosaic_0001>
module attributes {stable_mosaic.version = 11 : i64} {
  func.func @_transition_kernel(%arg0: i32, %arg1: memref<2x4x4x64xf32, #tpu.memory_space<vmem>>, %arg2: memref<4xf32, #tpu.memory_space<smem>>, %arg3: memref<4xf32, #tpu.memory_space<smem>>, %arg4: memref<288xf32, #tpu.memory_space<smem>>, %arg5: memref<8xf32, #tpu.memory_space<smem>>, %arg6: memref<1x8x64xf32, #tpu.memory_space<vmem>>, %arg7: memref<4x4x73xf32, #tpu.memory_space<vmem>>) attributes {dimension_semantics = [#tpu.dimension_semantics<parallel>], iteration_bounds = array<i64: 2>, scalar_prefetch = 0 : i64, scratch_operands = 1 : i64, tpu.core_type = #tpu.core_type<tc>, window_params = [{pipeline_mode = #tpu.pipeline_mode<synchronous>, transform_indices = @transform_0, window_bounds = array<i64: 2, 4, 4, 64>}, {transform_indices = @transform_1, window_bounds = array<i64: 4>}, {transform_indices = @transform_2, window_bounds = array<i64: 4>}, {transform_indices = @transform_3, window_bounds = array<i64: 288>}, {transform_indices = @transform_4, window_bounds = array<i64: 8>}, {transform_indices = @transform_5, window_bounds = array<i64: 1, 8, 64>}]} {
    %0 = tpu.iota {dimensions = array<i32: 1>} : vector<1x64xi32>
    %c8_i32 = arith.constant 8 : i32
    %c0_i32 = arith.constant 0 : i32
    %1 = arith.cmpi eq, %c8_i32, %c0_i32 : i32
    %c1_i32 = arith.constant 1 : i32
    %2 = arith.select %1, %c1_i32, %c8_i32 : i32
    %3 = vector.broadcast %2 : i32 to vector<1x64xi32>
    %4 = arith.remsi %0, %3 : vector<1x64xi32>
    %c0_i32_0 = arith.constant 0 : i32
    %5 = vector.broadcast %c0_i32_0 : i32 to vector<1x64xi32>
    %6 = arith.cmpi ne, %4, %5 : vector<1x64xi32>
    %c0_i32_1 = arith.constant 0 : i32
    %7 = vector.broadcast %c0_i32_1 : i32 to vector<1x64xi32>
    %8 = arith.cmpi slt, %4, %7 : vector<1x64xi32>
    %c0_i32_2 = arith.constant 0 : i32
    %9 = arith.cmpi slt, %2, %c0_i32_2 : i32
    %10 = vector.broadcast %9 : i1 to vector<1x64xi1>
    %11 = vector.broadcast %10 : vector<1x64xi1> to vector<1x64xi1>
    %12 = arith.xori %8, %11 : vector<1x64xi1>
    %13 = arith.andi %12, %6 : vector<1x64xi1>
    %14 = vector.broadcast %2 : i32 to vector<1x64xi32>
    %15 = arith.addi %4, %14 : vector<1x64xi32>
    %16 = arith.select %13, %15, %4 : vector<1x64xi1>, vector<1x64xi32>
    %c0_i32_3 = arith.constant 0 : i32
    %17 = vector.broadcast %c0_i32_3 : i32 to vector<1x64xi32>
    %18 = arith.cmpi eq, %16, %17 : vector<1x64xi32>
    %cst = arith.constant 0.000000e+00 : f32
    %19 = vector.broadcast %cst : f32 to vector<4x4x73xf32>
    %c0 = arith.constant 0 : index
    %c0_4 = arith.constant 0 : index
    %c0_5 = arith.constant 0 : index
    %20 = vector.load %arg7[%c0, %c0_4, %c0_5] : memref<4x4x73xf32, #tpu.memory_space<vmem>>, vector<4x4x73xf32>
    tpu.vector_store %arg7[%c0, %c0_4, %c0_5], %19 {strides = array<i32>} : memref<4x4x73xf32, #tpu.memory_space<vmem>>, vector<4x4x73xf32>,
    %21 = arith.index_cast %arg0 : i32 to index
    %c0_6 = arith.constant 0 : index
    %c0_7 = arith.constant 0 : index
    %c0_8 = arith.constant 0 : index
    %22 = vector.load %arg1[%21, %c0_6, %c0_7, %c0_8] : memref<2x4x4x64xf32, #tpu.memory_space<vmem>>, vector<1x4x4x64xf32>
    %23 = vector.shape_cast %22 : vector<1x4x4x64xf32> to vector<4x4x64xf32>
    %c0_9 = arith.constant 0 : index
    %24 = memref.load %arg5[%c0_9] : memref<8xf32, #tpu.memory_space<smem>>
    %25 = vector.broadcast %24 : f32 to vector<1x64xf32>
    %c1 = arith.constant 1 : index
    %26 = memref.load %arg5[%c1] : memref<8xf32, #tpu.memory_space<smem>>
    %27 = vector.broadcast %26 : f32 to vector<1x64xf32>
    %c2 = arith.constant 2 : index
    %28 = memref.load %arg5[%c2] : memref<8xf32, #tpu.memory_space<smem>>
    %29 = vector.broadcast %28 : f32 to vector<1x64xf32>
    %c3 = arith.constant 3 : index
    %30 = memref.load %arg5[%c3] : memref<8xf32, #tpu.memory_space<smem>>
    %31 = vector.broadcast %30 : f32 to vector<1x64xf32>
    %c4 = arith.constant 4 : index
    %32 = memref.load %arg5[%c4] : memref<8xf32, #tpu.memory_space<smem>>
    %33 = vector.broadcast %32 : f32 to vector<1x64xf32>
    %c5 = arith.constant 5 : index
    %34 = memref.load %arg5[%c5] : memref<8xf32, #tpu.memory_space<smem>>
    %35 = vector.broadcast %34 : f32 to vector<1x64xf32>
    %c6 = arith.constant 6 : index
    %36 = memref.load %arg5[%c6] : memref<8xf32, #tpu.memory_space<smem>>
    %37 = vector.broadcast %36 : f32 to vector<1x64xf32>
    %c7 = arith.constant 7 : index
    %38 = memref.load %arg5[%c7] : memref<8xf32, #tpu.memory_space<smem>>
    %39 = vector.broadcast %38 : f32 to vector<1x64xf32>
    %c0_10 = arith.constant 0 : index
    %c0_11 = arith.constant 0 : index
    %c0_12 = arith.constant 0 : index
    %c0_13 = arith.constant 0 : index
    %40 = vector.load %arg1[%c0_10, %c0_11, %c0_12, %c0_13] : memref<2x4x4x64xf32, #tpu.memory_space<vmem>>, vector<2x1x4x64xf32>
    %41 = vector.shape_cast %40 : vector<2x1x4x64xf32> to vector<2x4x64xf32>
    %42 = vector.shape_cast %41 : vector<2x4x64xf32> to vector<1x2x4x64xf32>
    %cst_14 = arith.constant dense<0.000000e+00> : vector<1xf32>
    %43 = vector.multi_reduction <add>, %42, %cst_14 [1, 2, 3] : vector<1x2x4x64xf32> to vector<1xf32>
    %44 = vector.shape_cast %43 : vector<1xf32> to vector<1x1x1x1xf32>
    %45 = vector.extract %44[0, 0, 0, 0] : f32 from vector<1x1x1x1xf32>
    %cst_15 = arith.constant 5.120000e+02 : f32
    %46 = arith.divf %45, %cst_15 : f32
    %47 = vector.broadcast %46 : f32 to vector<2x4x64xf32>
    %48 = arith.subf %41, %47 : vector<2x4x64xf32>
    %49 = arith.mulf %48, %48 : vector<2x4x64xf32>
    %50 = vector.shape_cast %49 : vector<2x4x64xf32> to vector<1x2x4x64xf32>
    %cst_16 = arith.constant dense<0.000000e+00> : vector<1xf32>
    %51 = vector.multi_reduction <add>, %50, %cst_16 [1, 2, 3] : vector<1x2x4x64xf32> to vector<1xf32>
    %52 = vector.shape_cast %51 : vector<1xf32> to vector<1x1x1x1xf32>
    %53 = vector.extract %52[0, 0, 0, 0] : f32 from vector<1x1x1x1xf32>
    %cst_17 = arith.constant 5.120000e+02 : f32
    %54 = arith.divf %53, %cst_17 : f32
    %c0_18 = arith.constant 0 : index
    %55 = memref.load %arg2[%c0_18] : memref<4xf32, #tpu.memory_space<smem>>
    %cst_19 = arith.constant 9.99999974E-6 : f32
    %56 = arith.addf %54, %cst_19 : f32
    %57 = math.rsqrt %56 : f32
    %58 = arith.mulf %55, %57 : f32
    %c0_20 = arith.constant 0 : index
    %59 = memref.load %arg3[%c0_20] : memref<4xf32, #tpu.memory_space<smem>>
    %60 = arith.mulf %46, %58 : f32
    %61 = arith.subf %59, %60 : f32
    %62 = vector.extract_strided_slice %23 {offsets = [0, 0, 0], sizes = [1, 4, 64], strides = [1, 1, 1]} : vector<4x4x64xf32> to vector<1x4x64xf32>
    %63 = vector.shape_cast %62 : vector<1x4x64xf32> to vector<4x64xf32>
    %64 = vector.broadcast %58 : f32 to vector<4x64xf32>
    %65 = arith.mulf %63, %64 : vector<4x64xf32>
    %66 = vector.broadcast %61 : f32 to vector<4x64xf32>
    %67 = arith.addf %65, %66 : vector<4x64xf32>
    %cst_21 = arith.constant 0.000000e+00 : f32
    %68 = vector.broadcast %cst_21 : f32 to vector<4x64xf32>
    %69 = arith.maximumf %67, %68 : vector<4x64xf32>
    %c0_22 = arith.constant 0 : index
    %c0_23 = arith.constant 0 : index
    %c9 = arith.constant 9 : index
    %70 = vector.load %arg7[%c0_22, %c0_23, %c9] : memref<4x4x73xf32, #tpu.memory_space<vmem>>, vector<1x4x64xf32>
    %71 = vector.shape_cast %70 : vector<1x4x64xf32> to vector<4x64xf32>
    %72 = vector.shape_cast %69 : vector<4x64xf32> to vector<1x4x64xf32>
    tpu.vector_store %arg7[%c0_22, %c0_23, %c9], %72 {strides = array<i32>} : memref<4x4x73xf32, #tpu.memory_space<vmem>>, vector<1x4x64xf32>,
    %c0_24 = arith.constant 0 : index
    %c3_25 = arith.constant 3 : index
    %c0_26 = arith.constant 0 : index
    %73 = vector.load %arg7[%c0_24, %c3_25, %c0_26] : memref<4x4x73xf32, #tpu.memory_space<vmem>>, vector<1x1x64xf32>
    %74 = vector.shape_cast %73 : vector<1x1x64xf32> to vector<1x64xf32>
    %cst_27 = arith.constant 0.000000e+00 : f32
    %75 = vector.broadcast %cst_27 : f32 to vector<1x64xf32>
    %76 = arith.select %18, %75, %74 : vector<1x64xi1>, vector<1x64xf32>
    %c0_28 = arith.constant 0 : index
    %77 = memref.load %arg4[%c0_28] : memref<288xf32, #tpu.memory_space<smem>>
    %78 = vector.broadcast %77 : f32 to vector<1x64xf32>
    %79 = arith.mulf %78, %76 : vector<1x64xf32>
    %80 = arith.addf %25, %79 : vector<1x64xf32>
    %c36 = arith.constant 36 : index
    %81 = memref.load %arg4[%c36] : memref<288xf32, #tpu.memory_space<smem>>
    %82 = vector.broadcast %81 : f32 to vector<1x64xf32>
    %83 = arith.mulf %82, %76 : vector<1x64xf32>
    %84 = arith.addf %27, %83 : vector<1x64xf32>
    %c72 = arith.constant 72 : index
    %85 = memref.load %arg4[%c72] : memref<288xf32, #tpu.memory_space<smem>>
    %86 = vector.broadcast %85 : f32 to vector<1x64xf32>
    %87 = arith.mulf %86, %76 : vector<1x64xf32>
    %88 = arith.addf %29, %87 : vector<1x64xf32>
    %c108 = arith.constant 108 : index
    %89 = memref.load %arg4[%c108] : memref<288xf32, #tpu.memory_space<smem>>
    %90 = vector.broadcast %89 : f32 to vector<1x64xf32>
    %91 = arith.mulf %90, %76 : vector<1x64xf32>
    %92 = arith.addf %31, %91 : vector<1x64xf32>
    %c144 = arith.constant 144 : index
    %93 = memref.load %arg4[%c144] : memref<288xf32, #tpu.memory_space<smem>>
    %94 = vector.broadcast %93 : f32 to vector<1x64xf32>
    %95 = arith.mulf %94, %76 : vector<1x64xf32>
    %96 = arith.addf %33, %95 : vector<1x64xf32>
    %c180 = arith.constant 180 : index
    %97 = memref.load %arg4[%c180] : memref<288xf32, #tpu.memory_space<smem>>
    %98 = vector.broadcast %97 : f32 to vector<1x64xf32>
    %99 = arith.mulf %98, %76 : vector<1x64xf32>
    %100 = arith.addf %35, %99 : vector<1x64xf32>
    %c216 = arith.constant 216 : index
    %101 = memref.load %arg4[%c216] : memref<288xf32, #tpu.memory_space<smem>>
    %102 = vector.broadcast %101 : f32 to vector<1x64xf32>
    %103 = arith.mulf %102, %76 : vector<1x64xf32>
    %104 = arith.addf %37, %103 : vector<1x64xf32>
    %c252 = arith.constant 252 : index
    %105 = memref.load %arg4[%c252] : memref<288xf32, #tpu.memory_space<smem>>
    %106 = vector.broadcast %105 : f32 to vector<1x64xf32>
    %107 = arith.mulf %106, %76 : vector<1x64xf32>
    %108 = arith.addf %39, %107 : vector<1x64xf32>
    %c0_29 = arith.constant 0 : index
    %c2_30 = arith.constant 2 : index
    %c1_31 = arith.constant 1 : index
    %109 = vector.load %arg7[%c0_29, %c2_30, %c1_31] : memref<4x4x73xf32, #tpu.memory_space<vmem>>, vector<1x1x64xf32>
    %110 = vector.shape_cast %109 : vector<1x1x64xf32> to vector<1x64xf32>
    %c1_32 = arith.constant 1 : index
    %111 = memref.load %arg4[%c1_32] : memref<288xf32, #tpu.memory_space<smem>>
    %112 = vector.broadcast %111 : f32 to vector<1x64xf32>
    %113 = arith.mulf %112, %110 : vector<1x64xf32>
    %114 = arith.addf %80, %113 : vector<1x64xf32>
    %c37 = arith.constant 37 : index
    %115 = memref.load %arg4[%c37] : memref<288xf32, #tpu.memory_space<smem>>
    %116 = vector.broadcast %115 : f32 to vector<1x64xf32>
    %117 = arith.mulf %116, %110 : vector<1x64xf32>
    %118 = arith.addf %84, %117 : vector<1x64xf32>
    %c73 = arith.constant 73 : index
    %119 = memref.load %arg4[%c73] : memref<288xf32, #tpu.memory_space<smem>>
    %120 = vector.broadcast %119 : f32 to vector<1x64xf32>
    %121 = arith.mulf %120, %110 : vector<1x64xf32>
    %122 = arith.addf %88, %121 : vector<1x64xf32>
    %c109 = arith.constant 109 : index
    %123 = memref.load %arg4[%c109] : memref<288xf32, #tpu.memory_space<smem>>
    %124 = vector.broadcast %123 : f32 to vector<1x64xf32>
    %125 = arith.mulf %124, %110 : vector<1x64xf32>
    %126 = arith.addf %92, %125 : vector<1x64xf32>
    %c145 = arith.constant 145 : index
    %127 = memref.load %arg4[%c145] : memref<288xf32, #tpu.memory_space<smem>>
    %128 = vector.broadcast %127 : f32 to vector<1x64xf32>
    %129 = arith.mulf %128, %110 : vector<1x64xf32>
    %130 = arith.addf %96, %129 : vector<1x64xf32>
    %c181 = arith.constant 181 : index
    %131 = memref.load %arg4[%c181] : memref<288xf32, #tpu.memory_space<smem>>
    %132 = vector.broadcast %131 : f32 to vector<1x64xf32>
    %133 = arith.mulf %132, %110 : vector<1x64xf32>
    %134 = arith.addf %100, %133 : vector<1x64xf32>
    %c217 = arith.constant 217 : index
    %135 = memref.load %arg4[%c217] : memref<288xf32, #tpu.memory_space<smem>>
    %136 = vector.broadcast %135 : f32 to vector<1x64xf32>
    %137 = arith.mulf %136, %110 : vector<1x64xf32>
    %138 = arith.addf %104, %137 : vector<1x64xf32>
    %c253 = arith.constant 253 : index
    %139 = memref.load %arg4[%c253] : memref<288xf32, #tpu.memory_space<smem>>
    %140 = vector.broadcast %139 : f32 to vector<1x64xf32>
    %141 = arith.mulf %140, %110 : vector<1x64xf32>
    %142 = arith.addf %108, %141 : vector<1x64xf32>
    %c0_33 = arith.constant 0 : index
    %c3_34 = arith.constant 3 : index
    %c1_35 = arith.constant 1 : index
    %143 = vector.load %arg7[%c0_33, %c3_34, %c1_35] : memref<4x4x73xf32, #tpu.memory_space<vmem>>, vector<1x1x64xf32>
    %144 = vector.shape_cast %143 : vector<1x1x64xf32> to vector<1x64xf32>
    %c2_36 = arith.constant 2 : index
    %145 = memref.load %arg4[%c2_36] : memref<288xf32, #tpu.memory_space<smem>>
    %146 = vector.broadcast %145 : f32 to vector<1x64xf32>
    %147 = arith.mulf %146, %144 : vector<1x64xf32>
    %148 = arith.addf %114, %147 : vector<1x64xf32>
    %c38 = arith.constant 38 : index
    %149 = memref.load %arg4[%c38] : memref<288xf32, #tpu.memory_space<smem>>
    %150 = vector.broadcast %149 : f32 to vector<1x64xf32>
    %151 = arith.mulf %150, %144 : vector<1x64xf32>
    %152 = arith.addf %118, %151 : vector<1x64xf32>
    %c74 = arith.constant 74 : index
    %153 = memref.load %arg4[%c74] : memref<288xf32, #tpu.memory_space<smem>>
    %154 = vector.broadcast %153 : f32 to vector<1x64xf32>
    %155 = arith.mulf %154, %144 : vector<1x64xf32>
    %156 = arith.addf %122, %155 : vector<1x64xf32>
    %c110 = arith.constant 110 : index
    %157 = memref.load %arg4[%c110] : memref<288xf32, #tpu.memory_space<smem>>
    %158 = vector.broadcast %157 : f32 to vector<1x64xf32>
    %159 = arith.mulf %158, %144 : vector<1x64xf32>
    %160 = arith.addf %126, %159 : vector<1x64xf32>
    %c146 = arith.constant 146 : index
    %161 = memref.load %arg4[%c146] : memref<288xf32, #tpu.memory_space<smem>>
    %162 = vector.broadcast %161 : f32 to vector<1x64xf32>
    %163 = arith.mulf %162, %144 : vector<1x64xf32>
    %164 = arith.addf %130, %163 : vector<1x64xf32>
    %c182 = arith.constant 182 : index
    %165 = memref.load %arg4[%c182] : memref<288xf32, #tpu.memory_space<smem>>
    %166 = vector.broadcast %165 : f32 to vector<1x64xf32>
    %167 = arith.mulf %166, %144 : vector<1x64xf32>
    %168 = arith.addf %134, %167 : vector<1x64xf32>
    %c218 = arith.constant 218 : index
    %169 = memref.load %arg4[%c218] : memref<288xf32, #tpu.memory_space<smem>>
    %170 = vector.broadcast %169 : f32 to vector<1x64xf32>
    %171 = arith.mulf %170, %144 : vector<1x64xf32>
    %172 = arith.addf %138, %171 : vector<1x64xf32>
    %c254 = arith.constant 254 : index
    %173 = memref.load %arg4[%c254] : memref<288xf32, #tpu.memory_space<smem>>
    %174 = vector.broadcast %173 : f32 to vector<1x64xf32>
    %175 = arith.mulf %174, %144 : vector<1x64xf32>
    %176 = arith.addf %142, %175 : vector<1x64xf32>
    %c0_37 = arith.constant 0 : index
    %c1_38 = arith.constant 1 : index
    %c8 = arith.constant 8 : index
    %177 = vector.load %arg7[%c0_37, %c1_38, %c8] : memref<4x4x73xf32, #tpu.memory_space<vmem>>, vector<1x1x64xf32>
    %178 = vector.shape_cast %177 : vector<1x1x64xf32> to vector<1x64xf32>
    %cst_39 = arith.constant 0.000000e+00 : f32
    %179 = vector.broadcast %cst_39 : f32 to vector<1x64xf32>
    %180 = arith.select %18, %179, %178 : vector<1x64xi1>, vector<1x64xf32>
    %c3_40 = arith.constant 3 : index
    %181 = memref.load %arg4[%c3_40] : memref<288xf32, #tpu.memory_space<smem>>
    %182 = vector.broadcast %181 : f32 to vector<1x64xf32>
    %183 = arith.mulf %182, %180 : vector<1x64xf32>
    %184 = arith.addf %148, %183 : vector<1x64xf32>
    %c39 = arith.constant 39 : index
    %185 = memref.load %arg4[%c39] : memref<288xf32, #tpu.memory_space<smem>>
    %186 = vector.broadcast %185 : f32 to vector<1x64xf32>
    %187 = arith.mulf %186, %180 : vector<1x64xf32>
    %188 = arith.addf %152, %187 : vector<1x64xf32>
    %c75 = arith.constant 75 : index
    %189 = memref.load %arg4[%c75] : memref<288xf32, #tpu.memory_space<smem>>
    %190 = vector.broadcast %189 : f32 to vector<1x64xf32>
    %191 = arith.mulf %190, %180 : vector<1x64xf32>
    %192 = arith.addf %156, %191 : vector<1x64xf32>
    %c111 = arith.constant 111 : index
    %193 = memref.load %arg4[%c111] : memref<288xf32, #tpu.memory_space<smem>>
    %194 = vector.broadcast %193 : f32 to vector<1x64xf32>
    %195 = arith.mulf %194, %180 : vector<1x64xf32>
    %196 = arith.addf %160, %195 : vector<1x64xf32>
    %c147 = arith.constant 147 : index
    %197 = memref.load %arg4[%c147] : memref<288xf32, #tpu.memory_space<smem>>
    %198 = vector.broadcast %197 : f32 to vector<1x64xf32>
    %199 = arith.mulf %198, %180 : vector<1x64xf32>
    %200 = arith.addf %164, %199 : vector<1x64xf32>
    %c183 = arith.constant 183 : index
    %201 = memref.load %arg4[%c183] : memref<288xf32, #tpu.memory_space<smem>>
    %202 = vector.broadcast %201 : f32 to vector<1x64xf32>
    %203 = arith.mulf %202, %180 : vector<1x64xf32>
    %204 = arith.addf %168, %203 : vector<1x64xf32>
    %c219 = arith.constant 219 : index
    %205 = memref.load %arg4[%c219] : memref<288xf32, #tpu.memory_space<smem>>
    %206 = vector.broadcast %205 : f32 to vector<1x64xf32>
    %207 = arith.mulf %206, %180 : vector<1x64xf32>
    %208 = arith.addf %172, %207 : vector<1x64xf32>
    %c255 = arith.constant 255 : index
    %209 = memref.load %arg4[%c255] : memref<288xf32, #tpu.memory_space<smem>>
    %210 = vector.broadcast %209 : f32 to vector<1x64xf32>
    %211 = arith.mulf %210, %180 : vector<1x64xf32>
    %212 = arith.addf %176, %211 : vector<1x64xf32>
    %c0_41 = arith.constant 0 : index
    %c0_42 = arith.constant 0 : index
    %c9_43 = arith.constant 9 : index
    %213 = vector.load %arg7[%c0_41, %c0_42, %c9_43] : memref<4x4x73xf32, #tpu.memory_space<vmem>>, vector<1x1x64xf32>
    %214 = vector.shape_cast %213 : vector<1x1x64xf32> to vector<1x64xf32>
    %c4_44 = arith.constant 4 : index
    %215 = memref.load %arg4[%c4_44] : memref<288xf32, #tpu.memory_space<smem>>
    %216 = vector.broadcast %215 : f32 to vector<1x64xf32>
    %217 = arith.mulf %216, %214 : vector<1x64xf32>
    %218 = arith.addf %184, %217 : vector<1x64xf32>
    %c40 = arith.constant 40 : index
    %219 = memref.load %arg4[%c40] : memref<288xf32, #tpu.memory_space<smem>>
    %220 = vector.broadcast %219 : f32 to vector<1x64xf32>
    %221 = arith.mulf %220, %214 : vector<1x64xf32>
    %222 = arith.addf %188, %221 : vector<1x64xf32>
    %c76 = arith.constant 76 : index
    %223 = memref.load %arg4[%c76] : memref<288xf32, #tpu.memory_space<smem>>
    %224 = vector.broadcast %223 : f32 to vector<1x64xf32>
    %225 = arith.mulf %224, %214 : vector<1x64xf32>
    %226 = arith.addf %192, %225 : vector<1x64xf32>
    %c112 = arith.constant 112 : index
    %227 = memref.load %arg4[%c112] : memref<288xf32, #tpu.memory_space<smem>>
    %228 = vector.broadcast %227 : f32 to vector<1x64xf32>
    %229 = arith.mulf %228, %214 : vector<1x64xf32>
    %230 = arith.addf %196, %229 : vector<1x64xf32>
    %c148 = arith.constant 148 : index
    %231 = memref.load %arg4[%c148] : memref<288xf32, #tpu.memory_space<smem>>
    %232 = vector.broadcast %231 : f32 to vector<1x64xf32>
    %233 = arith.mulf %232, %214 : vector<1x64xf32>
    %234 = arith.addf %200, %233 : vector<1x64xf32>
    %c184 = arith.constant 184 : index
    %235 = memref.load %arg4[%c184] : memref<288xf32, #tpu.memory_space<smem>>
    %236 = vector.broadcast %235 : f32 to vector<1x64xf32>
    %237 = arith.mulf %236, %214 : vector<1x64xf32>
    %238 = arith.addf %204, %237 : vector<1x64xf32>
    %c220 = arith.constant 220 : index
    %239 = memref.load %arg4[%c220] : memref<288xf32, #tpu.memory_space<smem>>
    %240 = vector.broadcast %239 : f32 to vector<1x64xf32>
    %241 = arith.mulf %240, %214 : vector<1x64xf32>
    %242 = arith.addf %208, %241 : vector<1x64xf32>
    %c256 = arith.constant 256 : index
    %243 = memref.load %arg4[%c256] : memref<288xf32, #tpu.memory_space<smem>>
    %244 = vector.broadcast %243 : f32 to vector<1x64xf32>
    %245 = arith.mulf %244, %214 : vector<1x64xf32>
    %246 = arith.addf %212, %245 : vector<1x64xf32>
    %c0_45 = arith.constant 0 : index
    %c1_46 = arith.constant 1 : index
    %c9_47 = arith.constant 9 : index
    %247 = vector.load %arg7[%c0_45, %c1_46, %c9_47] : memref<4x4x73xf32, #tpu.memory_space<vmem>>, vector<1x1x64xf32>
    %248 = vector.shape_cast %247 : vector<1x1x64xf32> to vector<1x64xf32>
    %c5_48 = arith.constant 5 : index
    %249 = memref.load %arg4[%c5_48] : memref<288xf32, #tpu.memory_space<smem>>
    %250 = vector.broadcast %249 : f32 to vector<1x64xf32>
    %251 = arith.mulf %250, %248 : vector<1x64xf32>
    %252 = arith.addf %218, %251 : vector<1x64xf32>
    %c41 = arith.constant 41 : index
    %253 = memref.load %arg4[%c41] : memref<288xf32, #tpu.memory_space<smem>>
    %254 = vector.broadcast %253 : f32 to vector<1x64xf32>
    %255 = arith.mulf %254, %248 : vector<1x64xf32>
    %256 = arith.addf %222, %255 : vector<1x64xf32>
    %c77 = arith.constant 77 : index
    %257 = memref.load %arg4[%c77] : memref<288xf32, #tpu.memory_space<smem>>
    %258 = vector.broadcast %257 : f32 to vector<1x64xf32>
    %259 = arith.mulf %258, %248 : vector<1x64xf32>
    %260 = arith.addf %226, %259 : vector<1x64xf32>
    %c113 = arith.constant 113 : index
    %261 = memref.load %arg4[%c113] : memref<288xf32, #tpu.memory_space<smem>>
    %262 = vector.broadcast %261 : f32 to vector<1x64xf32>
    %263 = arith.mulf %262, %248 : vector<1x64xf32>
    %264 = arith.addf %230, %263 : vector<1x64xf32>
    %c149 = arith.constant 149 : index
    %265 = memref.load %arg4[%c149] : memref<288xf32, #tpu.memory_space<smem>>
    %266 = vector.broadcast %265 : f32 to vector<1x64xf32>
    %267 = arith.mulf %266, %248 : vector<1x64xf32>
    %268 = arith.addf %234, %267 : vector<1x64xf32>
    %c185 = arith.constant 185 : index
    %269 = memref.load %arg4[%c185] : memref<288xf32, #tpu.memory_space<smem>>
    %270 = vector.broadcast %269 : f32 to vector<1x64xf32>
    %271 = arith.mulf %270, %248 : vector<1x64xf32>
    %272 = arith.addf %238, %271 : vector<1x64xf32>
    %c221 = arith.constant 221 : index
    %273 = memref.load %arg4[%c221] : memref<288xf32, #tpu.memory_space<smem>>
    %274 = vector.broadcast %273 : f32 to vector<1x64xf32>
    %275 = arith.mulf %274, %248 : vector<1x64xf32>
    %276 = arith.addf %242, %275 : vector<1x64xf32>
    %c257 = arith.constant 257 : index
    %277 = memref.load %arg4[%c257] : memref<288xf32, #tpu.memory_space<smem>>
    %278 = vector.broadcast %277 : f32 to vector<1x64xf32>
    %279 = arith.mulf %278, %248 : vector<1x64xf32>
    %280 = arith.addf %246, %279 : vector<1x64xf32>
    %c0_49 = arith.constant 0 : index
    %c3_50 = arith.constant 3 : index
    %c8_51 = arith.constant 8 : index
    %281 = vector.load %arg7[%c0_49, %c3_50, %c8_51] : memref<4x4x73xf32, #tpu.memory_space<vmem>>, vector<1x1x64xf32>
    %282 = vector.shape_cast %281 : vector<1x1x64xf32> to vector<1x64xf32>
    %cst_52 = arith.constant 0.000000e+00 : f32
    %283 = vector.broadcast %cst_52 : f32 to vector<1x64xf32>
    %284 = arith.select %18, %283, %282 : vector<1x64xi1>, vector<1x64xf32>
    %c6_53 = arith.constant 6 : index
    %285 = memref.load %arg4[%c6_53] : memref<288xf32, #tpu.memory_space<smem>>
    %286 = vector.broadcast %285 : f32 to vector<1x64xf32>
    %287 = arith.mulf %286, %284 : vector<1x64xf32>
    %288 = arith.addf %252, %287 : vector<1x64xf32>
    %c42 = arith.constant 42 : index
    %289 = memref.load %arg4[%c42] : memref<288xf32, #tpu.memory_space<smem>>
    %290 = vector.broadcast %289 : f32 to vector<1x64xf32>
    %291 = arith.mulf %290, %284 : vector<1x64xf32>
    %292 = arith.addf %256, %291 : vector<1x64xf32>
    %c78 = arith.constant 78 : index
    %293 = memref.load %arg4[%c78] : memref<288xf32, #tpu.memory_space<smem>>
    %294 = vector.broadcast %293 : f32 to vector<1x64xf32>
    %295 = arith.mulf %294, %284 : vector<1x64xf32>
    %296 = arith.addf %260, %295 : vector<1x64xf32>
    %c114 = arith.constant 114 : index
    %297 = memref.load %arg4[%c114] : memref<288xf32, #tpu.memory_space<smem>>
    %298 = vector.broadcast %297 : f32 to vector<1x64xf32>
    %299 = arith.mulf %298, %284 : vector<1x64xf32>
    %300 = arith.addf %264, %299 : vector<1x64xf32>
    %c150 = arith.constant 150 : index
    %301 = memref.load %arg4[%c150] : memref<288xf32, #tpu.memory_space<smem>>
    %302 = vector.broadcast %301 : f32 to vector<1x64xf32>
    %303 = arith.mulf %302, %284 : vector<1x64xf32>
    %304 = arith.addf %268, %303 : vector<1x64xf32>
    %c186 = arith.constant 186 : index
    %305 = memref.load %arg4[%c186] : memref<288xf32, #tpu.memory_space<smem>>
    %306 = vector.broadcast %305 : f32 to vector<1x64xf32>
    %307 = arith.mulf %306, %284 : vector<1x64xf32>
    %308 = arith.addf %272, %307 : vector<1x64xf32>
    %c222 = arith.constant 222 : index
    %309 = memref.load %arg4[%c222] : memref<288xf32, #tpu.memory_space<smem>>
    %310 = vector.broadcast %309 : f32 to vector<1x64xf32>
    %311 = arith.mulf %310, %284 : vector<1x64xf32>
    %312 = arith.addf %276, %311 : vector<1x64xf32>
    %c258 = arith.constant 258 : index
    %313 = memref.load %arg4[%c258] : memref<288xf32, #tpu.memory_space<smem>>
    %314 = vector.broadcast %313 : f32 to vector<1x64xf32>
    %315 = arith.mulf %314, %284 : vector<1x64xf32>
    %316 = arith.addf %280, %315 : vector<1x64xf32>
    %c0_54 = arith.constant 0 : index
    %c2_55 = arith.constant 2 : index
    %c9_56 = arith.constant 9 : index
    %317 = vector.load %arg7[%c0_54, %c2_55, %c9_56] : memref<4x4x73xf32, #tpu.memory_space<vmem>>, vector<1x1x64xf32>
    %318 = vector.shape_cast %317 : vector<1x1x64xf32> to vector<1x64xf32>
    %c7_57 = arith.constant 7 : index
    %319 = memref.load %arg4[%c7_57] : memref<288xf32, #tpu.memory_space<smem>>
    %320 = vector.broadcast %319 : f32 to vector<1x64xf32>
    %321 = arith.mulf %320, %318 : vector<1x64xf32>
    %322 = arith.addf %288, %321 : vector<1x64xf32>
    %c43 = arith.constant 43 : index
    %323 = memref.load %arg4[%c43] : memref<288xf32, #tpu.memory_space<smem>>
    %324 = vector.broadcast %323 : f32 to vector<1x64xf32>
    %325 = arith.mulf %324, %318 : vector<1x64xf32>
    %326 = arith.addf %292, %325 : vector<1x64xf32>
    %c79 = arith.constant 79 : index
    %327 = memref.load %arg4[%c79] : memref<288xf32, #tpu.memory_space<smem>>
    %328 = vector.broadcast %327 : f32 to vector<1x64xf32>
    %329 = arith.mulf %328, %318 : vector<1x64xf32>
    %330 = arith.addf %296, %329 : vector<1x64xf32>
    %c115 = arith.constant 115 : index
    %331 = memref.load %arg4[%c115] : memref<288xf32, #tpu.memory_space<smem>>
    %332 = vector.broadcast %331 : f32 to vector<1x64xf32>
    %333 = arith.mulf %332, %318 : vector<1x64xf32>
    %334 = arith.addf %300, %333 : vector<1x64xf32>
    %c151 = arith.constant 151 : index
    %335 = memref.load %arg4[%c151] : memref<288xf32, #tpu.memory_space<smem>>
    %336 = vector.broadcast %335 : f32 to vector<1x64xf32>
    %337 = arith.mulf %336, %318 : vector<1x64xf32>
    %338 = arith.addf %304, %337 : vector<1x64xf32>
    %c187 = arith.constant 187 : index
    %339 = memref.load %arg4[%c187] : memref<288xf32, #tpu.memory_space<smem>>
    %340 = vector.broadcast %339 : f32 to vector<1x64xf32>
    %341 = arith.mulf %340, %318 : vector<1x64xf32>
    %342 = arith.addf %308, %341 : vector<1x64xf32>
    %c223 = arith.constant 223 : index
    %343 = memref.load %arg4[%c223] : memref<288xf32, #tpu.memory_space<smem>>
    %344 = vector.broadcast %343 : f32 to vector<1x64xf32>
    %345 = arith.mulf %344, %318 : vector<1x64xf32>
    %346 = arith.addf %312, %345 : vector<1x64xf32>
    %c259 = arith.constant 259 : index
    %347 = memref.load %arg4[%c259] : memref<288xf32, #tpu.memory_space<smem>>
    %348 = vector.broadcast %347 : f32 to vector<1x64xf32>
    %349 = arith.mulf %348, %318 : vector<1x64xf32>
    %350 = arith.addf %316, %349 : vector<1x64xf32>
    %c0_58 = arith.constant 0 : index
    %c3_59 = arith.constant 3 : index
    %c9_60 = arith.constant 9 : index
    %351 = vector.load %arg7[%c0_58, %c3_59, %c9_60] : memref<4x4x73xf32, #tpu.memory_space<vmem>>, vector<1x1x64xf32>
    %352 = vector.shape_cast %351 : vector<1x1x64xf32> to vector<1x64xf32>
    %c8_61 = arith.constant 8 : index
    %353 = memref.load %arg4[%c8_61] : memref<288xf32, #tpu.memory_space<smem>>
    %354 = vector.broadcast %353 : f32 to vector<1x64xf32>
    %355 = arith.mulf %354, %352 : vector<1x64xf32>
    %356 = arith.addf %322, %355 : vector<1x64xf32>
    %c44 = arith.constant 44 : index
    %357 = memref.load %arg4[%c44] : memref<288xf32, #tpu.memory_space<smem>>
    %358 = vector.broadcast %357 : f32 to vector<1x64xf32>
    %359 = arith.mulf %358, %352 : vector<1x64xf32>
    %360 = arith.addf %326, %359 : vector<1x64xf32>
    %c80 = arith.constant 80 : index
    %361 = memref.load %arg4[%c80] : memref<288xf32, #tpu.memory_space<smem>>
    %362 = vector.broadcast %361 : f32 to vector<1x64xf32>
    %363 = arith.mulf %362, %352 : vector<1x64xf32>
    %364 = arith.addf %330, %363 : vector<1x64xf32>
    %c116 = arith.constant 116 : index
    %365 = memref.load %arg4[%c116] : memref<288xf32, #tpu.memory_space<smem>>
    %366 = vector.broadcast %365 : f32 to vector<1x64xf32>
    %367 = arith.mulf %366, %352 : vector<1x64xf32>
    %368 = arith.addf %334, %367 : vector<1x64xf32>
    %c152 = arith.constant 152 : index
    %369 = memref.load %arg4[%c152] : memref<288xf32, #tpu.memory_space<smem>>
    %370 = vector.broadcast %369 : f32 to vector<1x64xf32>
    %371 = arith.mulf %370, %352 : vector<1x64xf32>
    %372 = arith.addf %338, %371 : vector<1x64xf32>
    %c188 = arith.constant 188 : index
    %373 = memref.load %arg4[%c188] : memref<288xf32, #tpu.memory_space<smem>>
    %374 = vector.broadcast %373 : f32 to vector<1x64xf32>
    %375 = arith.mulf %374, %352 : vector<1x64xf32>
    %376 = arith.addf %342, %375 : vector<1x64xf32>
    %c224 = arith.constant 224 : index
    %377 = memref.load %arg4[%c224] : memref<288xf32, #tpu.memory_space<smem>>
    %378 = vector.broadcast %377 : f32 to vector<1x64xf32>
    %379 = arith.mulf %378, %352 : vector<1x64xf32>
    %380 = arith.addf %346, %379 : vector<1x64xf32>
    %c260 = arith.constant 260 : index
    %381 = memref.load %arg4[%c260] : memref<288xf32, #tpu.memory_space<smem>>
    %382 = vector.broadcast %381 : f32 to vector<1x64xf32>
    %383 = arith.mulf %382, %352 : vector<1x64xf32>
    %384 = arith.addf %350, %383 : vector<1x64xf32>
    %c0_62 = arith.constant 0 : index
    %c1_63 = arith.constant 1 : index
    %c0_64 = arith.constant 0 : index
    %c0_65 = arith.constant 0 : index
    %385 = vector.load %arg1[%c0_62, %c1_63, %c0_64, %c0_65] : memref<2x4x4x64xf32, #tpu.memory_space<vmem>>, vector<2x1x4x64xf32>
    %386 = vector.shape_cast %385 : vector<2x1x4x64xf32> to vector<2x4x64xf32>
    %387 = vector.shape_cast %386 : vector<2x4x64xf32> to vector<1x2x4x64xf32>
    %cst_66 = arith.constant dense<0.000000e+00> : vector<1xf32>
    %388 = vector.multi_reduction <add>, %387, %cst_66 [1, 2, 3] : vector<1x2x4x64xf32> to vector<1xf32>
    %389 = vector.shape_cast %388 : vector<1xf32> to vector<1x1x1x1xf32>
    %390 = vector.extract %389[0, 0, 0, 0] : f32 from vector<1x1x1x1xf32>
    %cst_67 = arith.constant 5.120000e+02 : f32
    %391 = arith.divf %390, %cst_67 : f32
    %392 = vector.broadcast %391 : f32 to vector<2x4x64xf32>
    %393 = arith.subf %386, %392 : vector<2x4x64xf32>
    %394 = arith.mulf %393, %393 : vector<2x4x64xf32>
    %395 = vector.shape_cast %394 : vector<2x4x64xf32> to vector<1x2x4x64xf32>
    %cst_68 = arith.constant dense<0.000000e+00> : vector<1xf32>
    %396 = vector.multi_reduction <add>, %395, %cst_68 [1, 2, 3] : vector<1x2x4x64xf32> to vector<1xf32>
    %397 = vector.shape_cast %396 : vector<1xf32> to vector<1x1x1x1xf32>
    %398 = vector.extract %397[0, 0, 0, 0] : f32 from vector<1x1x1x1xf32>
    %cst_69 = arith.constant 5.120000e+02 : f32
    %399 = arith.divf %398, %cst_69 : f32
    %c1_70 = arith.constant 1 : index
    %400 = memref.load %arg2[%c1_70] : memref<4xf32, #tpu.memory_space<smem>>
    %cst_71 = arith.constant 9.99999974E-6 : f32
    %401 = arith.addf %399, %cst_71 : f32
    %402 = math.rsqrt %401 : f32
    %403 = arith.mulf %400, %402 : f32
    %c1_72 = arith.constant 1 : index
    %404 = memref.load %arg3[%c1_72] : memref<4xf32, #tpu.memory_space<smem>>
    %405 = arith.mulf %391, %403 : f32
    %406 = arith.subf %404, %405 : f32
    %407 = vector.extract_strided_slice %23 {offsets = [1, 0, 0], sizes = [1, 4, 64], strides = [1, 1, 1]} : vector<4x4x64xf32> to vector<1x4x64xf32>
    %408 = vector.shape_cast %407 : vector<1x4x64xf32> to vector<4x64xf32>
    %409 = vector.broadcast %403 : f32 to vector<4x64xf32>
    %410 = arith.mulf %408, %409 : vector<4x64xf32>
    %411 = vector.broadcast %406 : f32 to vector<4x64xf32>
    %412 = arith.addf %410, %411 : vector<4x64xf32>
    %cst_73 = arith.constant 0.000000e+00 : f32
    %413 = vector.broadcast %cst_73 : f32 to vector<4x64xf32>
    %414 = arith.maximumf %412, %413 : vector<4x64xf32>
    %c1_74 = arith.constant 1 : index
    %c0_75 = arith.constant 0 : index
    %c9_76 = arith.constant 9 : index
    %415 = vector.load %arg7[%c1_74, %c0_75, %c9_76] : memref<4x4x73xf32, #tpu.memory_space<vmem>>, vector<1x4x64xf32>
    %416 = vector.shape_cast %415 : vector<1x4x64xf32> to vector<4x64xf32>
    %417 = vector.shape_cast %414 : vector<4x64xf32> to vector<1x4x64xf32>
    tpu.vector_store %arg7[%c1_74, %c0_75, %c9_76], %417 {strides = array<i32>} : memref<4x4x73xf32, #tpu.memory_space<vmem>>, vector<1x4x64xf32>,
    %c1_77 = arith.constant 1 : index
    %c3_78 = arith.constant 3 : index
    %c0_79 = arith.constant 0 : index
    %418 = vector.load %arg7[%c1_77, %c3_78, %c0_79] : memref<4x4x73xf32, #tpu.memory_space<vmem>>, vector<1x1x64xf32>
    %419 = vector.shape_cast %418 : vector<1x1x64xf32> to vector<1x64xf32>
    %cst_80 = arith.constant 0.000000e+00 : f32
    %420 = vector.broadcast %cst_80 : f32 to vector<1x64xf32>
    %421 = arith.select %18, %420, %419 : vector<1x64xi1>, vector<1x64xf32>
    %c9_81 = arith.constant 9 : index
    %422 = memref.load %arg4[%c9_81] : memref<288xf32, #tpu.memory_space<smem>>
    %423 = vector.broadcast %422 : f32 to vector<1x64xf32>
    %424 = arith.mulf %423, %421 : vector<1x64xf32>
    %425 = arith.addf %356, %424 : vector<1x64xf32>
    %c45 = arith.constant 45 : index
    %426 = memref.load %arg4[%c45] : memref<288xf32, #tpu.memory_space<smem>>
    %427 = vector.broadcast %426 : f32 to vector<1x64xf32>
    %428 = arith.mulf %427, %421 : vector<1x64xf32>
    %429 = arith.addf %360, %428 : vector<1x64xf32>
    %c81 = arith.constant 81 : index
    %430 = memref.load %arg4[%c81] : memref<288xf32, #tpu.memory_space<smem>>
    %431 = vector.broadcast %430 : f32 to vector<1x64xf32>
    %432 = arith.mulf %431, %421 : vector<1x64xf32>
    %433 = arith.addf %364, %432 : vector<1x64xf32>
    %c117 = arith.constant 117 : index
    %434 = memref.load %arg4[%c117] : memref<288xf32, #tpu.memory_space<smem>>
    %435 = vector.broadcast %434 : f32 to vector<1x64xf32>
    %436 = arith.mulf %435, %421 : vector<1x64xf32>
    %437 = arith.addf %368, %436 : vector<1x64xf32>
    %c153 = arith.constant 153 : index
    %438 = memref.load %arg4[%c153] : memref<288xf32, #tpu.memory_space<smem>>
    %439 = vector.broadcast %438 : f32 to vector<1x64xf32>
    %440 = arith.mulf %439, %421 : vector<1x64xf32>
    %441 = arith.addf %372, %440 : vector<1x64xf32>
    %c189 = arith.constant 189 : index
    %442 = memref.load %arg4[%c189] : memref<288xf32, #tpu.memory_space<smem>>
    %443 = vector.broadcast %442 : f32 to vector<1x64xf32>
    %444 = arith.mulf %443, %421 : vector<1x64xf32>
    %445 = arith.addf %376, %444 : vector<1x64xf32>
    %c225 = arith.constant 225 : index
    %446 = memref.load %arg4[%c225] : memref<288xf32, #tpu.memory_space<smem>>
    %447 = vector.broadcast %446 : f32 to vector<1x64xf32>
    %448 = arith.mulf %447, %421 : vector<1x64xf32>
    %449 = arith.addf %380, %448 : vector<1x64xf32>
    %c261 = arith.constant 261 : index
    %450 = memref.load %arg4[%c261] : memref<288xf32, #tpu.memory_space<smem>>
    %451 = vector.broadcast %450 : f32 to vector<1x64xf32>
    %452 = arith.mulf %451, %421 : vector<1x64xf32>
    %453 = arith.addf %384, %452 : vector<1x64xf32>
    %c1_82 = arith.constant 1 : index
    %c2_83 = arith.constant 2 : index
    %c1_84 = arith.constant 1 : index
    %454 = vector.load %arg7[%c1_82, %c2_83, %c1_84] : memref<4x4x73xf32, #tpu.memory_space<vmem>>, vector<1x1x64xf32>
    %455 = vector.shape_cast %454 : vector<1x1x64xf32> to vector<1x64xf32>
    %c10 = arith.constant 10 : index
    %456 = memref.load %arg4[%c10] : memref<288xf32, #tpu.memory_space<smem>>
    %457 = vector.broadcast %456 : f32 to vector<1x64xf32>
    %458 = arith.mulf %457, %455 : vector<1x64xf32>
    %459 = arith.addf %425, %458 : vector<1x64xf32>
    %c46 = arith.constant 46 : index
    %460 = memref.load %arg4[%c46] : memref<288xf32, #tpu.memory_space<smem>>
    %461 = vector.broadcast %460 : f32 to vector<1x64xf32>
    %462 = arith.mulf %461, %455 : vector<1x64xf32>
    %463 = arith.addf %429, %462 : vector<1x64xf32>
    %c82 = arith.constant 82 : index
    %464 = memref.load %arg4[%c82] : memref<288xf32, #tpu.memory_space<smem>>
    %465 = vector.broadcast %464 : f32 to vector<1x64xf32>
    %466 = arith.mulf %465, %455 : vector<1x64xf32>
    %467 = arith.addf %433, %466 : vector<1x64xf32>
    %c118 = arith.constant 118 : index
    %468 = memref.load %arg4[%c118] : memref<288xf32, #tpu.memory_space<smem>>
    %469 = vector.broadcast %468 : f32 to vector<1x64xf32>
    %470 = arith.mulf %469, %455 : vector<1x64xf32>
    %471 = arith.addf %437, %470 : vector<1x64xf32>
    %c154 = arith.constant 154 : index
    %472 = memref.load %arg4[%c154] : memref<288xf32, #tpu.memory_space<smem>>
    %473 = vector.broadcast %472 : f32 to vector<1x64xf32>
    %474 = arith.mulf %473, %455 : vector<1x64xf32>
    %475 = arith.addf %441, %474 : vector<1x64xf32>
    %c190 = arith.constant 190 : index
    %476 = memref.load %arg4[%c190] : memref<288xf32, #tpu.memory_space<smem>>
    %477 = vector.broadcast %476 : f32 to vector<1x64xf32>
    %478 = arith.mulf %477, %455 : vector<1x64xf32>
    %479 = arith.addf %445, %478 : vector<1x64xf32>
    %c226 = arith.constant 226 : index
    %480 = memref.load %arg4[%c226] : memref<288xf32, #tpu.memory_space<smem>>
    %481 = vector.broadcast %480 : f32 to vector<1x64xf32>
    %482 = arith.mulf %481, %455 : vector<1x64xf32>
    %483 = arith.addf %449, %482 : vector<1x64xf32>
    %c262 = arith.constant 262 : index
    %484 = memref.load %arg4[%c262] : memref<288xf32, #tpu.memory_space<smem>>
    %485 = vector.broadcast %484 : f32 to vector<1x64xf32>
    %486 = arith.mulf %485, %455 : vector<1x64xf32>
    %487 = arith.addf %453, %486 : vector<1x64xf32>
    %c1_85 = arith.constant 1 : index
    %c3_86 = arith.constant 3 : index
    %c1_87 = arith.constant 1 : index
    %488 = vector.load %arg7[%c1_85, %c3_86, %c1_87] : memref<4x4x73xf32, #tpu.memory_space<vmem>>, vector<1x1x64xf32>
    %489 = vector.shape_cast %488 : vector<1x1x64xf32> to vector<1x64xf32>
    %c11 = arith.constant 11 : index
    %490 = memref.load %arg4[%c11] : memref<288xf32, #tpu.memory_space<smem>>
    %491 = vector.broadcast %490 : f32 to vector<1x64xf32>
    %492 = arith.mulf %491, %489 : vector<1x64xf32>
    %493 = arith.addf %459, %492 : vector<1x64xf32>
    %c47 = arith.constant 47 : index
    %494 = memref.load %arg4[%c47] : memref<288xf32, #tpu.memory_space<smem>>
    %495 = vector.broadcast %494 : f32 to vector<1x64xf32>
    %496 = arith.mulf %495, %489 : vector<1x64xf32>
    %497 = arith.addf %463, %496 : vector<1x64xf32>
    %c83 = arith.constant 83 : index
    %498 = memref.load %arg4[%c83] : memref<288xf32, #tpu.memory_space<smem>>
    %499 = vector.broadcast %498 : f32 to vector<1x64xf32>
    %500 = arith.mulf %499, %489 : vector<1x64xf32>
    %501 = arith.addf %467, %500 : vector<1x64xf32>
    %c119 = arith.constant 119 : index
    %502 = memref.load %arg4[%c119] : memref<288xf32, #tpu.memory_space<smem>>
    %503 = vector.broadcast %502 : f32 to vector<1x64xf32>
    %504 = arith.mulf %503, %489 : vector<1x64xf32>
    %505 = arith.addf %471, %504 : vector<1x64xf32>
    %c155 = arith.constant 155 : index
    %506 = memref.load %arg4[%c155] : memref<288xf32, #tpu.memory_space<smem>>
    %507 = vector.broadcast %506 : f32 to vector<1x64xf32>
    %508 = arith.mulf %507, %489 : vector<1x64xf32>
    %509 = arith.addf %475, %508 : vector<1x64xf32>
    %c191 = arith.constant 191 : index
    %510 = memref.load %arg4[%c191] : memref<288xf32, #tpu.memory_space<smem>>
    %511 = vector.broadcast %510 : f32 to vector<1x64xf32>
    %512 = arith.mulf %511, %489 : vector<1x64xf32>
    %513 = arith.addf %479, %512 : vector<1x64xf32>
    %c227 = arith.constant 227 : index
    %514 = memref.load %arg4[%c227] : memref<288xf32, #tpu.memory_space<smem>>
    %515 = vector.broadcast %514 : f32 to vector<1x64xf32>
    %516 = arith.mulf %515, %489 : vector<1x64xf32>
    %517 = arith.addf %483, %516 : vector<1x64xf32>
    %c263 = arith.constant 263 : index
    %518 = memref.load %arg4[%c263] : memref<288xf32, #tpu.memory_space<smem>>
    %519 = vector.broadcast %518 : f32 to vector<1x64xf32>
    %520 = arith.mulf %519, %489 : vector<1x64xf32>
    %521 = arith.addf %487, %520 : vector<1x64xf32>
    %c1_88 = arith.constant 1 : index
    %c1_89 = arith.constant 1 : index
    %c8_90 = arith.constant 8 : index
    %522 = vector.load %arg7[%c1_88, %c1_89, %c8_90] : memref<4x4x73xf32, #tpu.memory_space<vmem>>, vector<1x1x64xf32>
    %523 = vector.shape_cast %522 : vector<1x1x64xf32> to vector<1x64xf32>
    %cst_91 = arith.constant 0.000000e+00 : f32
    %524 = vector.broadcast %cst_91 : f32 to vector<1x64xf32>
    %525 = arith.select %18, %524, %523 : vector<1x64xi1>, vector<1x64xf32>
    %c12 = arith.constant 12 : index
    %526 = memref.load %arg4[%c12] : memref<288xf32, #tpu.memory_space<smem>>
    %527 = vector.broadcast %526 : f32 to vector<1x64xf32>
    %528 = arith.mulf %527, %525 : vector<1x64xf32>
    %529 = arith.addf %493, %528 : vector<1x64xf32>
    %c48 = arith.constant 48 : index
    %530 = memref.load %arg4[%c48] : memref<288xf32, #tpu.memory_space<smem>>
    %531 = vector.broadcast %530 : f32 to vector<1x64xf32>
    %532 = arith.mulf %531, %525 : vector<1x64xf32>
    %533 = arith.addf %497, %532 : vector<1x64xf32>
    %c84 = arith.constant 84 : index
    %534 = memref.load %arg4[%c84] : memref<288xf32, #tpu.memory_space<smem>>
    %535 = vector.broadcast %534 : f32 to vector<1x64xf32>
    %536 = arith.mulf %535, %525 : vector<1x64xf32>
    %537 = arith.addf %501, %536 : vector<1x64xf32>
    %c120 = arith.constant 120 : index
    %538 = memref.load %arg4[%c120] : memref<288xf32, #tpu.memory_space<smem>>
    %539 = vector.broadcast %538 : f32 to vector<1x64xf32>
    %540 = arith.mulf %539, %525 : vector<1x64xf32>
    %541 = arith.addf %505, %540 : vector<1x64xf32>
    %c156 = arith.constant 156 : index
    %542 = memref.load %arg4[%c156] : memref<288xf32, #tpu.memory_space<smem>>
    %543 = vector.broadcast %542 : f32 to vector<1x64xf32>
    %544 = arith.mulf %543, %525 : vector<1x64xf32>
    %545 = arith.addf %509, %544 : vector<1x64xf32>
    %c192 = arith.constant 192 : index
    %546 = memref.load %arg4[%c192] : memref<288xf32, #tpu.memory_space<smem>>
    %547 = vector.broadcast %546 : f32 to vector<1x64xf32>
    %548 = arith.mulf %547, %525 : vector<1x64xf32>
    %549 = arith.addf %513, %548 : vector<1x64xf32>
    %c228 = arith.constant 228 : index
    %550 = memref.load %arg4[%c228] : memref<288xf32, #tpu.memory_space<smem>>
    %551 = vector.broadcast %550 : f32 to vector<1x64xf32>
    %552 = arith.mulf %551, %525 : vector<1x64xf32>
    %553 = arith.addf %517, %552 : vector<1x64xf32>
    %c264 = arith.constant 264 : index
    %554 = memref.load %arg4[%c264] : memref<288xf32, #tpu.memory_space<smem>>
    %555 = vector.broadcast %554 : f32 to vector<1x64xf32>
    %556 = arith.mulf %555, %525 : vector<1x64xf32>
    %557 = arith.addf %521, %556 : vector<1x64xf32>
    %c1_92 = arith.constant 1 : index
    %c0_93 = arith.constant 0 : index
    %c9_94 = arith.constant 9 : index
    %558 = vector.load %arg7[%c1_92, %c0_93, %c9_94] : memref<4x4x73xf32, #tpu.memory_space<vmem>>, vector<1x1x64xf32>
    %559 = vector.shape_cast %558 : vector<1x1x64xf32> to vector<1x64xf32>
    %c13 = arith.constant 13 : index
    %560 = memref.load %arg4[%c13] : memref<288xf32, #tpu.memory_space<smem>>
    %561 = vector.broadcast %560 : f32 to vector<1x64xf32>
    %562 = arith.mulf %561, %559 : vector<1x64xf32>
    %563 = arith.addf %529, %562 : vector<1x64xf32>
    %c49 = arith.constant 49 : index
    %564 = memref.load %arg4[%c49] : memref<288xf32, #tpu.memory_space<smem>>
    %565 = vector.broadcast %564 : f32 to vector<1x64xf32>
    %566 = arith.mulf %565, %559 : vector<1x64xf32>
    %567 = arith.addf %533, %566 : vector<1x64xf32>
    %c85 = arith.constant 85 : index
    %568 = memref.load %arg4[%c85] : memref<288xf32, #tpu.memory_space<smem>>
    %569 = vector.broadcast %568 : f32 to vector<1x64xf32>
    %570 = arith.mulf %569, %559 : vector<1x64xf32>
    %571 = arith.addf %537, %570 : vector<1x64xf32>
    %c121 = arith.constant 121 : index
    %572 = memref.load %arg4[%c121] : memref<288xf32, #tpu.memory_space<smem>>
    %573 = vector.broadcast %572 : f32 to vector<1x64xf32>
    %574 = arith.mulf %573, %559 : vector<1x64xf32>
    %575 = arith.addf %541, %574 : vector<1x64xf32>
    %c157 = arith.constant 157 : index
    %576 = memref.load %arg4[%c157] : memref<288xf32, #tpu.memory_space<smem>>
    %577 = vector.broadcast %576 : f32 to vector<1x64xf32>
    %578 = arith.mulf %577, %559 : vector<1x64xf32>
    %579 = arith.addf %545, %578 : vector<1x64xf32>
    %c193 = arith.constant 193 : index
    %580 = memref.load %arg4[%c193] : memref<288xf32, #tpu.memory_space<smem>>
    %581 = vector.broadcast %580 : f32 to vector<1x64xf32>
    %582 = arith.mulf %581, %559 : vector<1x64xf32>
    %583 = arith.addf %549, %582 : vector<1x64xf32>
    %c229 = arith.constant 229 : index
    %584 = memref.load %arg4[%c229] : memref<288xf32, #tpu.memory_space<smem>>
    %585 = vector.broadcast %584 : f32 to vector<1x64xf32>
    %586 = arith.mulf %585, %559 : vector<1x64xf32>
    %587 = arith.addf %553, %586 : vector<1x64xf32>
    %c265 = arith.constant 265 : index
    %588 = memref.load %arg4[%c265] : memref<288xf32, #tpu.memory_space<smem>>
    %589 = vector.broadcast %588 : f32 to vector<1x64xf32>
    %590 = arith.mulf %589, %559 : vector<1x64xf32>
    %591 = arith.addf %557, %590 : vector<1x64xf32>
    %c1_95 = arith.constant 1 : index
    %c1_96 = arith.constant 1 : index
    %c9_97 = arith.constant 9 : index
    %592 = vector.load %arg7[%c1_95, %c1_96, %c9_97] : memref<4x4x73xf32, #tpu.memory_space<vmem>>, vector<1x1x64xf32>
    %593 = vector.shape_cast %592 : vector<1x1x64xf32> to vector<1x64xf32>
    %c14 = arith.constant 14 : index
    %594 = memref.load %arg4[%c14] : memref<288xf32, #tpu.memory_space<smem>>
    %595 = vector.broadcast %594 : f32 to vector<1x64xf32>
    %596 = arith.mulf %595, %593 : vector<1x64xf32>
    %597 = arith.addf %563, %596 : vector<1x64xf32>
    %c50 = arith.constant 50 : index
    %598 = memref.load %arg4[%c50] : memref<288xf32, #tpu.memory_space<smem>>
    %599 = vector.broadcast %598 : f32 to vector<1x64xf32>
    %600 = arith.mulf %599, %593 : vector<1x64xf32>
    %601 = arith.addf %567, %600 : vector<1x64xf32>
    %c86 = arith.constant 86 : index
    %602 = memref.load %arg4[%c86] : memref<288xf32, #tpu.memory_space<smem>>
    %603 = vector.broadcast %602 : f32 to vector<1x64xf32>
    %604 = arith.mulf %603, %593 : vector<1x64xf32>
    %605 = arith.addf %571, %604 : vector<1x64xf32>
    %c122 = arith.constant 122 : index
    %606 = memref.load %arg4[%c122] : memref<288xf32, #tpu.memory_space<smem>>
    %607 = vector.broadcast %606 : f32 to vector<1x64xf32>
    %608 = arith.mulf %607, %593 : vector<1x64xf32>
    %609 = arith.addf %575, %608 : vector<1x64xf32>
    %c158 = arith.constant 158 : index
    %610 = memref.load %arg4[%c158] : memref<288xf32, #tpu.memory_space<smem>>
    %611 = vector.broadcast %610 : f32 to vector<1x64xf32>
    %612 = arith.mulf %611, %593 : vector<1x64xf32>
    %613 = arith.addf %579, %612 : vector<1x64xf32>
    %c194 = arith.constant 194 : index
    %614 = memref.load %arg4[%c194] : memref<288xf32, #tpu.memory_space<smem>>
    %615 = vector.broadcast %614 : f32 to vector<1x64xf32>
    %616 = arith.mulf %615, %593 : vector<1x64xf32>
    %617 = arith.addf %583, %616 : vector<1x64xf32>
    %c230 = arith.constant 230 : index
    %618 = memref.load %arg4[%c230] : memref<288xf32, #tpu.memory_space<smem>>
    %619 = vector.broadcast %618 : f32 to vector<1x64xf32>
    %620 = arith.mulf %619, %593 : vector<1x64xf32>
    %621 = arith.addf %587, %620 : vector<1x64xf32>
    %c266 = arith.constant 266 : index
    %622 = memref.load %arg4[%c266] : memref<288xf32, #tpu.memory_space<smem>>
    %623 = vector.broadcast %622 : f32 to vector<1x64xf32>
    %624 = arith.mulf %623, %593 : vector<1x64xf32>
    %625 = arith.addf %591, %624 : vector<1x64xf32>
    %c1_98 = arith.constant 1 : index
    %c3_99 = arith.constant 3 : index
    %c8_100 = arith.constant 8 : index
    %626 = vector.load %arg7[%c1_98, %c3_99, %c8_100] : memref<4x4x73xf32, #tpu.memory_space<vmem>>, vector<1x1x64xf32>
    %627 = vector.shape_cast %626 : vector<1x1x64xf32> to vector<1x64xf32>
    %cst_101 = arith.constant 0.000000e+00 : f32
    %628 = vector.broadcast %cst_101 : f32 to vector<1x64xf32>
    %629 = arith.select %18, %628, %627 : vector<1x64xi1>, vector<1x64xf32>
    %c15 = arith.constant 15 : index
    %630 = memref.load %arg4[%c15] : memref<288xf32, #tpu.memory_space<smem>>
    %631 = vector.broadcast %630 : f32 to vector<1x64xf32>
    %632 = arith.mulf %631, %629 : vector<1x64xf32>
    %633 = arith.addf %597, %632 : vector<1x64xf32>
    %c51 = arith.constant 51 : index
    %634 = memref.load %arg4[%c51] : memref<288xf32, #tpu.memory_space<smem>>
    %635 = vector.broadcast %634 : f32 to vector<1x64xf32>
    %636 = arith.mulf %635, %629 : vector<1x64xf32>
    %637 = arith.addf %601, %636 : vector<1x64xf32>
    %c87 = arith.constant 87 : index
    %638 = memref.load %arg4[%c87] : memref<288xf32, #tpu.memory_space<smem>>
    %639 = vector.broadcast %638 : f32 to vector<1x64xf32>
    %640 = arith.mulf %639, %629 : vector<1x64xf32>
    %641 = arith.addf %605, %640 : vector<1x64xf32>
    %c123 = arith.constant 123 : index
    %642 = memref.load %arg4[%c123] : memref<288xf32, #tpu.memory_space<smem>>
    %643 = vector.broadcast %642 : f32 to vector<1x64xf32>
    %644 = arith.mulf %643, %629 : vector<1x64xf32>
    %645 = arith.addf %609, %644 : vector<1x64xf32>
    %c159 = arith.constant 159 : index
    %646 = memref.load %arg4[%c159] : memref<288xf32, #tpu.memory_space<smem>>
    %647 = vector.broadcast %646 : f32 to vector<1x64xf32>
    %648 = arith.mulf %647, %629 : vector<1x64xf32>
    %649 = arith.addf %613, %648 : vector<1x64xf32>
    %c195 = arith.constant 195 : index
    %650 = memref.load %arg4[%c195] : memref<288xf32, #tpu.memory_space<smem>>
    %651 = vector.broadcast %650 : f32 to vector<1x64xf32>
    %652 = arith.mulf %651, %629 : vector<1x64xf32>
    %653 = arith.addf %617, %652 : vector<1x64xf32>
    %c231 = arith.constant 231 : index
    %654 = memref.load %arg4[%c231] : memref<288xf32, #tpu.memory_space<smem>>
    %655 = vector.broadcast %654 : f32 to vector<1x64xf32>
    %656 = arith.mulf %655, %629 : vector<1x64xf32>
    %657 = arith.addf %621, %656 : vector<1x64xf32>
    %c267 = arith.constant 267 : index
    %658 = memref.load %arg4[%c267] : memref<288xf32, #tpu.memory_space<smem>>
    %659 = vector.broadcast %658 : f32 to vector<1x64xf32>
    %660 = arith.mulf %659, %629 : vector<1x64xf32>
    %661 = arith.addf %625, %660 : vector<1x64xf32>
    %c1_102 = arith.constant 1 : index
    %c2_103 = arith.constant 2 : index
    %c9_104 = arith.constant 9 : index
    %662 = vector.load %arg7[%c1_102, %c2_103, %c9_104] : memref<4x4x73xf32, #tpu.memory_space<vmem>>, vector<1x1x64xf32>
    %663 = vector.shape_cast %662 : vector<1x1x64xf32> to vector<1x64xf32>
    %c16 = arith.constant 16 : index
    %664 = memref.load %arg4[%c16] : memref<288xf32, #tpu.memory_space<smem>>
    %665 = vector.broadcast %664 : f32 to vector<1x64xf32>
    %666 = arith.mulf %665, %663 : vector<1x64xf32>
    %667 = arith.addf %633, %666 : vector<1x64xf32>
    %c52 = arith.constant 52 : index
    %668 = memref.load %arg4[%c52] : memref<288xf32, #tpu.memory_space<smem>>
    %669 = vector.broadcast %668 : f32 to vector<1x64xf32>
    %670 = arith.mulf %669, %663 : vector<1x64xf32>
    %671 = arith.addf %637, %670 : vector<1x64xf32>
    %c88 = arith.constant 88 : index
    %672 = memref.load %arg4[%c88] : memref<288xf32, #tpu.memory_space<smem>>
    %673 = vector.broadcast %672 : f32 to vector<1x64xf32>
    %674 = arith.mulf %673, %663 : vector<1x64xf32>
    %675 = arith.addf %641, %674 : vector<1x64xf32>
    %c124 = arith.constant 124 : index
    %676 = memref.load %arg4[%c124] : memref<288xf32, #tpu.memory_space<smem>>
    %677 = vector.broadcast %676 : f32 to vector<1x64xf32>
    %678 = arith.mulf %677, %663 : vector<1x64xf32>
    %679 = arith.addf %645, %678 : vector<1x64xf32>
    %c160 = arith.constant 160 : index
    %680 = memref.load %arg4[%c160] : memref<288xf32, #tpu.memory_space<smem>>
    %681 = vector.broadcast %680 : f32 to vector<1x64xf32>
    %682 = arith.mulf %681, %663 : vector<1x64xf32>
    %683 = arith.addf %649, %682 : vector<1x64xf32>
    %c196 = arith.constant 196 : index
    %684 = memref.load %arg4[%c196] : memref<288xf32, #tpu.memory_space<smem>>
    %685 = vector.broadcast %684 : f32 to vector<1x64xf32>
    %686 = arith.mulf %685, %663 : vector<1x64xf32>
    %687 = arith.addf %653, %686 : vector<1x64xf32>
    %c232 = arith.constant 232 : index
    %688 = memref.load %arg4[%c232] : memref<288xf32, #tpu.memory_space<smem>>
    %689 = vector.broadcast %688 : f32 to vector<1x64xf32>
    %690 = arith.mulf %689, %663 : vector<1x64xf32>
    %691 = arith.addf %657, %690 : vector<1x64xf32>
    %c268 = arith.constant 268 : index
    %692 = memref.load %arg4[%c268] : memref<288xf32, #tpu.memory_space<smem>>
    %693 = vector.broadcast %692 : f32 to vector<1x64xf32>
    %694 = arith.mulf %693, %663 : vector<1x64xf32>
    %695 = arith.addf %661, %694 : vector<1x64xf32>
    %c1_105 = arith.constant 1 : index
    %c3_106 = arith.constant 3 : index
    %c9_107 = arith.constant 9 : index
    %696 = vector.load %arg7[%c1_105, %c3_106, %c9_107] : memref<4x4x73xf32, #tpu.memory_space<vmem>>, vector<1x1x64xf32>
    %697 = vector.shape_cast %696 : vector<1x1x64xf32> to vector<1x64xf32>
    %c17 = arith.constant 17 : index
    %698 = memref.load %arg4[%c17] : memref<288xf32, #tpu.memory_space<smem>>
    %699 = vector.broadcast %698 : f32 to vector<1x64xf32>
    %700 = arith.mulf %699, %697 : vector<1x64xf32>
    %701 = arith.addf %667, %700 : vector<1x64xf32>
    %c53 = arith.constant 53 : index
    %702 = memref.load %arg4[%c53] : memref<288xf32, #tpu.memory_space<smem>>
    %703 = vector.broadcast %702 : f32 to vector<1x64xf32>
    %704 = arith.mulf %703, %697 : vector<1x64xf32>
    %705 = arith.addf %671, %704 : vector<1x64xf32>
    %c89 = arith.constant 89 : index
    %706 = memref.load %arg4[%c89] : memref<288xf32, #tpu.memory_space<smem>>
    %707 = vector.broadcast %706 : f32 to vector<1x64xf32>
    %708 = arith.mulf %707, %697 : vector<1x64xf32>
    %709 = arith.addf %675, %708 : vector<1x64xf32>
    %c125 = arith.constant 125 : index
    %710 = memref.load %arg4[%c125] : memref<288xf32, #tpu.memory_space<smem>>
    %711 = vector.broadcast %710 : f32 to vector<1x64xf32>
    %712 = arith.mulf %711, %697 : vector<1x64xf32>
    %713 = arith.addf %679, %712 : vector<1x64xf32>
    %c161 = arith.constant 161 : index
    %714 = memref.load %arg4[%c161] : memref<288xf32, #tpu.memory_space<smem>>
    %715 = vector.broadcast %714 : f32 to vector<1x64xf32>
    %716 = arith.mulf %715, %697 : vector<1x64xf32>
    %717 = arith.addf %683, %716 : vector<1x64xf32>
    %c197 = arith.constant 197 : index
    %718 = memref.load %arg4[%c197] : memref<288xf32, #tpu.memory_space<smem>>
    %719 = vector.broadcast %718 : f32 to vector<1x64xf32>
    %720 = arith.mulf %719, %697 : vector<1x64xf32>
    %721 = arith.addf %687, %720 : vector<1x64xf32>
    %c233 = arith.constant 233 : index
    %722 = memref.load %arg4[%c233] : memref<288xf32, #tpu.memory_space<smem>>
    %723 = vector.broadcast %722 : f32 to vector<1x64xf32>
    %724 = arith.mulf %723, %697 : vector<1x64xf32>
    %725 = arith.addf %691, %724 : vector<1x64xf32>
    %c269 = arith.constant 269 : index
    %726 = memref.load %arg4[%c269] : memref<288xf32, #tpu.memory_space<smem>>
    %727 = vector.broadcast %726 : f32 to vector<1x64xf32>
    %728 = arith.mulf %727, %697 : vector<1x64xf32>
    %729 = arith.addf %695, %728 : vector<1x64xf32>
    %c0_108 = arith.constant 0 : index
    %c2_109 = arith.constant 2 : index
    %c0_110 = arith.constant 0 : index
    %c0_111 = arith.constant 0 : index
    %730 = vector.load %arg1[%c0_108, %c2_109, %c0_110, %c0_111] : memref<2x4x4x64xf32, #tpu.memory_space<vmem>>, vector<2x1x4x64xf32>
    %731 = vector.shape_cast %730 : vector<2x1x4x64xf32> to vector<2x4x64xf32>
    %732 = vector.shape_cast %731 : vector<2x4x64xf32> to vector<1x2x4x64xf32>
    %cst_112 = arith.constant dense<0.000000e+00> : vector<1xf32>
    %733 = vector.multi_reduction <add>, %732, %cst_112 [1, 2, 3] : vector<1x2x4x64xf32> to vector<1xf32>
    %734 = vector.shape_cast %733 : vector<1xf32> to vector<1x1x1x1xf32>
    %735 = vector.extract %734[0, 0, 0, 0] : f32 from vector<1x1x1x1xf32>
    %cst_113 = arith.constant 5.120000e+02 : f32
    %736 = arith.divf %735, %cst_113 : f32
    %737 = vector.broadcast %736 : f32 to vector<2x4x64xf32>
    %738 = arith.subf %731, %737 : vector<2x4x64xf32>
    %739 = arith.mulf %738, %738 : vector<2x4x64xf32>
    %740 = vector.shape_cast %739 : vector<2x4x64xf32> to vector<1x2x4x64xf32>
    %cst_114 = arith.constant dense<0.000000e+00> : vector<1xf32>
    %741 = vector.multi_reduction <add>, %740, %cst_114 [1, 2, 3] : vector<1x2x4x64xf32> to vector<1xf32>
    %742 = vector.shape_cast %741 : vector<1xf32> to vector<1x1x1x1xf32>
    %743 = vector.extract %742[0, 0, 0, 0] : f32 from vector<1x1x1x1xf32>
    %cst_115 = arith.constant 5.120000e+02 : f32
    %744 = arith.divf %743, %cst_115 : f32
    %c2_116 = arith.constant 2 : index
    %745 = memref.load %arg2[%c2_116] : memref<4xf32, #tpu.memory_space<smem>>
    %cst_117 = arith.constant 9.99999974E-6 : f32
    %746 = arith.addf %744, %cst_117 : f32
    %747 = math.rsqrt %746 : f32
    %748 = arith.mulf %745, %747 : f32
    %c2_118 = arith.constant 2 : index
    %749 = memref.load %arg3[%c2_118] : memref<4xf32, #tpu.memory_space<smem>>
    %750 = arith.mulf %736, %748 : f32
    %751 = arith.subf %749, %750 : f32
    %752 = vector.extract_strided_slice %23 {offsets = [2, 0, 0], sizes = [1, 4, 64], strides = [1, 1, 1]} : vector<4x4x64xf32> to vector<1x4x64xf32>
    %753 = vector.shape_cast %752 : vector<1x4x64xf32> to vector<4x64xf32>
    %754 = vector.broadcast %748 : f32 to vector<4x64xf32>
    %755 = arith.mulf %753, %754 : vector<4x64xf32>
    %756 = vector.broadcast %751 : f32 to vector<4x64xf32>
    %757 = arith.addf %755, %756 : vector<4x64xf32>
    %cst_119 = arith.constant 0.000000e+00 : f32
    %758 = vector.broadcast %cst_119 : f32 to vector<4x64xf32>
    %759 = arith.maximumf %757, %758 : vector<4x64xf32>
    %c2_120 = arith.constant 2 : index
    %c0_121 = arith.constant 0 : index
    %c9_122 = arith.constant 9 : index
    %760 = vector.load %arg7[%c2_120, %c0_121, %c9_122] : memref<4x4x73xf32, #tpu.memory_space<vmem>>, vector<1x4x64xf32>
    %761 = vector.shape_cast %760 : vector<1x4x64xf32> to vector<4x64xf32>
    %762 = vector.shape_cast %759 : vector<4x64xf32> to vector<1x4x64xf32>
    tpu.vector_store %arg7[%c2_120, %c0_121, %c9_122], %762 {strides = array<i32>} : memref<4x4x73xf32, #tpu.memory_space<vmem>>, vector<1x4x64xf32>,
    %c2_123 = arith.constant 2 : index
    %c3_124 = arith.constant 3 : index
    %c0_125 = arith.constant 0 : index
    %763 = vector.load %arg7[%c2_123, %c3_124, %c0_125] : memref<4x4x73xf32, #tpu.memory_space<vmem>>, vector<1x1x64xf32>
    %764 = vector.shape_cast %763 : vector<1x1x64xf32> to vector<1x64xf32>
    %cst_126 = arith.constant 0.000000e+00 : f32
    %765 = vector.broadcast %cst_126 : f32 to vector<1x64xf32>
    %766 = arith.select %18, %765, %764 : vector<1x64xi1>, vector<1x64xf32>
    %c18 = arith.constant 18 : index
    %767 = memref.load %arg4[%c18] : memref<288xf32, #tpu.memory_space<smem>>
    %768 = vector.broadcast %767 : f32 to vector<1x64xf32>
    %769 = arith.mulf %768, %766 : vector<1x64xf32>
    %770 = arith.addf %701, %769 : vector<1x64xf32>
    %c54 = arith.constant 54 : index
    %771 = memref.load %arg4[%c54] : memref<288xf32, #tpu.memory_space<smem>>
    %772 = vector.broadcast %771 : f32 to vector<1x64xf32>
    %773 = arith.mulf %772, %766 : vector<1x64xf32>
    %774 = arith.addf %705, %773 : vector<1x64xf32>
    %c90 = arith.constant 90 : index
    %775 = memref.load %arg4[%c90] : memref<288xf32, #tpu.memory_space<smem>>
    %776 = vector.broadcast %775 : f32 to vector<1x64xf32>
    %777 = arith.mulf %776, %766 : vector<1x64xf32>
    %778 = arith.addf %709, %777 : vector<1x64xf32>
    %c126 = arith.constant 126 : index
    %779 = memref.load %arg4[%c126] : memref<288xf32, #tpu.memory_space<smem>>
    %780 = vector.broadcast %779 : f32 to vector<1x64xf32>
    %781 = arith.mulf %780, %766 : vector<1x64xf32>
    %782 = arith.addf %713, %781 : vector<1x64xf32>
    %c162 = arith.constant 162 : index
    %783 = memref.load %arg4[%c162] : memref<288xf32, #tpu.memory_space<smem>>
    %784 = vector.broadcast %783 : f32 to vector<1x64xf32>
    %785 = arith.mulf %784, %766 : vector<1x64xf32>
    %786 = arith.addf %717, %785 : vector<1x64xf32>
    %c198 = arith.constant 198 : index
    %787 = memref.load %arg4[%c198] : memref<288xf32, #tpu.memory_space<smem>>
    %788 = vector.broadcast %787 : f32 to vector<1x64xf32>
    %789 = arith.mulf %788, %766 : vector<1x64xf32>
    %790 = arith.addf %721, %789 : vector<1x64xf32>
    %c234 = arith.constant 234 : index
    %791 = memref.load %arg4[%c234] : memref<288xf32, #tpu.memory_space<smem>>
    %792 = vector.broadcast %791 : f32 to vector<1x64xf32>
    %793 = arith.mulf %792, %766 : vector<1x64xf32>
    %794 = arith.addf %725, %793 : vector<1x64xf32>
    %c270 = arith.constant 270 : index
    %795 = memref.load %arg4[%c270] : memref<288xf32, #tpu.memory_space<smem>>
    %796 = vector.broadcast %795 : f32 to vector<1x64xf32>
    %797 = arith.mulf %796, %766 : vector<1x64xf32>
    %798 = arith.addf %729, %797 : vector<1x64xf32>
    %c2_127 = arith.constant 2 : index
    %c2_128 = arith.constant 2 : index
    %c1_129 = arith.constant 1 : index
    %799 = vector.load %arg7[%c2_127, %c2_128, %c1_129] : memref<4x4x73xf32, #tpu.memory_space<vmem>>, vector<1x1x64xf32>
    %800 = vector.shape_cast %799 : vector<1x1x64xf32> to vector<1x64xf32>
    %c19 = arith.constant 19 : index
    %801 = memref.load %arg4[%c19] : memref<288xf32, #tpu.memory_space<smem>>
    %802 = vector.broadcast %801 : f32 to vector<1x64xf32>
    %803 = arith.mulf %802, %800 : vector<1x64xf32>
    %804 = arith.addf %770, %803 : vector<1x64xf32>
    %c55 = arith.constant 55 : index
    %805 = memref.load %arg4[%c55] : memref<288xf32, #tpu.memory_space<smem>>
    %806 = vector.broadcast %805 : f32 to vector<1x64xf32>
    %807 = arith.mulf %806, %800 : vector<1x64xf32>
    %808 = arith.addf %774, %807 : vector<1x64xf32>
    %c91 = arith.constant 91 : index
    %809 = memref.load %arg4[%c91] : memref<288xf32, #tpu.memory_space<smem>>
    %810 = vector.broadcast %809 : f32 to vector<1x64xf32>
    %811 = arith.mulf %810, %800 : vector<1x64xf32>
    %812 = arith.addf %778, %811 : vector<1x64xf32>
    %c127 = arith.constant 127 : index
    %813 = memref.load %arg4[%c127] : memref<288xf32, #tpu.memory_space<smem>>
    %814 = vector.broadcast %813 : f32 to vector<1x64xf32>
    %815 = arith.mulf %814, %800 : vector<1x64xf32>
    %816 = arith.addf %782, %815 : vector<1x64xf32>
    %c163 = arith.constant 163 : index
    %817 = memref.load %arg4[%c163] : memref<288xf32, #tpu.memory_space<smem>>
    %818 = vector.broadcast %817 : f32 to vector<1x64xf32>
    %819 = arith.mulf %818, %800 : vector<1x64xf32>
    %820 = arith.addf %786, %819 : vector<1x64xf32>
    %c199 = arith.constant 199 : index
    %821 = memref.load %arg4[%c199] : memref<288xf32, #tpu.memory_space<smem>>
    %822 = vector.broadcast %821 : f32 to vector<1x64xf32>
    %823 = arith.mulf %822, %800 : vector<1x64xf32>
    %824 = arith.addf %790, %823 : vector<1x64xf32>
    %c235 = arith.constant 235 : index
    %825 = memref.load %arg4[%c235] : memref<288xf32, #tpu.memory_space<smem>>
    %826 = vector.broadcast %825 : f32 to vector<1x64xf32>
    %827 = arith.mulf %826, %800 : vector<1x64xf32>
    %828 = arith.addf %794, %827 : vector<1x64xf32>
    %c271 = arith.constant 271 : index
    %829 = memref.load %arg4[%c271] : memref<288xf32, #tpu.memory_space<smem>>
    %830 = vector.broadcast %829 : f32 to vector<1x64xf32>
    %831 = arith.mulf %830, %800 : vector<1x64xf32>
    %832 = arith.addf %798, %831 : vector<1x64xf32>
    %c2_130 = arith.constant 2 : index
    %c3_131 = arith.constant 3 : index
    %c1_132 = arith.constant 1 : index
    %833 = vector.load %arg7[%c2_130, %c3_131, %c1_132] : memref<4x4x73xf32, #tpu.memory_space<vmem>>, vector<1x1x64xf32>
    %834 = vector.shape_cast %833 : vector<1x1x64xf32> to vector<1x64xf32>
    %c20 = arith.constant 20 : index
    %835 = memref.load %arg4[%c20] : memref<288xf32, #tpu.memory_space<smem>>
    %836 = vector.broadcast %835 : f32 to vector<1x64xf32>
    %837 = arith.mulf %836, %834 : vector<1x64xf32>
    %838 = arith.addf %804, %837 : vector<1x64xf32>
    %c56 = arith.constant 56 : index
    %839 = memref.load %arg4[%c56] : memref<288xf32, #tpu.memory_space<smem>>
    %840 = vector.broadcast %839 : f32 to vector<1x64xf32>
    %841 = arith.mulf %840, %834 : vector<1x64xf32>
    %842 = arith.addf %808, %841 : vector<1x64xf32>
    %c92 = arith.constant 92 : index
    %843 = memref.load %arg4[%c92] : memref<288xf32, #tpu.memory_space<smem>>
    %844 = vector.broadcast %843 : f32 to vector<1x64xf32>
    %845 = arith.mulf %844, %834 : vector<1x64xf32>
    %846 = arith.addf %812, %845 : vector<1x64xf32>
    %c128 = arith.constant 128 : index
    %847 = memref.load %arg4[%c128] : memref<288xf32, #tpu.memory_space<smem>>
    %848 = vector.broadcast %847 : f32 to vector<1x64xf32>
    %849 = arith.mulf %848, %834 : vector<1x64xf32>
    %850 = arith.addf %816, %849 : vector<1x64xf32>
    %c164 = arith.constant 164 : index
    %851 = memref.load %arg4[%c164] : memref<288xf32, #tpu.memory_space<smem>>
    %852 = vector.broadcast %851 : f32 to vector<1x64xf32>
    %853 = arith.mulf %852, %834 : vector<1x64xf32>
    %854 = arith.addf %820, %853 : vector<1x64xf32>
    %c200 = arith.constant 200 : index
    %855 = memref.load %arg4[%c200] : memref<288xf32, #tpu.memory_space<smem>>
    %856 = vector.broadcast %855 : f32 to vector<1x64xf32>
    %857 = arith.mulf %856, %834 : vector<1x64xf32>
    %858 = arith.addf %824, %857 : vector<1x64xf32>
    %c236 = arith.constant 236 : index
    %859 = memref.load %arg4[%c236] : memref<288xf32, #tpu.memory_space<smem>>
    %860 = vector.broadcast %859 : f32 to vector<1x64xf32>
    %861 = arith.mulf %860, %834 : vector<1x64xf32>
    %862 = arith.addf %828, %861 : vector<1x64xf32>
    %c272 = arith.constant 272 : index
    %863 = memref.load %arg4[%c272] : memref<288xf32, #tpu.memory_space<smem>>
    %864 = vector.broadcast %863 : f32 to vector<1x64xf32>
    %865 = arith.mulf %864, %834 : vector<1x64xf32>
    %866 = arith.addf %832, %865 : vector<1x64xf32>
    %c2_133 = arith.constant 2 : index
    %c1_134 = arith.constant 1 : index
    %c8_135 = arith.constant 8 : index
    %867 = vector.load %arg7[%c2_133, %c1_134, %c8_135] : memref<4x4x73xf32, #tpu.memory_space<vmem>>, vector<1x1x64xf32>
    %868 = vector.shape_cast %867 : vector<1x1x64xf32> to vector<1x64xf32>
    %cst_136 = arith.constant 0.000000e+00 : f32
    %869 = vector.broadcast %cst_136 : f32 to vector<1x64xf32>
    %870 = arith.select %18, %869, %868 : vector<1x64xi1>, vector<1x64xf32>
    %c21 = arith.constant 21 : index
    %871 = memref.load %arg4[%c21] : memref<288xf32, #tpu.memory_space<smem>>
    %872 = vector.broadcast %871 : f32 to vector<1x64xf32>
    %873 = arith.mulf %872, %870 : vector<1x64xf32>
    %874 = arith.addf %838, %873 : vector<1x64xf32>
    %c57 = arith.constant 57 : index
    %875 = memref.load %arg4[%c57] : memref<288xf32, #tpu.memory_space<smem>>
    %876 = vector.broadcast %875 : f32 to vector<1x64xf32>
    %877 = arith.mulf %876, %870 : vector<1x64xf32>
    %878 = arith.addf %842, %877 : vector<1x64xf32>
    %c93 = arith.constant 93 : index
    %879 = memref.load %arg4[%c93] : memref<288xf32, #tpu.memory_space<smem>>
    %880 = vector.broadcast %879 : f32 to vector<1x64xf32>
    %881 = arith.mulf %880, %870 : vector<1x64xf32>
    %882 = arith.addf %846, %881 : vector<1x64xf32>
    %c129 = arith.constant 129 : index
    %883 = memref.load %arg4[%c129] : memref<288xf32, #tpu.memory_space<smem>>
    %884 = vector.broadcast %883 : f32 to vector<1x64xf32>
    %885 = arith.mulf %884, %870 : vector<1x64xf32>
    %886 = arith.addf %850, %885 : vector<1x64xf32>
    %c165 = arith.constant 165 : index
    %887 = memref.load %arg4[%c165] : memref<288xf32, #tpu.memory_space<smem>>
    %888 = vector.broadcast %887 : f32 to vector<1x64xf32>
    %889 = arith.mulf %888, %870 : vector<1x64xf32>
    %890 = arith.addf %854, %889 : vector<1x64xf32>
    %c201 = arith.constant 201 : index
    %891 = memref.load %arg4[%c201] : memref<288xf32, #tpu.memory_space<smem>>
    %892 = vector.broadcast %891 : f32 to vector<1x64xf32>
    %893 = arith.mulf %892, %870 : vector<1x64xf32>
    %894 = arith.addf %858, %893 : vector<1x64xf32>
    %c237 = arith.constant 237 : index
    %895 = memref.load %arg4[%c237] : memref<288xf32, #tpu.memory_space<smem>>
    %896 = vector.broadcast %895 : f32 to vector<1x64xf32>
    %897 = arith.mulf %896, %870 : vector<1x64xf32>
    %898 = arith.addf %862, %897 : vector<1x64xf32>
    %c273 = arith.constant 273 : index
    %899 = memref.load %arg4[%c273] : memref<288xf32, #tpu.memory_space<smem>>
    %900 = vector.broadcast %899 : f32 to vector<1x64xf32>
    %901 = arith.mulf %900, %870 : vector<1x64xf32>
    %902 = arith.addf %866, %901 : vector<1x64xf32>
    %c2_137 = arith.constant 2 : index
    %c0_138 = arith.constant 0 : index
    %c9_139 = arith.constant 9 : index
    %903 = vector.load %arg7[%c2_137, %c0_138, %c9_139] : memref<4x4x73xf32, #tpu.memory_space<vmem>>, vector<1x1x64xf32>
    %904 = vector.shape_cast %903 : vector<1x1x64xf32> to vector<1x64xf32>
    %c22 = arith.constant 22 : index
    %905 = memref.load %arg4[%c22] : memref<288xf32, #tpu.memory_space<smem>>
    %906 = vector.broadcast %905 : f32 to vector<1x64xf32>
    %907 = arith.mulf %906, %904 : vector<1x64xf32>
    %908 = arith.addf %874, %907 : vector<1x64xf32>
    %c58 = arith.constant 58 : index
    %909 = memref.load %arg4[%c58] : memref<288xf32, #tpu.memory_space<smem>>
    %910 = vector.broadcast %909 : f32 to vector<1x64xf32>
    %911 = arith.mulf %910, %904 : vector<1x64xf32>
    %912 = arith.addf %878, %911 : vector<1x64xf32>
    %c94 = arith.constant 94 : index
    %913 = memref.load %arg4[%c94] : memref<288xf32, #tpu.memory_space<smem>>
    %914 = vector.broadcast %913 : f32 to vector<1x64xf32>
    %915 = arith.mulf %914, %904 : vector<1x64xf32>
    %916 = arith.addf %882, %915 : vector<1x64xf32>
    %c130 = arith.constant 130 : index
    %917 = memref.load %arg4[%c130] : memref<288xf32, #tpu.memory_space<smem>>
    %918 = vector.broadcast %917 : f32 to vector<1x64xf32>
    %919 = arith.mulf %918, %904 : vector<1x64xf32>
    %920 = arith.addf %886, %919 : vector<1x64xf32>
    %c166 = arith.constant 166 : index
    %921 = memref.load %arg4[%c166] : memref<288xf32, #tpu.memory_space<smem>>
    %922 = vector.broadcast %921 : f32 to vector<1x64xf32>
    %923 = arith.mulf %922, %904 : vector<1x64xf32>
    %924 = arith.addf %890, %923 : vector<1x64xf32>
    %c202 = arith.constant 202 : index
    %925 = memref.load %arg4[%c202] : memref<288xf32, #tpu.memory_space<smem>>
    %926 = vector.broadcast %925 : f32 to vector<1x64xf32>
    %927 = arith.mulf %926, %904 : vector<1x64xf32>
    %928 = arith.addf %894, %927 : vector<1x64xf32>
    %c238 = arith.constant 238 : index
    %929 = memref.load %arg4[%c238] : memref<288xf32, #tpu.memory_space<smem>>
    %930 = vector.broadcast %929 : f32 to vector<1x64xf32>
    %931 = arith.mulf %930, %904 : vector<1x64xf32>
    %932 = arith.addf %898, %931 : vector<1x64xf32>
    %c274 = arith.constant 274 : index
    %933 = memref.load %arg4[%c274] : memref<288xf32, #tpu.memory_space<smem>>
    %934 = vector.broadcast %933 : f32 to vector<1x64xf32>
    %935 = arith.mulf %934, %904 : vector<1x64xf32>
    %936 = arith.addf %902, %935 : vector<1x64xf32>
    %c2_140 = arith.constant 2 : index
    %c1_141 = arith.constant 1 : index
    %c9_142 = arith.constant 9 : index
    %937 = vector.load %arg7[%c2_140, %c1_141, %c9_142] : memref<4x4x73xf32, #tpu.memory_space<vmem>>, vector<1x1x64xf32>
    %938 = vector.shape_cast %937 : vector<1x1x64xf32> to vector<1x64xf32>
    %c23 = arith.constant 23 : index
    %939 = memref.load %arg4[%c23] : memref<288xf32, #tpu.memory_space<smem>>
    %940 = vector.broadcast %939 : f32 to vector<1x64xf32>
    %941 = arith.mulf %940, %938 : vector<1x64xf32>
    %942 = arith.addf %908, %941 : vector<1x64xf32>
    %c59 = arith.constant 59 : index
    %943 = memref.load %arg4[%c59] : memref<288xf32, #tpu.memory_space<smem>>
    %944 = vector.broadcast %943 : f32 to vector<1x64xf32>
    %945 = arith.mulf %944, %938 : vector<1x64xf32>
    %946 = arith.addf %912, %945 : vector<1x64xf32>
    %c95 = arith.constant 95 : index
    %947 = memref.load %arg4[%c95] : memref<288xf32, #tpu.memory_space<smem>>
    %948 = vector.broadcast %947 : f32 to vector<1x64xf32>
    %949 = arith.mulf %948, %938 : vector<1x64xf32>
    %950 = arith.addf %916, %949 : vector<1x64xf32>
    %c131 = arith.constant 131 : index
    %951 = memref.load %arg4[%c131] : memref<288xf32, #tpu.memory_space<smem>>
    %952 = vector.broadcast %951 : f32 to vector<1x64xf32>
    %953 = arith.mulf %952, %938 : vector<1x64xf32>
    %954 = arith.addf %920, %953 : vector<1x64xf32>
    %c167 = arith.constant 167 : index
    %955 = memref.load %arg4[%c167] : memref<288xf32, #tpu.memory_space<smem>>
    %956 = vector.broadcast %955 : f32 to vector<1x64xf32>
    %957 = arith.mulf %956, %938 : vector<1x64xf32>
    %958 = arith.addf %924, %957 : vector<1x64xf32>
    %c203 = arith.constant 203 : index
    %959 = memref.load %arg4[%c203] : memref<288xf32, #tpu.memory_space<smem>>
    %960 = vector.broadcast %959 : f32 to vector<1x64xf32>
    %961 = arith.mulf %960, %938 : vector<1x64xf32>
    %962 = arith.addf %928, %961 : vector<1x64xf32>
    %c239 = arith.constant 239 : index
    %963 = memref.load %arg4[%c239] : memref<288xf32, #tpu.memory_space<smem>>
    %964 = vector.broadcast %963 : f32 to vector<1x64xf32>
    %965 = arith.mulf %964, %938 : vector<1x64xf32>
    %966 = arith.addf %932, %965 : vector<1x64xf32>
    %c275 = arith.constant 275 : index
    %967 = memref.load %arg4[%c275] : memref<288xf32, #tpu.memory_space<smem>>
    %968 = vector.broadcast %967 : f32 to vector<1x64xf32>
    %969 = arith.mulf %968, %938 : vector<1x64xf32>
    %970 = arith.addf %936, %969 : vector<1x64xf32>
    %c2_143 = arith.constant 2 : index
    %c3_144 = arith.constant 3 : index
    %c8_145 = arith.constant 8 : index
    %971 = vector.load %arg7[%c2_143, %c3_144, %c8_145] : memref<4x4x73xf32, #tpu.memory_space<vmem>>, vector<1x1x64xf32>
    %972 = vector.shape_cast %971 : vector<1x1x64xf32> to vector<1x64xf32>
    %cst_146 = arith.constant 0.000000e+00 : f32
    %973 = vector.broadcast %cst_146 : f32 to vector<1x64xf32>
    %974 = arith.select %18, %973, %972 : vector<1x64xi1>, vector<1x64xf32>
    %c24 = arith.constant 24 : index
    %975 = memref.load %arg4[%c24] : memref<288xf32, #tpu.memory_space<smem>>
    %976 = vector.broadcast %975 : f32 to vector<1x64xf32>
    %977 = arith.mulf %976, %974 : vector<1x64xf32>
    %978 = arith.addf %942, %977 : vector<1x64xf32>
    %c60 = arith.constant 60 : index
    %979 = memref.load %arg4[%c60] : memref<288xf32, #tpu.memory_space<smem>>
    %980 = vector.broadcast %979 : f32 to vector<1x64xf32>
    %981 = arith.mulf %980, %974 : vector<1x64xf32>
    %982 = arith.addf %946, %981 : vector<1x64xf32>
    %c96 = arith.constant 96 : index
    %983 = memref.load %arg4[%c96] : memref<288xf32, #tpu.memory_space<smem>>
    %984 = vector.broadcast %983 : f32 to vector<1x64xf32>
    %985 = arith.mulf %984, %974 : vector<1x64xf32>
    %986 = arith.addf %950, %985 : vector<1x64xf32>
    %c132 = arith.constant 132 : index
    %987 = memref.load %arg4[%c132] : memref<288xf32, #tpu.memory_space<smem>>
    %988 = vector.broadcast %987 : f32 to vector<1x64xf32>
    %989 = arith.mulf %988, %974 : vector<1x64xf32>
    %990 = arith.addf %954, %989 : vector<1x64xf32>
    %c168 = arith.constant 168 : index
    %991 = memref.load %arg4[%c168] : memref<288xf32, #tpu.memory_space<smem>>
    %992 = vector.broadcast %991 : f32 to vector<1x64xf32>
    %993 = arith.mulf %992, %974 : vector<1x64xf32>
    %994 = arith.addf %958, %993 : vector<1x64xf32>
    %c204 = arith.constant 204 : index
    %995 = memref.load %arg4[%c204] : memref<288xf32, #tpu.memory_space<smem>>
    %996 = vector.broadcast %995 : f32 to vector<1x64xf32>
    %997 = arith.mulf %996, %974 : vector<1x64xf32>
    %998 = arith.addf %962, %997 : vector<1x64xf32>
    %c240 = arith.constant 240 : index
    %999 = memref.load %arg4[%c240] : memref<288xf32, #tpu.memory_space<smem>>
    %1000 = vector.broadcast %999 : f32 to vector<1x64xf32>
    %1001 = arith.mulf %1000, %974 : vector<1x64xf32>
    %1002 = arith.addf %966, %1001 : vector<1x64xf32>
    %c276 = arith.constant 276 : index
    %1003 = memref.load %arg4[%c276] : memref<288xf32, #tpu.memory_space<smem>>
    %1004 = vector.broadcast %1003 : f32 to vector<1x64xf32>
    %1005 = arith.mulf %1004, %974 : vector<1x64xf32>
    %1006 = arith.addf %970, %1005 : vector<1x64xf32>
    %c2_147 = arith.constant 2 : index
    %c2_148 = arith.constant 2 : index
    %c9_149 = arith.constant 9 : index
    %1007 = vector.load %arg7[%c2_147, %c2_148, %c9_149] : memref<4x4x73xf32, #tpu.memory_space<vmem>>, vector<1x1x64xf32>
    %1008 = vector.shape_cast %1007 : vector<1x1x64xf32> to vector<1x64xf32>
    %c25 = arith.constant 25 : index
    %1009 = memref.load %arg4[%c25] : memref<288xf32, #tpu.memory_space<smem>>
    %1010 = vector.broadcast %1009 : f32 to vector<1x64xf32>
    %1011 = arith.mulf %1010, %1008 : vector<1x64xf32>
    %1012 = arith.addf %978, %1011 : vector<1x64xf32>
    %c61 = arith.constant 61 : index
    %1013 = memref.load %arg4[%c61] : memref<288xf32, #tpu.memory_space<smem>>
    %1014 = vector.broadcast %1013 : f32 to vector<1x64xf32>
    %1015 = arith.mulf %1014, %1008 : vector<1x64xf32>
    %1016 = arith.addf %982, %1015 : vector<1x64xf32>
    %c97 = arith.constant 97 : index
    %1017 = memref.load %arg4[%c97] : memref<288xf32, #tpu.memory_space<smem>>
    %1018 = vector.broadcast %1017 : f32 to vector<1x64xf32>
    %1019 = arith.mulf %1018, %1008 : vector<1x64xf32>
    %1020 = arith.addf %986, %1019 : vector<1x64xf32>
    %c133 = arith.constant 133 : index
    %1021 = memref.load %arg4[%c133] : memref<288xf32, #tpu.memory_space<smem>>
    %1022 = vector.broadcast %1021 : f32 to vector<1x64xf32>
    %1023 = arith.mulf %1022, %1008 : vector<1x64xf32>
    %1024 = arith.addf %990, %1023 : vector<1x64xf32>
    %c169 = arith.constant 169 : index
    %1025 = memref.load %arg4[%c169] : memref<288xf32, #tpu.memory_space<smem>>
    %1026 = vector.broadcast %1025 : f32 to vector<1x64xf32>
    %1027 = arith.mulf %1026, %1008 : vector<1x64xf32>
    %1028 = arith.addf %994, %1027 : vector<1x64xf32>
    %c205 = arith.constant 205 : index
    %1029 = memref.load %arg4[%c205] : memref<288xf32, #tpu.memory_space<smem>>
    %1030 = vector.broadcast %1029 : f32 to vector<1x64xf32>
    %1031 = arith.mulf %1030, %1008 : vector<1x64xf32>
    %1032 = arith.addf %998, %1031 : vector<1x64xf32>
    %c241 = arith.constant 241 : index
    %1033 = memref.load %arg4[%c241] : memref<288xf32, #tpu.memory_space<smem>>
    %1034 = vector.broadcast %1033 : f32 to vector<1x64xf32>
    %1035 = arith.mulf %1034, %1008 : vector<1x64xf32>
    %1036 = arith.addf %1002, %1035 : vector<1x64xf32>
    %c277 = arith.constant 277 : index
    %1037 = memref.load %arg4[%c277] : memref<288xf32, #tpu.memory_space<smem>>
    %1038 = vector.broadcast %1037 : f32 to vector<1x64xf32>
    %1039 = arith.mulf %1038, %1008 : vector<1x64xf32>
    %1040 = arith.addf %1006, %1039 : vector<1x64xf32>
    %c2_150 = arith.constant 2 : index
    %c3_151 = arith.constant 3 : index
    %c9_152 = arith.constant 9 : index
    %1041 = vector.load %arg7[%c2_150, %c3_151, %c9_152] : memref<4x4x73xf32, #tpu.memory_space<vmem>>, vector<1x1x64xf32>
    %1042 = vector.shape_cast %1041 : vector<1x1x64xf32> to vector<1x64xf32>
    %c26 = arith.constant 26 : index
    %1043 = memref.load %arg4[%c26] : memref<288xf32, #tpu.memory_space<smem>>
    %1044 = vector.broadcast %1043 : f32 to vector<1x64xf32>
    %1045 = arith.mulf %1044, %1042 : vector<1x64xf32>
    %1046 = arith.addf %1012, %1045 : vector<1x64xf32>
    %c62 = arith.constant 62 : index
    %1047 = memref.load %arg4[%c62] : memref<288xf32, #tpu.memory_space<smem>>
    %1048 = vector.broadcast %1047 : f32 to vector<1x64xf32>
    %1049 = arith.mulf %1048, %1042 : vector<1x64xf32>
    %1050 = arith.addf %1016, %1049 : vector<1x64xf32>
    %c98 = arith.constant 98 : index
    %1051 = memref.load %arg4[%c98] : memref<288xf32, #tpu.memory_space<smem>>
    %1052 = vector.broadcast %1051 : f32 to vector<1x64xf32>
    %1053 = arith.mulf %1052, %1042 : vector<1x64xf32>
    %1054 = arith.addf %1020, %1053 : vector<1x64xf32>
    %c134 = arith.constant 134 : index
    %1055 = memref.load %arg4[%c134] : memref<288xf32, #tpu.memory_space<smem>>
    %1056 = vector.broadcast %1055 : f32 to vector<1x64xf32>
    %1057 = arith.mulf %1056, %1042 : vector<1x64xf32>
    %1058 = arith.addf %1024, %1057 : vector<1x64xf32>
    %c170 = arith.constant 170 : index
    %1059 = memref.load %arg4[%c170] : memref<288xf32, #tpu.memory_space<smem>>
    %1060 = vector.broadcast %1059 : f32 to vector<1x64xf32>
    %1061 = arith.mulf %1060, %1042 : vector<1x64xf32>
    %1062 = arith.addf %1028, %1061 : vector<1x64xf32>
    %c206 = arith.constant 206 : index
    %1063 = memref.load %arg4[%c206] : memref<288xf32, #tpu.memory_space<smem>>
    %1064 = vector.broadcast %1063 : f32 to vector<1x64xf32>
    %1065 = arith.mulf %1064, %1042 : vector<1x64xf32>
    %1066 = arith.addf %1032, %1065 : vector<1x64xf32>
    %c242 = arith.constant 242 : index
    %1067 = memref.load %arg4[%c242] : memref<288xf32, #tpu.memory_space<smem>>
    %1068 = vector.broadcast %1067 : f32 to vector<1x64xf32>
    %1069 = arith.mulf %1068, %1042 : vector<1x64xf32>
    %1070 = arith.addf %1036, %1069 : vector<1x64xf32>
    %c278 = arith.constant 278 : index
    %1071 = memref.load %arg4[%c278] : memref<288xf32, #tpu.memory_space<smem>>
    %1072 = vector.broadcast %1071 : f32 to vector<1x64xf32>
    %1073 = arith.mulf %1072, %1042 : vector<1x64xf32>
    %1074 = arith.addf %1040, %1073 : vector<1x64xf32>
    %c0_153 = arith.constant 0 : index
    %c3_154 = arith.constant 3 : index
    %c0_155 = arith.constant 0 : index
    %c0_156 = arith.constant 0 : index
    %1075 = vector.load %arg1[%c0_153, %c3_154, %c0_155, %c0_156] : memref<2x4x4x64xf32, #tpu.memory_space<vmem>>, vector<2x1x4x64xf32>
    %1076 = vector.shape_cast %1075 : vector<2x1x4x64xf32> to vector<2x4x64xf32>
    %1077 = vector.shape_cast %1076 : vector<2x4x64xf32> to vector<1x2x4x64xf32>
    %cst_157 = arith.constant dense<0.000000e+00> : vector<1xf32>
    %1078 = vector.multi_reduction <add>, %1077, %cst_157 [1, 2, 3] : vector<1x2x4x64xf32> to vector<1xf32>
    %1079 = vector.shape_cast %1078 : vector<1xf32> to vector<1x1x1x1xf32>
    %1080 = vector.extract %1079[0, 0, 0, 0] : f32 from vector<1x1x1x1xf32>
    %cst_158 = arith.constant 5.120000e+02 : f32
    %1081 = arith.divf %1080, %cst_158 : f32
    %1082 = vector.broadcast %1081 : f32 to vector<2x4x64xf32>
    %1083 = arith.subf %1076, %1082 : vector<2x4x64xf32>
    %1084 = arith.mulf %1083, %1083 : vector<2x4x64xf32>
    %1085 = vector.shape_cast %1084 : vector<2x4x64xf32> to vector<1x2x4x64xf32>
    %cst_159 = arith.constant dense<0.000000e+00> : vector<1xf32>
    %1086 = vector.multi_reduction <add>, %1085, %cst_159 [1, 2, 3] : vector<1x2x4x64xf32> to vector<1xf32>
    %1087 = vector.shape_cast %1086 : vector<1xf32> to vector<1x1x1x1xf32>
    %1088 = vector.extract %1087[0, 0, 0, 0] : f32 from vector<1x1x1x1xf32>
    %cst_160 = arith.constant 5.120000e+02 : f32
    %1089 = arith.divf %1088, %cst_160 : f32
    %c3_161 = arith.constant 3 : index
    %1090 = memref.load %arg2[%c3_161] : memref<4xf32, #tpu.memory_space<smem>>
    %cst_162 = arith.constant 9.99999974E-6 : f32
    %1091 = arith.addf %1089, %cst_162 : f32
    %1092 = math.rsqrt %1091 : f32
    %1093 = arith.mulf %1090, %1092 : f32
    %c3_163 = arith.constant 3 : index
    %1094 = memref.load %arg3[%c3_163] : memref<4xf32, #tpu.memory_space<smem>>
    %1095 = arith.mulf %1081, %1093 : f32
    %1096 = arith.subf %1094, %1095 : f32
    %1097 = vector.extract_strided_slice %23 {offsets = [3, 0, 0], sizes = [1, 4, 64], strides = [1, 1, 1]} : vector<4x4x64xf32> to vector<1x4x64xf32>
    %1098 = vector.shape_cast %1097 : vector<1x4x64xf32> to vector<4x64xf32>
    %1099 = vector.broadcast %1093 : f32 to vector<4x64xf32>
    %1100 = arith.mulf %1098, %1099 : vector<4x64xf32>
    %1101 = vector.broadcast %1096 : f32 to vector<4x64xf32>
    %1102 = arith.addf %1100, %1101 : vector<4x64xf32>
    %cst_164 = arith.constant 0.000000e+00 : f32
    %1103 = vector.broadcast %cst_164 : f32 to vector<4x64xf32>
    %1104 = arith.maximumf %1102, %1103 : vector<4x64xf32>
    %c3_165 = arith.constant 3 : index
    %c0_166 = arith.constant 0 : index
    %c9_167 = arith.constant 9 : index
    %1105 = vector.load %arg7[%c3_165, %c0_166, %c9_167] : memref<4x4x73xf32, #tpu.memory_space<vmem>>, vector<1x4x64xf32>
    %1106 = vector.shape_cast %1105 : vector<1x4x64xf32> to vector<4x64xf32>
    %1107 = vector.shape_cast %1104 : vector<4x64xf32> to vector<1x4x64xf32>
    tpu.vector_store %arg7[%c3_165, %c0_166, %c9_167], %1107 {strides = array<i32>} : memref<4x4x73xf32, #tpu.memory_space<vmem>>, vector<1x4x64xf32>,
    %c3_168 = arith.constant 3 : index
    %c3_169 = arith.constant 3 : index
    %c0_170 = arith.constant 0 : index
    %1108 = vector.load %arg7[%c3_168, %c3_169, %c0_170] : memref<4x4x73xf32, #tpu.memory_space<vmem>>, vector<1x1x64xf32>
    %1109 = vector.shape_cast %1108 : vector<1x1x64xf32> to vector<1x64xf32>
    %cst_171 = arith.constant 0.000000e+00 : f32
    %1110 = vector.broadcast %cst_171 : f32 to vector<1x64xf32>
    %1111 = arith.select %18, %1110, %1109 : vector<1x64xi1>, vector<1x64xf32>
    %c27 = arith.constant 27 : index
    %1112 = memref.load %arg4[%c27] : memref<288xf32, #tpu.memory_space<smem>>
    %1113 = vector.broadcast %1112 : f32 to vector<1x64xf32>
    %1114 = arith.mulf %1113, %1111 : vector<1x64xf32>
    %1115 = arith.addf %1046, %1114 : vector<1x64xf32>
    %c63 = arith.constant 63 : index
    %1116 = memref.load %arg4[%c63] : memref<288xf32, #tpu.memory_space<smem>>
    %1117 = vector.broadcast %1116 : f32 to vector<1x64xf32>
    %1118 = arith.mulf %1117, %1111 : vector<1x64xf32>
    %1119 = arith.addf %1050, %1118 : vector<1x64xf32>
    %c99 = arith.constant 99 : index
    %1120 = memref.load %arg4[%c99] : memref<288xf32, #tpu.memory_space<smem>>
    %1121 = vector.broadcast %1120 : f32 to vector<1x64xf32>
    %1122 = arith.mulf %1121, %1111 : vector<1x64xf32>
    %1123 = arith.addf %1054, %1122 : vector<1x64xf32>
    %c135 = arith.constant 135 : index
    %1124 = memref.load %arg4[%c135] : memref<288xf32, #tpu.memory_space<smem>>
    %1125 = vector.broadcast %1124 : f32 to vector<1x64xf32>
    %1126 = arith.mulf %1125, %1111 : vector<1x64xf32>
    %1127 = arith.addf %1058, %1126 : vector<1x64xf32>
    %c171 = arith.constant 171 : index
    %1128 = memref.load %arg4[%c171] : memref<288xf32, #tpu.memory_space<smem>>
    %1129 = vector.broadcast %1128 : f32 to vector<1x64xf32>
    %1130 = arith.mulf %1129, %1111 : vector<1x64xf32>
    %1131 = arith.addf %1062, %1130 : vector<1x64xf32>
    %c207 = arith.constant 207 : index
    %1132 = memref.load %arg4[%c207] : memref<288xf32, #tpu.memory_space<smem>>
    %1133 = vector.broadcast %1132 : f32 to vector<1x64xf32>
    %1134 = arith.mulf %1133, %1111 : vector<1x64xf32>
    %1135 = arith.addf %1066, %1134 : vector<1x64xf32>
    %c243 = arith.constant 243 : index
    %1136 = memref.load %arg4[%c243] : memref<288xf32, #tpu.memory_space<smem>>
    %1137 = vector.broadcast %1136 : f32 to vector<1x64xf32>
    %1138 = arith.mulf %1137, %1111 : vector<1x64xf32>
    %1139 = arith.addf %1070, %1138 : vector<1x64xf32>
    %c279 = arith.constant 279 : index
    %1140 = memref.load %arg4[%c279] : memref<288xf32, #tpu.memory_space<smem>>
    %1141 = vector.broadcast %1140 : f32 to vector<1x64xf32>
    %1142 = arith.mulf %1141, %1111 : vector<1x64xf32>
    %1143 = arith.addf %1074, %1142 : vector<1x64xf32>
    %c3_172 = arith.constant 3 : index
    %c2_173 = arith.constant 2 : index
    %c1_174 = arith.constant 1 : index
    %1144 = vector.load %arg7[%c3_172, %c2_173, %c1_174] : memref<4x4x73xf32, #tpu.memory_space<vmem>>, vector<1x1x64xf32>
    %1145 = vector.shape_cast %1144 : vector<1x1x64xf32> to vector<1x64xf32>
    %c28 = arith.constant 28 : index
    %1146 = memref.load %arg4[%c28] : memref<288xf32, #tpu.memory_space<smem>>
    %1147 = vector.broadcast %1146 : f32 to vector<1x64xf32>
    %1148 = arith.mulf %1147, %1145 : vector<1x64xf32>
    %1149 = arith.addf %1115, %1148 : vector<1x64xf32>
    %c64 = arith.constant 64 : index
    %1150 = memref.load %arg4[%c64] : memref<288xf32, #tpu.memory_space<smem>>
    %1151 = vector.broadcast %1150 : f32 to vector<1x64xf32>
    %1152 = arith.mulf %1151, %1145 : vector<1x64xf32>
    %1153 = arith.addf %1119, %1152 : vector<1x64xf32>
    %c100 = arith.constant 100 : index
    %1154 = memref.load %arg4[%c100] : memref<288xf32, #tpu.memory_space<smem>>
    %1155 = vector.broadcast %1154 : f32 to vector<1x64xf32>
    %1156 = arith.mulf %1155, %1145 : vector<1x64xf32>
    %1157 = arith.addf %1123, %1156 : vector<1x64xf32>
    %c136 = arith.constant 136 : index
    %1158 = memref.load %arg4[%c136] : memref<288xf32, #tpu.memory_space<smem>>
    %1159 = vector.broadcast %1158 : f32 to vector<1x64xf32>
    %1160 = arith.mulf %1159, %1145 : vector<1x64xf32>
    %1161 = arith.addf %1127, %1160 : vector<1x64xf32>
    %c172 = arith.constant 172 : index
    %1162 = memref.load %arg4[%c172] : memref<288xf32, #tpu.memory_space<smem>>
    %1163 = vector.broadcast %1162 : f32 to vector<1x64xf32>
    %1164 = arith.mulf %1163, %1145 : vector<1x64xf32>
    %1165 = arith.addf %1131, %1164 : vector<1x64xf32>
    %c208 = arith.constant 208 : index
    %1166 = memref.load %arg4[%c208] : memref<288xf32, #tpu.memory_space<smem>>
    %1167 = vector.broadcast %1166 : f32 to vector<1x64xf32>
    %1168 = arith.mulf %1167, %1145 : vector<1x64xf32>
    %1169 = arith.addf %1135, %1168 : vector<1x64xf32>
    %c244 = arith.constant 244 : index
    %1170 = memref.load %arg4[%c244] : memref<288xf32, #tpu.memory_space<smem>>
    %1171 = vector.broadcast %1170 : f32 to vector<1x64xf32>
    %1172 = arith.mulf %1171, %1145 : vector<1x64xf32>
    %1173 = arith.addf %1139, %1172 : vector<1x64xf32>
    %c280 = arith.constant 280 : index
    %1174 = memref.load %arg4[%c280] : memref<288xf32, #tpu.memory_space<smem>>
    %1175 = vector.broadcast %1174 : f32 to vector<1x64xf32>
    %1176 = arith.mulf %1175, %1145 : vector<1x64xf32>
    %1177 = arith.addf %1143, %1176 : vector<1x64xf32>
    %c3_175 = arith.constant 3 : index
    %c3_176 = arith.constant 3 : index
    %c1_177 = arith.constant 1 : index
    %1178 = vector.load %arg7[%c3_175, %c3_176, %c1_177] : memref<4x4x73xf32, #tpu.memory_space<vmem>>, vector<1x1x64xf32>
    %1179 = vector.shape_cast %1178 : vector<1x1x64xf32> to vector<1x64xf32>
    %c29 = arith.constant 29 : index
    %1180 = memref.load %arg4[%c29] : memref<288xf32, #tpu.memory_space<smem>>
    %1181 = vector.broadcast %1180 : f32 to vector<1x64xf32>
    %1182 = arith.mulf %1181, %1179 : vector<1x64xf32>
    %1183 = arith.addf %1149, %1182 : vector<1x64xf32>
    %c65 = arith.constant 65 : index
    %1184 = memref.load %arg4[%c65] : memref<288xf32, #tpu.memory_space<smem>>
    %1185 = vector.broadcast %1184 : f32 to vector<1x64xf32>
    %1186 = arith.mulf %1185, %1179 : vector<1x64xf32>
    %1187 = arith.addf %1153, %1186 : vector<1x64xf32>
    %c101 = arith.constant 101 : index
    %1188 = memref.load %arg4[%c101] : memref<288xf32, #tpu.memory_space<smem>>
    %1189 = vector.broadcast %1188 : f32 to vector<1x64xf32>
    %1190 = arith.mulf %1189, %1179 : vector<1x64xf32>
    %1191 = arith.addf %1157, %1190 : vector<1x64xf32>
    %c137 = arith.constant 137 : index
    %1192 = memref.load %arg4[%c137] : memref<288xf32, #tpu.memory_space<smem>>
    %1193 = vector.broadcast %1192 : f32 to vector<1x64xf32>
    %1194 = arith.mulf %1193, %1179 : vector<1x64xf32>
    %1195 = arith.addf %1161, %1194 : vector<1x64xf32>
    %c173 = arith.constant 173 : index
    %1196 = memref.load %arg4[%c173] : memref<288xf32, #tpu.memory_space<smem>>
    %1197 = vector.broadcast %1196 : f32 to vector<1x64xf32>
    %1198 = arith.mulf %1197, %1179 : vector<1x64xf32>
    %1199 = arith.addf %1165, %1198 : vector<1x64xf32>
    %c209 = arith.constant 209 : index
    %1200 = memref.load %arg4[%c209] : memref<288xf32, #tpu.memory_space<smem>>
    %1201 = vector.broadcast %1200 : f32 to vector<1x64xf32>
    %1202 = arith.mulf %1201, %1179 : vector<1x64xf32>
    %1203 = arith.addf %1169, %1202 : vector<1x64xf32>
    %c245 = arith.constant 245 : index
    %1204 = memref.load %arg4[%c245] : memref<288xf32, #tpu.memory_space<smem>>
    %1205 = vector.broadcast %1204 : f32 to vector<1x64xf32>
    %1206 = arith.mulf %1205, %1179 : vector<1x64xf32>
    %1207 = arith.addf %1173, %1206 : vector<1x64xf32>
    %c281 = arith.constant 281 : index
    %1208 = memref.load %arg4[%c281] : memref<288xf32, #tpu.memory_space<smem>>
    %1209 = vector.broadcast %1208 : f32 to vector<1x64xf32>
    %1210 = arith.mulf %1209, %1179 : vector<1x64xf32>
    %1211 = arith.addf %1177, %1210 : vector<1x64xf32>
    %c3_178 = arith.constant 3 : index
    %c1_179 = arith.constant 1 : index
    %c8_180 = arith.constant 8 : index
    %1212 = vector.load %arg7[%c3_178, %c1_179, %c8_180] : memref<4x4x73xf32, #tpu.memory_space<vmem>>, vector<1x1x64xf32>
    %1213 = vector.shape_cast %1212 : vector<1x1x64xf32> to vector<1x64xf32>
    %cst_181 = arith.constant 0.000000e+00 : f32
    %1214 = vector.broadcast %cst_181 : f32 to vector<1x64xf32>
    %1215 = arith.select %18, %1214, %1213 : vector<1x64xi1>, vector<1x64xf32>
    %c30 = arith.constant 30 : index
    %1216 = memref.load %arg4[%c30] : memref<288xf32, #tpu.memory_space<smem>>
    %1217 = vector.broadcast %1216 : f32 to vector<1x64xf32>
    %1218 = arith.mulf %1217, %1215 : vector<1x64xf32>
    %1219 = arith.addf %1183, %1218 : vector<1x64xf32>
    %c66 = arith.constant 66 : index
    %1220 = memref.load %arg4[%c66] : memref<288xf32, #tpu.memory_space<smem>>
    %1221 = vector.broadcast %1220 : f32 to vector<1x64xf32>
    %1222 = arith.mulf %1221, %1215 : vector<1x64xf32>
    %1223 = arith.addf %1187, %1222 : vector<1x64xf32>
    %c102 = arith.constant 102 : index
    %1224 = memref.load %arg4[%c102] : memref<288xf32, #tpu.memory_space<smem>>
    %1225 = vector.broadcast %1224 : f32 to vector<1x64xf32>
    %1226 = arith.mulf %1225, %1215 : vector<1x64xf32>
    %1227 = arith.addf %1191, %1226 : vector<1x64xf32>
    %c138 = arith.constant 138 : index
    %1228 = memref.load %arg4[%c138] : memref<288xf32, #tpu.memory_space<smem>>
    %1229 = vector.broadcast %1228 : f32 to vector<1x64xf32>
    %1230 = arith.mulf %1229, %1215 : vector<1x64xf32>
    %1231 = arith.addf %1195, %1230 : vector<1x64xf32>
    %c174 = arith.constant 174 : index
    %1232 = memref.load %arg4[%c174] : memref<288xf32, #tpu.memory_space<smem>>
    %1233 = vector.broadcast %1232 : f32 to vector<1x64xf32>
    %1234 = arith.mulf %1233, %1215 : vector<1x64xf32>
    %1235 = arith.addf %1199, %1234 : vector<1x64xf32>
    %c210 = arith.constant 210 : index
    %1236 = memref.load %arg4[%c210] : memref<288xf32, #tpu.memory_space<smem>>
    %1237 = vector.broadcast %1236 : f32 to vector<1x64xf32>
    %1238 = arith.mulf %1237, %1215 : vector<1x64xf32>
    %1239 = arith.addf %1203, %1238 : vector<1x64xf32>
    %c246 = arith.constant 246 : index
    %1240 = memref.load %arg4[%c246] : memref<288xf32, #tpu.memory_space<smem>>
    %1241 = vector.broadcast %1240 : f32 to vector<1x64xf32>
    %1242 = arith.mulf %1241, %1215 : vector<1x64xf32>
    %1243 = arith.addf %1207, %1242 : vector<1x64xf32>
    %c282 = arith.constant 282 : index
    %1244 = memref.load %arg4[%c282] : memref<288xf32, #tpu.memory_space<smem>>
    %1245 = vector.broadcast %1244 : f32 to vector<1x64xf32>
    %1246 = arith.mulf %1245, %1215 : vector<1x64xf32>
    %1247 = arith.addf %1211, %1246 : vector<1x64xf32>
    %c3_182 = arith.constant 3 : index
    %c0_183 = arith.constant 0 : index
    %c9_184 = arith.constant 9 : index
    %1248 = vector.load %arg7[%c3_182, %c0_183, %c9_184] : memref<4x4x73xf32, #tpu.memory_space<vmem>>, vector<1x1x64xf32>
    %1249 = vector.shape_cast %1248 : vector<1x1x64xf32> to vector<1x64xf32>
    %c31 = arith.constant 31 : index
    %1250 = memref.load %arg4[%c31] : memref<288xf32, #tpu.memory_space<smem>>
    %1251 = vector.broadcast %1250 : f32 to vector<1x64xf32>
    %1252 = arith.mulf %1251, %1249 : vector<1x64xf32>
    %1253 = arith.addf %1219, %1252 : vector<1x64xf32>
    %c67 = arith.constant 67 : index
    %1254 = memref.load %arg4[%c67] : memref<288xf32, #tpu.memory_space<smem>>
    %1255 = vector.broadcast %1254 : f32 to vector<1x64xf32>
    %1256 = arith.mulf %1255, %1249 : vector<1x64xf32>
    %1257 = arith.addf %1223, %1256 : vector<1x64xf32>
    %c103 = arith.constant 103 : index
    %1258 = memref.load %arg4[%c103] : memref<288xf32, #tpu.memory_space<smem>>
    %1259 = vector.broadcast %1258 : f32 to vector<1x64xf32>
    %1260 = arith.mulf %1259, %1249 : vector<1x64xf32>
    %1261 = arith.addf %1227, %1260 : vector<1x64xf32>
    %c139 = arith.constant 139 : index
    %1262 = memref.load %arg4[%c139] : memref<288xf32, #tpu.memory_space<smem>>
    %1263 = vector.broadcast %1262 : f32 to vector<1x64xf32>
    %1264 = arith.mulf %1263, %1249 : vector<1x64xf32>
    %1265 = arith.addf %1231, %1264 : vector<1x64xf32>
    %c175 = arith.constant 175 : index
    %1266 = memref.load %arg4[%c175] : memref<288xf32, #tpu.memory_space<smem>>
    %1267 = vector.broadcast %1266 : f32 to vector<1x64xf32>
    %1268 = arith.mulf %1267, %1249 : vector<1x64xf32>
    %1269 = arith.addf %1235, %1268 : vector<1x64xf32>
    %c211 = arith.constant 211 : index
    %1270 = memref.load %arg4[%c211] : memref<288xf32, #tpu.memory_space<smem>>
    %1271 = vector.broadcast %1270 : f32 to vector<1x64xf32>
    %1272 = arith.mulf %1271, %1249 : vector<1x64xf32>
    %1273 = arith.addf %1239, %1272 : vector<1x64xf32>
    %c247 = arith.constant 247 : index
    %1274 = memref.load %arg4[%c247] : memref<288xf32, #tpu.memory_space<smem>>
    %1275 = vector.broadcast %1274 : f32 to vector<1x64xf32>
    %1276 = arith.mulf %1275, %1249 : vector<1x64xf32>
    %1277 = arith.addf %1243, %1276 : vector<1x64xf32>
    %c283 = arith.constant 283 : index
    %1278 = memref.load %arg4[%c283] : memref<288xf32, #tpu.memory_space<smem>>
    %1279 = vector.broadcast %1278 : f32 to vector<1x64xf32>
    %1280 = arith.mulf %1279, %1249 : vector<1x64xf32>
    %1281 = arith.addf %1247, %1280 : vector<1x64xf32>
    %c3_185 = arith.constant 3 : index
    %c1_186 = arith.constant 1 : index
    %c9_187 = arith.constant 9 : index
    %1282 = vector.load %arg7[%c3_185, %c1_186, %c9_187] : memref<4x4x73xf32, #tpu.memory_space<vmem>>, vector<1x1x64xf32>
    %1283 = vector.shape_cast %1282 : vector<1x1x64xf32> to vector<1x64xf32>
    %c32 = arith.constant 32 : index
    %1284 = memref.load %arg4[%c32] : memref<288xf32, #tpu.memory_space<smem>>
    %1285 = vector.broadcast %1284 : f32 to vector<1x64xf32>
    %1286 = arith.mulf %1285, %1283 : vector<1x64xf32>
    %1287 = arith.addf %1253, %1286 : vector<1x64xf32>
    %c68 = arith.constant 68 : index
    %1288 = memref.load %arg4[%c68] : memref<288xf32, #tpu.memory_space<smem>>
    %1289 = vector.broadcast %1288 : f32 to vector<1x64xf32>
    %1290 = arith.mulf %1289, %1283 : vector<1x64xf32>
    %1291 = arith.addf %1257, %1290 : vector<1x64xf32>
    %c104 = arith.constant 104 : index
    %1292 = memref.load %arg4[%c104] : memref<288xf32, #tpu.memory_space<smem>>
    %1293 = vector.broadcast %1292 : f32 to vector<1x64xf32>
    %1294 = arith.mulf %1293, %1283 : vector<1x64xf32>
    %1295 = arith.addf %1261, %1294 : vector<1x64xf32>
    %c140 = arith.constant 140 : index
    %1296 = memref.load %arg4[%c140] : memref<288xf32, #tpu.memory_space<smem>>
    %1297 = vector.broadcast %1296 : f32 to vector<1x64xf32>
    %1298 = arith.mulf %1297, %1283 : vector<1x64xf32>
    %1299 = arith.addf %1265, %1298 : vector<1x64xf32>
    %c176 = arith.constant 176 : index
    %1300 = memref.load %arg4[%c176] : memref<288xf32, #tpu.memory_space<smem>>
    %1301 = vector.broadcast %1300 : f32 to vector<1x64xf32>
    %1302 = arith.mulf %1301, %1283 : vector<1x64xf32>
    %1303 = arith.addf %1269, %1302 : vector<1x64xf32>
    %c212 = arith.constant 212 : index
    %1304 = memref.load %arg4[%c212] : memref<288xf32, #tpu.memory_space<smem>>
    %1305 = vector.broadcast %1304 : f32 to vector<1x64xf32>
    %1306 = arith.mulf %1305, %1283 : vector<1x64xf32>
    %1307 = arith.addf %1273, %1306 : vector<1x64xf32>
    %c248 = arith.constant 248 : index
    %1308 = memref.load %arg4[%c248] : memref<288xf32, #tpu.memory_space<smem>>
    %1309 = vector.broadcast %1308 : f32 to vector<1x64xf32>
    %1310 = arith.mulf %1309, %1283 : vector<1x64xf32>
    %1311 = arith.addf %1277, %1310 : vector<1x64xf32>
    %c284 = arith.constant 284 : index
    %1312 = memref.load %arg4[%c284] : memref<288xf32, #tpu.memory_space<smem>>
    %1313 = vector.broadcast %1312 : f32 to vector<1x64xf32>
    %1314 = arith.mulf %1313, %1283 : vector<1x64xf32>
    %1315 = arith.addf %1281, %1314 : vector<1x64xf32>
    %c3_188 = arith.constant 3 : index
    %c3_189 = arith.constant 3 : index
    %c8_190 = arith.constant 8 : index
    %1316 = vector.load %arg7[%c3_188, %c3_189, %c8_190] : memref<4x4x73xf32, #tpu.memory_space<vmem>>, vector<1x1x64xf32>
    %1317 = vector.shape_cast %1316 : vector<1x1x64xf32> to vector<1x64xf32>
    %cst_191 = arith.constant 0.000000e+00 : f32
    %1318 = vector.broadcast %cst_191 : f32 to vector<1x64xf32>
    %1319 = arith.select %18, %1318, %1317 : vector<1x64xi1>, vector<1x64xf32>
    %c33 = arith.constant 33 : index
    %1320 = memref.load %arg4[%c33] : memref<288xf32, #tpu.memory_space<smem>>
    %1321 = vector.broadcast %1320 : f32 to vector<1x64xf32>
    %1322 = arith.mulf %1321, %1319 : vector<1x64xf32>
    %1323 = arith.addf %1287, %1322 : vector<1x64xf32>
    %c69 = arith.constant 69 : index
    %1324 = memref.load %arg4[%c69] : memref<288xf32, #tpu.memory_space<smem>>
    %1325 = vector.broadcast %1324 : f32 to vector<1x64xf32>
    %1326 = arith.mulf %1325, %1319 : vector<1x64xf32>
    %1327 = arith.addf %1291, %1326 : vector<1x64xf32>
    %c105 = arith.constant 105 : index
    %1328 = memref.load %arg4[%c105] : memref<288xf32, #tpu.memory_space<smem>>
    %1329 = vector.broadcast %1328 : f32 to vector<1x64xf32>
    %1330 = arith.mulf %1329, %1319 : vector<1x64xf32>
    %1331 = arith.addf %1295, %1330 : vector<1x64xf32>
    %c141 = arith.constant 141 : index
    %1332 = memref.load %arg4[%c141] : memref<288xf32, #tpu.memory_space<smem>>
    %1333 = vector.broadcast %1332 : f32 to vector<1x64xf32>
    %1334 = arith.mulf %1333, %1319 : vector<1x64xf32>
    %1335 = arith.addf %1299, %1334 : vector<1x64xf32>
    %c177 = arith.constant 177 : index
    %1336 = memref.load %arg4[%c177] : memref<288xf32, #tpu.memory_space<smem>>
    %1337 = vector.broadcast %1336 : f32 to vector<1x64xf32>
    %1338 = arith.mulf %1337, %1319 : vector<1x64xf32>
    %1339 = arith.addf %1303, %1338 : vector<1x64xf32>
    %c213 = arith.constant 213 : index
    %1340 = memref.load %arg4[%c213] : memref<288xf32, #tpu.memory_space<smem>>
    %1341 = vector.broadcast %1340 : f32 to vector<1x64xf32>
    %1342 = arith.mulf %1341, %1319 : vector<1x64xf32>
    %1343 = arith.addf %1307, %1342 : vector<1x64xf32>
    %c249 = arith.constant 249 : index
    %1344 = memref.load %arg4[%c249] : memref<288xf32, #tpu.memory_space<smem>>
    %1345 = vector.broadcast %1344 : f32 to vector<1x64xf32>
    %1346 = arith.mulf %1345, %1319 : vector<1x64xf32>
    %1347 = arith.addf %1311, %1346 : vector<1x64xf32>
    %c285 = arith.constant 285 : index
    %1348 = memref.load %arg4[%c285] : memref<288xf32, #tpu.memory_space<smem>>
    %1349 = vector.broadcast %1348 : f32 to vector<1x64xf32>
    %1350 = arith.mulf %1349, %1319 : vector<1x64xf32>
    %1351 = arith.addf %1315, %1350 : vector<1x64xf32>
    %c3_192 = arith.constant 3 : index
    %c2_193 = arith.constant 2 : index
    %c9_194 = arith.constant 9 : index
    %1352 = vector.load %arg7[%c3_192, %c2_193, %c9_194] : memref<4x4x73xf32, #tpu.memory_space<vmem>>, vector<1x1x64xf32>
    %1353 = vector.shape_cast %1352 : vector<1x1x64xf32> to vector<1x64xf32>
    %c34 = arith.constant 34 : index
    %1354 = memref.load %arg4[%c34] : memref<288xf32, #tpu.memory_space<smem>>
    %1355 = vector.broadcast %1354 : f32 to vector<1x64xf32>
    %1356 = arith.mulf %1355, %1353 : vector<1x64xf32>
    %1357 = arith.addf %1323, %1356 : vector<1x64xf32>
    %c70 = arith.constant 70 : index
    %1358 = memref.load %arg4[%c70] : memref<288xf32, #tpu.memory_space<smem>>
    %1359 = vector.broadcast %1358 : f32 to vector<1x64xf32>
    %1360 = arith.mulf %1359, %1353 : vector<1x64xf32>
    %1361 = arith.addf %1327, %1360 : vector<1x64xf32>
    %c106 = arith.constant 106 : index
    %1362 = memref.load %arg4[%c106] : memref<288xf32, #tpu.memory_space<smem>>
    %1363 = vector.broadcast %1362 : f32 to vector<1x64xf32>
    %1364 = arith.mulf %1363, %1353 : vector<1x64xf32>
    %1365 = arith.addf %1331, %1364 : vector<1x64xf32>
    %c142 = arith.constant 142 : index
    %1366 = memref.load %arg4[%c142] : memref<288xf32, #tpu.memory_space<smem>>
    %1367 = vector.broadcast %1366 : f32 to vector<1x64xf32>
    %1368 = arith.mulf %1367, %1353 : vector<1x64xf32>
    %1369 = arith.addf %1335, %1368 : vector<1x64xf32>
    %c178 = arith.constant 178 : index
    %1370 = memref.load %arg4[%c178] : memref<288xf32, #tpu.memory_space<smem>>
    %1371 = vector.broadcast %1370 : f32 to vector<1x64xf32>
    %1372 = arith.mulf %1371, %1353 : vector<1x64xf32>
    %1373 = arith.addf %1339, %1372 : vector<1x64xf32>
    %c214 = arith.constant 214 : index
    %1374 = memref.load %arg4[%c214] : memref<288xf32, #tpu.memory_space<smem>>
    %1375 = vector.broadcast %1374 : f32 to vector<1x64xf32>
    %1376 = arith.mulf %1375, %1353 : vector<1x64xf32>
    %1377 = arith.addf %1343, %1376 : vector<1x64xf32>
    %c250 = arith.constant 250 : index
    %1378 = memref.load %arg4[%c250] : memref<288xf32, #tpu.memory_space<smem>>
    %1379 = vector.broadcast %1378 : f32 to vector<1x64xf32>
    %1380 = arith.mulf %1379, %1353 : vector<1x64xf32>
    %1381 = arith.addf %1347, %1380 : vector<1x64xf32>
    %c286 = arith.constant 286 : index
    %1382 = memref.load %arg4[%c286] : memref<288xf32, #tpu.memory_space<smem>>
    %1383 = vector.broadcast %1382 : f32 to vector<1x64xf32>
    %1384 = arith.mulf %1383, %1353 : vector<1x64xf32>
    %1385 = arith.addf %1351, %1384 : vector<1x64xf32>
    %c3_195 = arith.constant 3 : index
    %c3_196 = arith.constant 3 : index
    %c9_197 = arith.constant 9 : index
    %1386 = vector.load %arg7[%c3_195, %c3_196, %c9_197] : memref<4x4x73xf32, #tpu.memory_space<vmem>>, vector<1x1x64xf32>
    %1387 = vector.shape_cast %1386 : vector<1x1x64xf32> to vector<1x64xf32>
    %c35 = arith.constant 35 : index
    %1388 = memref.load %arg4[%c35] : memref<288xf32, #tpu.memory_space<smem>>
    %1389 = vector.broadcast %1388 : f32 to vector<1x64xf32>
    %1390 = arith.mulf %1389, %1387 : vector<1x64xf32>
    %1391 = arith.addf %1357, %1390 : vector<1x64xf32>
    %c71 = arith.constant 71 : index
    %1392 = memref.load %arg4[%c71] : memref<288xf32, #tpu.memory_space<smem>>
    %1393 = vector.broadcast %1392 : f32 to vector<1x64xf32>
    %1394 = arith.mulf %1393, %1387 : vector<1x64xf32>
    %1395 = arith.addf %1361, %1394 : vector<1x64xf32>
    %c107 = arith.constant 107 : index
    %1396 = memref.load %arg4[%c107] : memref<288xf32, #tpu.memory_space<smem>>
    %1397 = vector.broadcast %1396 : f32 to vector<1x64xf32>
    %1398 = arith.mulf %1397, %1387 : vector<1x64xf32>
    %1399 = arith.addf %1365, %1398 : vector<1x64xf32>
    %c143 = arith.constant 143 : index
    %1400 = memref.load %arg4[%c143] : memref<288xf32, #tpu.memory_space<smem>>
    %1401 = vector.broadcast %1400 : f32 to vector<1x64xf32>
    %1402 = arith.mulf %1401, %1387 : vector<1x64xf32>
    %1403 = arith.addf %1369, %1402 : vector<1x64xf32>
    %c179 = arith.constant 179 : index
    %1404 = memref.load %arg4[%c179] : memref<288xf32, #tpu.memory_space<smem>>
    %1405 = vector.broadcast %1404 : f32 to vector<1x64xf32>
    %1406 = arith.mulf %1405, %1387 : vector<1x64xf32>
    %1407 = arith.addf %1373, %1406 : vector<1x64xf32>
    %c215 = arith.constant 215 : index
    %1408 = memref.load %arg4[%c215] : memref<288xf32, #tpu.memory_space<smem>>
    %1409 = vector.broadcast %1408 : f32 to vector<1x64xf32>
    %1410 = arith.mulf %1409, %1387 : vector<1x64xf32>
    %1411 = arith.addf %1377, %1410 : vector<1x64xf32>
    %c251 = arith.constant 251 : index
    %1412 = memref.load %arg4[%c251] : memref<288xf32, #tpu.memory_space<smem>>
    %1413 = vector.broadcast %1412 : f32 to vector<1x64xf32>
    %1414 = arith.mulf %1413, %1387 : vector<1x64xf32>
    %1415 = arith.addf %1381, %1414 : vector<1x64xf32>
    %c287 = arith.constant 287 : index
    %1416 = memref.load %arg4[%c287] : memref<288xf32, #tpu.memory_space<smem>>
    %1417 = vector.broadcast %1416 : f32 to vector<1x64xf32>
    %1418 = arith.mulf %1417, %1387 : vector<1x64xf32>
    %1419 = arith.addf %1385, %1418 : vector<1x64xf32>
    %c0_198 = arith.constant 0 : index
    %c0_199 = arith.constant 0 : index
    %c0_200 = arith.constant 0 : index
    %1420 = vector.load %arg6[%c0_198, %c0_199, %c0_200] : memref<1x8x64xf32, #tpu.memory_space<vmem>>, vector<1x1x64xf32>
    %1421 = vector.shape_cast %1420 : vector<1x1x64xf32> to vector<1x64xf32>
    %1422 = vector.shape_cast %1391 : vector<1x64xf32> to vector<1x1x64xf32>
    tpu.vector_store %arg6[%c0_198, %c0_199, %c0_200], %1422 {strides = array<i32>} : memref<1x8x64xf32, #tpu.memory_space<vmem>>, vector<1x1x64xf32>,
    %c0_201 = arith.constant 0 : index
    %c1_202 = arith.constant 1 : index
    %c0_203 = arith.constant 0 : index
    %1423 = vector.load %arg6[%c0_201, %c1_202, %c0_203] : memref<1x8x64xf32, #tpu.memory_space<vmem>>, vector<1x1x64xf32>
    %1424 = vector.shape_cast %1423 : vector<1x1x64xf32> to vector<1x64xf32>
    %1425 = vector.shape_cast %1395 : vector<1x64xf32> to vector<1x1x64xf32>
    tpu.vector_store %arg6[%c0_201, %c1_202, %c0_203], %1425 {strides = array<i32>} : memref<1x8x64xf32, #tpu.memory_space<vmem>>, vector<1x1x64xf32>,
    %c0_204 = arith.constant 0 : index
    %c2_205 = arith.constant 2 : index
    %c0_206 = arith.constant 0 : index
    %1426 = vector.load %arg6[%c0_204, %c2_205, %c0_206] : memref<1x8x64xf32, #tpu.memory_space<vmem>>, vector<1x1x64xf32>
    %1427 = vector.shape_cast %1426 : vector<1x1x64xf32> to vector<1x64xf32>
    %1428 = vector.shape_cast %1399 : vector<1x64xf32> to vector<1x1x64xf32>
    tpu.vector_store %arg6[%c0_204, %c2_205, %c0_206], %1428 {strides = array<i32>} : memref<1x8x64xf32, #tpu.memory_space<vmem>>, vector<1x1x64xf32>,
    %c0_207 = arith.constant 0 : index
    %c3_208 = arith.constant 3 : index
    %c0_209 = arith.constant 0 : index
    %1429 = vector.load %arg6[%c0_207, %c3_208, %c0_209] : memref<1x8x64xf32, #tpu.memory_space<vmem>>, vector<1x1x64xf32>
    %1430 = vector.shape_cast %1429 : vector<1x1x64xf32> to vector<1x64xf32>
    %1431 = vector.shape_cast %1403 : vector<1x64xf32> to vector<1x1x64xf32>
    tpu.vector_store %arg6[%c0_207, %c3_208, %c0_209], %1431 {strides = array<i32>} : memref<1x8x64xf32, #tpu.memory_space<vmem>>, vector<1x1x64xf32>,
    %c0_210 = arith.constant 0 : index
    %c4_211 = arith.constant 4 : index
    %c0_212 = arith.constant 0 : index
    %1432 = vector.load %arg6[%c0_210, %c4_211, %c0_212] : memref<1x8x64xf32, #tpu.memory_space<vmem>>, vector<1x1x64xf32>
    %1433 = vector.shape_cast %1432 : vector<1x1x64xf32> to vector<1x64xf32>
    %1434 = vector.shape_cast %1407 : vector<1x64xf32> to vector<1x1x64xf32>
    tpu.vector_store %arg6[%c0_210, %c4_211, %c0_212], %1434 {strides = array<i32>} : memref<1x8x64xf32, #tpu.memory_space<vmem>>, vector<1x1x64xf32>,
    %c0_213 = arith.constant 0 : index
    %c5_214 = arith.constant 5 : index
    %c0_215 = arith.constant 0 : index
    %1435 = vector.load %arg6[%c0_213, %c5_214, %c0_215] : memref<1x8x64xf32, #tpu.memory_space<vmem>>, vector<1x1x64xf32>
    %1436 = vector.shape_cast %1435 : vector<1x1x64xf32> to vector<1x64xf32>
    %1437 = vector.shape_cast %1411 : vector<1x64xf32> to vector<1x1x64xf32>
    tpu.vector_store %arg6[%c0_213, %c5_214, %c0_215], %1437 {strides = array<i32>} : memref<1x8x64xf32, #tpu.memory_space<vmem>>, vector<1x1x64xf32>,
    %c0_216 = arith.constant 0 : index
    %c6_217 = arith.constant 6 : index
    %c0_218 = arith.constant 0 : index
    %1438 = vector.load %arg6[%c0_216, %c6_217, %c0_218] : memref<1x8x64xf32, #tpu.memory_space<vmem>>, vector<1x1x64xf32>
    %1439 = vector.shape_cast %1438 : vector<1x1x64xf32> to vector<1x64xf32>
    %1440 = vector.shape_cast %1415 : vector<1x64xf32> to vector<1x1x64xf32>
    tpu.vector_store %arg6[%c0_216, %c6_217, %c0_218], %1440 {strides = array<i32>} : memref<1x8x64xf32, #tpu.memory_space<vmem>>, vector<1x1x64xf32>,
    %c0_219 = arith.constant 0 : index
    %c7_220 = arith.constant 7 : index
    %c0_221 = arith.constant 0 : index
    %1441 = vector.load %arg6[%c0_219, %c7_220, %c0_221] : memref<1x8x64xf32, #tpu.memory_space<vmem>>, vector<1x1x64xf32>
    %1442 = vector.shape_cast %1441 : vector<1x1x64xf32> to vector<1x64xf32>
    %1443 = vector.shape_cast %1419 : vector<1x64xf32> to vector<1x1x64xf32>
    tpu.vector_store %arg6[%c0_219, %c7_220, %c0_221], %1443 {strides = array<i32>} : memref<1x8x64xf32, #tpu.memory_space<vmem>>, vector<1x1x64xf32>,
    return
  }
  func.func @transform_0(%arg0: i32) -> (i32, i32, i32, i32) {
    %c0_i32 = arith.constant 0 : i32
    %c0_i32_0 = arith.constant 0 : i32
    %c0_i32_1 = arith.constant 0 : i32
    %c0_i32_2 = arith.constant 0 : i32
    %c0_i32_3 = arith.constant 0 : i32
    return %c0_i32, %c0_i32_0, %c0_i32_1, %c0_i32_2 : i32, i32, i32, i32
  }
  func.func @transform_1(%arg0: i32) -> i32 {
    %c0_i32 = arith.constant 0 : i32
    %c0_i32_0 = arith.constant 0 : i32
    return %c0_i32 : i32
  }
  func.func @transform_2(%arg0: i32) -> i32 {
    %c0_i32 = arith.constant 0 : i32
    %c0_i32_0 = arith.constant 0 : i32
    return %c0_i32 : i32
  }
  func.func @transform_3(%arg0: i32) -> i32 {
    %c0_i32 = arith.constant 0 : i32
    %c0_i32_0 = arith.constant 0 : i32
    return %c0_i32 : i32
  }
  func.func @transform_4(%arg0: i32) -> i32 {
    %c0_i32 = arith.constant 0 : i32
    %c0_i32_0 = arith.constant 0 : i32
    return %c0_i32 : i32
  }
  func.func @transform_5(%arg0: i32) -> (i32, i32, i32) {
    %c0_i32 = arith.constant 0 : i32
    %c0_i32_0 = arith.constant 0 : i32
    %c0_i32_1 = arith.constant 0 : i32
    return %arg0, %c0_i32, %c0_i32_0 : i32, i32, i32
  }
}

</mosaic_0001>

<llo_original>
// kernel: tpu_custom_call.1
$region0: #{tpu_custom_call.1}
  #allocation0 [shape = 'u32[]', space=smem, size = 0x4, offset = 0x4, fixed_abs, tag = 'smem constant byte address 0x4 - core index']
  #allocation1 [shape = 'u32[72,128]{1,0:T(1,128)}', space=vmem, size = 0x9000, scoped, tag = 'internal scratch']
  #allocation2 [shape = 'f32[4,4,73]{2,1,0:T(4,128)}', space=vmem, size = 0x2000, scoped, tag = 'scratch operand']
  %s0 = inlined_call_operand.hbm [shape: f32[2,4,4,64], index: 0, kind: input, shape index: {}]
  %s1 = inlined_call_operand.hbm [shape: f32[4], index: 1, kind: input, shape index: {}]
  %s2 = inlined_call_operand.vmem [shape: f32[4], index: 2, kind: input, shape index: {}]
  %s3 = inlined_call_operand.hbm [shape: f32[288], index: 3, kind: input, shape index: {}]
  %s4 = inlined_call_operand.vmem [shape: f32[8], index: 4, kind: input, shape index: {}]
  %s5 = inlined_call_operand.hbm [shape: f32[2,8,64], index: 5, kind: output, shape index: {}]
  %s6 = sld [smem:[#allocation0]]
  $region73: #{tpu_custom_call.1} parent=0
    _
  %s8 = ssub.s32 1, %s6
  %s9 = scalar_select 0, %s8, %s6
  $region1: #{tpu_custom_call.1} parent=0
    #allocation3 [shape = 'u8[16384]{0}', space=vmem, size = 0x4000, scoped, tag = 'input window, operand 0, single buffered']
    #allocation4 [shape = 's32[2]{0}', space=sflag, size = 0x8, scoped, tag = 'scoped memory for tpu_custom_call.1']
    #allocation5 [shape = 's32[2]{0}', space=sflag, size = 0x8, scoped, tag = 'scoped memory for tpu_custom_call.1']
    #allocation6 [shape = 's32[2]{0}', space=sflag, size = 0x8, scoped, tag = 'scoped memory for tpu_custom_call.1']
    #allocation7 [shape = 's32[2]{0}', space=sflag, size = 0x8, scoped, tag = 'scoped memory for tpu_custom_call.1']
    #allocation8 [shape = 'u8[512]{0}', space=smem, size = 0x200, scoped, tag = 'input window, operand 1, single buffered']
    #allocation9 [shape = 'u8[512]{0}', space=smem, size = 0x200, scoped, tag = 'input window, operand 2, single buffered']
    #allocation10 [shape = 'u8[1536]{0}', space=smem, size = 0x600, scoped, tag = 'input window, operand 3, single buffered']
    #allocation11 [shape = 's32[1]{0}', space=sflag, size = 0x4, scoped, tag = 'scoped memory for tpu_custom_call.1']
    #allocation12 [shape = 'u8[512]{0}', space=smem, size = 0x200, scoped, tag = 'input window, operand 4, single buffered']
    #allocation13 [shape = 's32[1]{0}', space=sflag, size = 0x4, scoped, tag = 'scoped memory for tpu_custom_call.1']
    #allocation14 [shape = 'u8[8192]{0}', space=vmem, size = 0x2000, scoped, tag = 'output window, operand 0']
    %10 = vsyncpa [#allocation4], 0
    %11 = vsyncpa [#allocation6], 0
    %12 = vsyncpa [#allocation7], 0
    %13 = vsyncpa [#allocation11], 0
    %14 = vsyncpa [#allocation13], 0
    %15 = vsyncpa [#allocation5], 0
    %s16 = scalar_lea.sflag [#allocation5], 1
    %17 = vsyncpa %s16, 0
    loop: start=0, step=1, limit=4
    $region2: #{tpu_custom_call.1} parent=1 // loop_pre_header
      _
    $region3: #{tpu_custom_call.1} parent=1 // loop_header
      %s19 = sphi 0, %s23
      %p20 = scmp.ge.s32.totalorder %s19, 4
      %s27 = sphi 0, %s27
      %s29 = sphi 0, %s27
      %s30 = sphi 0, %s29
      %s44 = sphi 0, %s30
      %s48 = sphi 0, %s48
      %s50 = sphi 0, %s48
      %s51 = sphi 0, %s50
      %s65 = sphi 0, %s51
      %s69 = sphi 0, %s69
      %s71 = sphi 0, %s69
      %s72 = sphi 0, %s71
      %s86 = sphi 0, %s72
      %s90 = sphi 0, %s90
      %s92 = sphi 0, %s90
      %s93 = sphi 0, %s92
      %s107 = sphi 0, %s93
      %s111 = sphi 0, %s111
      %s113 = sphi 0, %s111
      %s114 = sphi 0, %s113
      %s128 = sphi 0, %s114
      %s134 = sphi 0, %s136
      %s137 = sphi 0, %s134
      %s138 = sphi 0, %s137
      %s154 = sphi 0, %s138
    $region4: #{tpu_custom_call.1} parent=1 // loop_header_branch
      %22 = sbr.rel (%p20) target = $region8
    $region5: #{tpu_custom_call.1} parent=1 // loop_body
      %s24 = ssub.s32 %s19, 1
      %s25 = ssub.s32 %s19, 2
      %s26 = sadd.s32 %s19, 1
      %s28 = sadd.s32 %s27, 1
      %p31 = scmp.eq.s32.totalorder %s19, 1
      %p32 = scmp.ne.s32.totalorder %s27, %s29
      %p33 = scmp.eq.s32.totalorder %s19, 0
      %p34 = por %p32, %p33
      %p35 = scmp.ne.s32.totalorder %s27, %s29
      %p36 = scmp.eq.s32.totalorder %s24, 1
      %p37 = por %p35, %p36
      %p38 = scmp.ne.s32.totalorder %s29, %s30
      %p39 = scmp.eq.s32.totalorder %s24, 0
      %p40 = por %p38, %p39
      %p41 = scmp.ne.s32.totalorder %s29, %s30
      %p42 = scmp.eq.s32.totalorder %s25, 1
      %p43 = por %p41, %p42
      %p45 = scmp.ne.s32.totalorder %s30, %s44
      %p46 = scmp.eq.s32.totalorder %s25, 0
      %p47 = por %p45, %p46
      %s49 = sadd.s32 %s48, 1
      %p52 = scmp.eq.s32.totalorder %s19, 1
      %p53 = scmp.ne.s32.totalorder %s48, %s50
      %p54 = scmp.eq.s32.totalorder %s19, 0
      %p55 = por %p53, %p54
      %p56 = scmp.ne.s32.totalorder %s48, %s50
      %p57 = scmp.eq.s32.totalorder %s24, 1
      %p58 = por %p56, %p57
      %p59 = scmp.ne.s32.totalorder %s50, %s51
      %p60 = scmp.eq.s32.totalorder %s24, 0
      %p61 = por %p59, %p60
      %p62 = scmp.ne.s32.totalorder %s50, %s51
      %p63 = scmp.eq.s32.totalorder %s25, 1
      %p64 = por %p62, %p63
      %p66 = scmp.ne.s32.totalorder %s51, %s65
      %p67 = scmp.eq.s32.totalorder %s25, 0
      %p68 = por %p66, %p67
      %s70 = sadd.s32 %s69, 1
      %p73 = scmp.eq.s32.totalorder %s19, 1
      %p74 = scmp.ne.s32.totalorder %s69, %s71
      %p75 = scmp.eq.s32.totalorder %s19, 0
      %p76 = por %p74, %p75
      %p77 = scmp.ne.s32.totalorder %s69, %s71
      %p78 = scmp.eq.s32.totalorder %s24, 1
      %p79 = por %p77, %p78
      %p80 = scmp.ne.s32.totalorder %s71, %s72
      %p81 = scmp.eq.s32.totalorder %s24, 0
      %p82 = por %p80, %p81
      %p83 = scmp.ne.s32.totalorder %s71, %s72
      %p84 = scmp.eq.s32.totalorder %s25, 1
      %p85 = por %p83, %p84
      %p87 = scmp.ne.s32.totalorder %s72, %s86
      %p88 = scmp.eq.s32.totalorder %s25, 0
      %p89 = por %p87, %p88
      %s91 = sadd.s32 %s90, 1
      %p94 = scmp.eq.s32.totalorder %s19, 1
      %p95 = scmp.ne.s32.totalorder %s90, %s92
      %p96 = scmp.eq.s32.totalorder %s19, 0
      %p97 = por %p95, %p96
      %p98 = scmp.ne.s32.totalorder %s90, %s92
      %p99 = scmp.eq.s32.totalorder %s24, 1
      %p100 = por %p98, %p99
      %p101 = scmp.ne.s32.totalorder %s92, %s93
      %p102 = scmp.eq.s32.totalorder %s24, 0
      %p103 = por %p101, %p102
      %p104 = scmp.ne.s32.totalorder %s92, %s93
      %p105 = scmp.eq.s32.totalorder %s25, 1
      %p106 = por %p104, %p105
      %p108 = scmp.ne.s32.totalorder %s93, %s107
      %p109 = scmp.eq.s32.totalorder %s25, 0
      %p110 = por %p108, %p109
      %s112 = sadd.s32 %s111, 1
      %p115 = scmp.eq.s32.totalorder %s19, 1
      %p116 = scmp.ne.s32.totalorder %s111, %s113
      %p117 = scmp.eq.s32.totalorder %s19, 0
      %p118 = por %p116, %p117
      %p119 = scmp.ne.s32.totalorder %s111, %s113
      %p120 = scmp.eq.s32.totalorder %s24, 1
      %p121 = por %p119, %p120
      %p122 = scmp.ne.s32.totalorder %s113, %s114
      %p123 = scmp.eq.s32.totalorder %s24, 0
      %p124 = por %p122, %p123
      %p125 = scmp.ne.s32.totalorder %s113, %s114
      %p126 = scmp.eq.s32.totalorder %s25, 1
      %p127 = por %p125, %p126
      %p129 = scmp.ne.s32.totalorder %s114, %s128
      %p130 = scmp.eq.s32.totalorder %s25, 0
      %p131 = por %p129, %p130
      %s132 = ssub.s32 %s19, %s26
      %p133 = scmp.eq.s32.totalorder %s132, 0
      %s135 = sadd.s32 %s134, 1
      %s136 = scalar_select %p133, %s134, %s135
      %p139 = pneg %p133
      %p140 = scmp.eq.s32.totalorder %s19, 1
      %p141 = por %p139, %p140
      %p142 = scmp.ne.s32.totalorder %s134, %s137
      %p143 = scmp.eq.s32.totalorder %s19, 0
      %p144 = por %p142, %p143
      %p145 = scmp.ne.s32.totalorder %s134, %s137
      %p146 = scmp.eq.s32.totalorder %s24, 1
      %p147 = por %p145, %p146
      %p148 = scmp.ne.s32.totalorder %s137, %s138
      %p149 = scmp.eq.s32.totalorder %s24, 0
      %p150 = por %p148, %p149
      %p151 = scmp.ne.s32.totalorder %s137, %s138
      %p152 = scmp.eq.s32.totalorder %s25, 1
      %p153 = por %p151, %p152
      %p155 = scmp.ne.s32.totalorder %s138, %s154
      %p156 = scmp.eq.s32.totalorder %s25, 0
      %p157 = por %p155, %p156
      %p158 = scmp.le.s32.totalorder 1, %s19
      %p159 = scmp.lt.s32.totalorder %s19, 3
      %p160 = pnand %p158, %p159
      %p161 = pneg %p160
      // Predicated region
      $region9: #{tpu_custom_call.1} parent=5 // pred_check
        _
      $region10: #{tpu_custom_call.1} parent=5 // pred_check_branch
        %163 = sbr.rel (%p160) target = $region12
      $region11: #{tpu_custom_call.1} parent=5 // pred_region
        %s164 = ssub.s32 %s19, 1
        // Predicated region
        $region13: #{tpu_custom_call.1} parent=11 // pred_check
          %p165 = pneg %p40
        $region14: #{tpu_custom_call.1} parent=11 // pred_check_branch
          %167 = sbr.rel (%p165) target = $region16
        $region15: #{tpu_custom_call.1} parent=11 // pred_region
          %169 = vsyncadd [#allocation4], 0
          %s170 = sshll.u32 %s0, 4
          %s171 = int_to_ptr.hbm [resolvable:$true] %s170
          %s172 = sshll.u32 [#allocation3], 4
          %s173 = int_to_ptr.vmem [resolvable:$true] %s172
          %178 = dma.hbm_to_vmem [thread:$0]  %s171, 512, %s173, [#allocation4], 64, 64, 4
        $region16: #{tpu_custom_call.1} parent=11 // pred_fallthru
          _
        // Predicated region
        $region17: #{tpu_custom_call.1} parent=11 // pred_check
          %p179 = pneg %p61
        $region18: #{tpu_custom_call.1} parent=11 // pred_check_branch
          %181 = sbr.rel (%p179) target = $region20
        $region19: #{tpu_custom_call.1} parent=11 // pred_region
          %183 = vsyncadd [#allocation6], 0
          %s185 = sshll.u32 %s1, 4
          %s186 = int_to_ptr.hbm [resolvable:$true] %s185
          %188 = dma.hbm_to_smem %s186, 16, [#allocation8], [#allocation6]
        $region20: #{tpu_custom_call.1} parent=11 // pred_fallthru
          _
        // Predicated region
        $region21: #{tpu_custom_call.1} parent=11 // pred_check
          %p189 = pneg %p82
        $region22: #{tpu_custom_call.1} parent=11 // pred_check_branch
          %191 = sbr.rel (%p189) target = $region24
        $region23: #{tpu_custom_call.1} parent=11 // pred_region
          %193 = vsyncadd [#allocation7], 0
          %s195 = sshll.u32 %s2, 4
          %s196 = int_to_ptr.vmem [resolvable:$true] %s195
          %198 = dma.vmem_to_smem %s196, 16, [#allocation9], [#allocation7]
        $region24: #{tpu_custom_call.1} parent=11 // pred_fallthru
          _
        // Predicated region
        $region25: #{tpu_custom_call.1} parent=11 // pred_check
          %p199 = pneg %p103
        $region26: #{tpu_custom_call.1} parent=11 // pred_check_branch
          %201 = sbr.rel (%p199) target = $region28
        $region27: #{tpu_custom_call.1} parent=11 // pred_region
          %203 = vsyncadd [#allocation11], 0
          %s205 = sshll.u32 %s3, 4
          %s206 = int_to_ptr.hbm [resolvable:$true] %s205
          %208 = dma.hbm_to_smem %s206, 48, [#allocation10], [#allocation11]
        $region28: #{tpu_custom_call.1} parent=11 // pred_fallthru
          _
        // Predicated region
        $region29: #{tpu_custom_call.1} parent=11 // pred_check
          %p209 = pneg %p124
        $region30: #{tpu_custom_call.1} parent=11 // pred_check_branch
          %211 = sbr.rel (%p209) target = $region32
        $region31: #{tpu_custom_call.1} parent=11 // pred_region
          %213 = vsyncadd [#allocation13], 0
          %s215 = sshll.u32 %s4, 4
          %s216 = int_to_ptr.vmem [resolvable:$true] %s215
          %218 = dma.vmem_to_smem %s216, 16, [#allocation12], [#allocation13]
        $region32: #{tpu_custom_call.1} parent=11 // pred_fallthru
          _
      $region12: #{tpu_custom_call.1} parent=5 // pred_fallthru
        _
      %p219 = scmp.lt.s32.totalorder %s19, 2
      // Predicated region
      $region33: #{tpu_custom_call.1} parent=5 // pred_check
        %p220 = pneg %p219
      $region34: #{tpu_custom_call.1} parent=5 // pred_check_branch
        %222 = sbr.rel (%p220) target = $region36
      $region35: #{tpu_custom_call.1} parent=5 // pred_region
        _
      $region36: #{tpu_custom_call.1} parent=5 // pred_fallthru
        _
      %p223 = scmp.le.s32.totalorder 1, %s19
      %p224 = scmp.lt.s32.totalorder %s19, 3
      %p225 = pnand %p223, %p224
      %p226 = pneg %p225
      // Predicated region
      $region37: #{tpu_custom_call.1} parent=5 // pred_check
        _
      $region38: #{tpu_custom_call.1} parent=5 // pred_check_branch
        %228 = sbr.rel (%p225) target = $region40
      $region39: #{tpu_custom_call.1} parent=5 // pred_region
        %s229 = ssub.s32 %s19, 1
        // Predicated region
        $region41: #{tpu_custom_call.1} parent=39 // pred_check
          %p230 = pneg %p40
        $region42: #{tpu_custom_call.1} parent=39 // pred_check_branch
          %232 = sbr.rel (%p230) target = $region44
        $region43: #{tpu_custom_call.1} parent=39 // pred_region
          %234 = dma.done [#allocation4], 512
        $region44: #{tpu_custom_call.1} parent=39 // pred_fallthru
          _
        // Predicated region
        $region45: #{tpu_custom_call.1} parent=39 // pred_check
          %p235 = pneg %p61
        $region46: #{tpu_custom_call.1} parent=39 // pred_check_branch
          %237 = sbr.rel (%p235) target = $region48
        $region47: #{tpu_custom_call.1} parent=39 // pred_region
          %239 = dma.done [#allocation6], 16
        $region48: #{tpu_custom_call.1} parent=39 // pred_fallthru
          _
        // Predicated region
        $region49: #{tpu_custom_call.1} parent=39 // pred_check
          %p240 = pneg %p82
        $region50: #{tpu_custom_call.1} parent=39 // pred_check_branch
          %242 = sbr.rel (%p240) target = $region52
        $region51: #{tpu_custom_call.1} parent=39 // pred_region
          %244 = dma.done [#allocation7], 16
        $region52: #{tpu_custom_call.1} parent=39 // pred_fallthru
          _
        // Predicated region
        $region53: #{tpu_custom_call.1} parent=39 // pred_check
          %p245 = pneg %p103
        $region54: #{tpu_custom_call.1} parent=39 // pred_check_branch
          %247 = sbr.rel (%p245) target = $region56
        $region55: #{tpu_custom_call.1} parent=39 // pred_region
          %249 = dma.done [#allocation11], 48
        $region56: #{tpu_custom_call.1} parent=39 // pred_fallthru
          _
        // Predicated region
        $region57: #{tpu_custom_call.1} parent=39 // pred_check
          %p250 = pneg %p124
        $region58: #{tpu_custom_call.1} parent=39 // pred_check_branch
          %252 = sbr.rel (%p250) target = $region60
        $region59: #{tpu_custom_call.1} parent=39 // pred_region
          %254 = dma.done [#allocation13], 16
        $region60: #{tpu_custom_call.1} parent=39 // pred_fallthru
          _
        %255 = sfence
        %p256 = pneg %p40
        %p257 = pneg %p37
        %p258 = pneg %p61
        %p259 = pneg %p58
        %p260 = pneg %p82
        %p261 = pneg %p79
        %p262 = pneg %p103
        %p263 = pneg %p100
        %p264 = pneg %p124
        %p265 = pneg %p121
        %p266 = pneg %p150
        %p267 = pneg %p147
        %s268 = sand.u32 %s137, 1
        %s269 = scalar_lea.sflag [#allocation5], %s268
        %s270 = sand.u32 %s137, 1
        %s271 = smul.addr %s270, 8
        %s272 = scalar_lea.vmem [#allocation14], %s271
        %v273 = vlaneseq
        %v274 = vand.u32 %v273, 127
        %vm275 = vcmp.lt.s32.totalorder %v274, 0
        %v276 = vsub.s32 0, %v274
        %v277 = vsel %vm275, %v276, %v274
        %v278 = vshrl.u32 %v277, 3
        %v279 = vand.u32 %v277, 7
        %v280 = vsub.s32 0, %v279
        %v281 = vsel %vm275, %v280, %v279
        %vm282 = vcmp.ne.s32.totalorder %v281, 0
        %vm283 = vcmp.lt.s32.totalorder %v281, 0
        %vm284 = vmand %vm283, %vm282
        %v285 = vadd.s32 %v281, 8
        %v286 = vsel %vm284, %v285, %v281
        %vm287 = vcmp.eq.s32.totalorder %v286, 0
        %vm288 = vcmask 592896
        %289 = vst.msk [vmem:[#allocation2] sm:$0xf] %vm288, 0.0
        %290 = vst.msk [vmem:[#allocation2 + $0x4] sm:$0xf] %vm288, 0.0
        %291 = vst.msk [vmem:[#allocation2 + $0x8] sm:$0xf] %vm288, 0.0
        %292 = vst.msk [vmem:[#allocation2 + $0xc] sm:$0xf] %vm288, 0.0
        %s293 = smul.u32 %s24, 16
        %s294 = scalar_lea.vmem [#allocation3], %s293
        %v295 = vld [vmem:[%s294] sm:$0xf]
        %v296 = vld [vmem:[%s294 + $0x4] sm:$0xf]
        %v297 = vld [vmem:[%s294 + $0x8] sm:$0xf]
        %v298 = vld [vmem:[%s294 + $0xc] sm:$0xf]
        %s299 = sld [smem:[#allocation12]]
        %v300 = vstv %s299
        %s301 = sld [smem:[#allocation12 + $0x1]]
        %v302 = vstv %s301
        %s303 = sld [smem:[#allocation12 + $0x2]]
        %v304 = vstv %s303
        %s305 = sld [smem:[#allocation12 + $0x3]]
        %v306 = vstv %s305
        %s307 = sld [smem:[#allocation12 + $0x4]]
        %v308 = vstv %s307
        %s309 = sld [smem:[#allocation12 + $0x5]]
        %v310 = vstv %s309
        %s311 = sld [smem:[#allocation12 + $0x6]]
        %v312 = vstv %s311
        %s313 = sld [smem:[#allocation12 + $0x7]]
        %v314 = vstv %s313
        %v315 = vld [vmem:[#allocation3] sm:$0xf]
        %v316 = vld [vmem:[#allocation3 + $0x10] sm:$0xf]
        %vm317 = vcmask 519168
        %v318 = vsel %vm317, %v315, 0.0
        %v319 = vsel %vm317, %v316, 0.0
        %v320 = vadd.f32 %v318, %v319
        %321 = vadd.xlane.f32.xlu0 %v320
        %v322 = vpop.xlane.xlu0 %321
        %v323 = vrot.slane %v322, 4
        %v324 = vadd.f32 %v322, %v323
        %v325 = vrot.slane %v324, 2
        %v326 = vadd.f32 %v324, %v325
        %v327 = vrot.slane %v326, 1
        %v328 = vadd.f32 %v326, %v327
        %s329 = vtos %v328
        %v330 = vrcp.pop 512.0
        %v331 = vmul.f32 512.0, %v330
        %v332 = vsub.f32 1.0, %v331
        %v333 = vmul.f32 %v330, %v332
        %v334 = vadd.f32 %v330, %v333
        %vm335 = vweird.f32 %v330
        %v336 = vsel %vm335, %v330, %v334
        %s337 = vtos %v336
        %s338 = smul.f32 %s329, %s337
        %v339 = vstv %s338
        %v340 = vsub.f32 %v315, %v339
        %v341 = vsub.f32 %v316, %v339
        %v342 = vmul.f32 %v340, %v340
        %v343 = vmul.f32 %v341, %v341
        %v344 = vsel %vm317, %v342, 0.0
        %v345 = vsel %vm317, %v343, 0.0
        %v346 = vadd.f32 %v344, %v345
        %347 = vadd.xlane.f32.xlu0 %v346
        %v348 = vpop.xlane.xlu0 %347
        %v349 = vrot.slane %v348, 4
        %v350 = vadd.f32 %v348, %v349
        %v351 = vrot.slane %v350, 2
        %v352 = vadd.f32 %v350, %v351
        %v353 = vrot.slane %v352, 1
        %v354 = vadd.f32 %v352, %v353
        %s355 = vtos %v354
        %v356 = vrcp.pop 512.0
        %v357 = vmul.f32 512.0, %v356
        %v358 = vsub.f32 1.0, %v357
        %v359 = vmul.f32 %v356, %v358
        %v360 = vadd.f32 %v356, %v359
        %vm361 = vweird.f32 %v356
        %v362 = vsel %vm361, %v356, %v360
        %s363 = vtos %v362
        %s364 = smul.f32 %s355, %s363
        %s365 = sld [smem:[#allocation8]]
        %s366 = sadd.f32 %s364, 1e-05
        %v367 = vstv %s366
        %v368 = vrsqrt.pop %v367
        %v369 = vmul.f32 %v368, %v367
        %v370 = vmul.f32 %v369, %v368
        %v371 = vmul.f32 0.5, %v370
        %v372 = vsub.f32 1.5, %v371
        %v373 = vmul.f32 %v368, %v372
        %vm374 = vweird.f32 %v367
        %vm375 = vweird.f32 %v368
        %vm376 = vmor %vm374, %vm375
        %v377 = vsel %vm376, %v368, %v373
        %s378 = vtos %v377
        %s379 = smul.f32 %s365, %s378
        %s380 = sld [smem:[#allocation9]]
        %s381 = smul.f32 %s338, %s379
        %s382 = ssub.f32 %s380, %s381
        %v383 = vstv %s379
        %v384 = vmul.f32 %v295, %v383
        %v385 = vstv %s382
        %v386 = vadd.f32 %v384, %v385
        %v387 = vmax.f32 %v386, 0.0
        %389 = vrot.lane.b32.xlu0 %v387, 9
        %v390 = vpop.permute.xlu0 %389
        %vm392 = vcmask 592968
        %393 = vst.msk [vmem:[#allocation2] sm:$0xf] %vm392, %v390
        %v394 = vld [vmem:[#allocation2 + $0x3] sm:$0x1]
        %v395 = vsel %vm287, 0.0, %v394
        %s396 = sld [smem:[#allocation10]]
        %v397 = vstv %s396
        %v398 = vmul.f32 %v397, %v395
        %v399 = vadd.f32 %v300, %v398
        %s400 = sld [smem:[#allocation10 + $0x24]]
        %v401 = vstv %s400
        %v402 = vmul.f32 %v401, %v395
        %v403 = vadd.f32 %v302, %v402
        %s404 = sld [smem:[#allocation10 + $0x48]]
        %v405 = vstv %s404
        %v406 = vmul.f32 %v405, %v395
        %v407 = vadd.f32 %v304, %v406
        %s408 = sld [smem:[#allocation10 + $0x6c]]
        %v409 = vstv %s408
        %v410 = vmul.f32 %v409, %v395
        %v411 = vadd.f32 %v306, %v410
        %s412 = sld [smem:[#allocation10 + $0x90]]
        %v413 = vstv %s412
        %v414 = vmul.f32 %v413, %v395
        %v415 = vadd.f32 %v308, %v414
        %s416 = sld [smem:[#allocation10 + $0xb4]]
        %v417 = vstv %s416
        %v418 = vmul.f32 %v417, %v395
        %v419 = vadd.f32 %v310, %v418
        %s420 = sld [smem:[#allocation10 + $0xd8]]
        %v421 = vstv %s420
        %v422 = vmul.f32 %v421, %v395
        %v423 = vadd.f32 %v312, %v422
        %s424 = sld [smem:[#allocation10 + $0xfc]]
        %v425 = vstv %s424
        %v426 = vmul.f32 %v425, %v395
        %v427 = vadd.f32 %v314, %v426
        %v428 = vld [vmem:[#allocation2 + $0x2] sm:$0x1]
        %s429 = sld [smem:[#allocation10 + $0x1]]
        %v430 = vstv %s429
        %v431 = vmul.f32 %v430, %v428
        %433 = vrot.lane.b32.xlu0 %v431, 127
        %v434 = vpop.permute.xlu0 %433
        %v436 = vadd.f32 %v399, %v434
        %s437 = sld [smem:[#allocation10 + $0x25]]
        %v438 = vstv %s437
        %v439 = vmul.f32 %v438, %v428
        %441 = vrot.lane.b32.xlu0 %v439, 127
        %v442 = vpop.permute.xlu0 %441
        %v444 = vadd.f32 %v403, %v442
        %s445 = sld [smem:[#allocation10 + $0x49]]
        %v446 = vstv %s445
        %v447 = vmul.f32 %v446, %v428
        %449 = vrot.lane.b32.xlu0 %v447, 127
        %v450 = vpop.permute.xlu0 %449
        %v452 = vadd.f32 %v407, %v450
        %s453 = sld [smem:[#allocation10 + $0x6d]]
        %v454 = vstv %s453
        %v455 = vmul.f32 %v454, %v428
        %457 = vrot.lane.b32.xlu0 %v455, 127
        %v458 = vpop.permute.xlu0 %457
        %v460 = vadd.f32 %v411, %v458
        %s461 = sld [smem:[#allocation10 + $0x91]]
        %v462 = vstv %s461
        %v463 = vmul.f32 %v462, %v428
        %465 = vrot.lane.b32.xlu0 %v463, 127
        %v466 = vpop.permute.xlu0 %465
        %v468 = vadd.f32 %v415, %v466
        %s469 = sld [smem:[#allocation10 + $0xb5]]
        %v470 = vstv %s469
        %v471 = vmul.f32 %v470, %v428
        %473 = vrot.lane.b32.xlu0 %v471, 127
        %v474 = vpop.permute.xlu0 %473
        %v476 = vadd.f32 %v419, %v474
        %s477 = sld [smem:[#allocation10 + $0xd9]]
        %v478 = vstv %s477
        %v479 = vmul.f32 %v478, %v428
        %481 = vrot.lane.b32.xlu0 %v479, 127
        %v482 = vpop.permute.xlu0 %481
        %v484 = vadd.f32 %v423, %v482
        %s485 = sld [smem:[#allocation10 + $0xfd]]
        %v486 = vstv %s485
        %v487 = vmul.f32 %v486, %v428
        %489 = vrot.lane.b32.xlu0 %v487, 127
        %v490 = vpop.permute.xlu0 %489
        %v492 = vadd.f32 %v427, %v490
        %s493 = sld [smem:[#allocation10 + $0x2]]
        %v494 = vstv %s493
        %v495 = vmul.f32 %v494, %v394
        %497 = vrot.lane.b32.xlu0 %v495, 127
        %v498 = vpop.permute.xlu0 %497
        %v500 = vadd.f32 %v436, %v498
        %s501 = sld [smem:[#allocation10 + $0x26]]
        %v502 = vstv %s501
        %v503 = vmul.f32 %v502, %v394
        %505 = vrot.lane.b32.xlu0 %v503, 127
        %v506 = vpop.permute.xlu0 %505
        %v508 = vadd.f32 %v444, %v506
        %s509 = sld [smem:[#allocation10 + $0x4a]]
        %v510 = vstv %s509
        %v511 = vmul.f32 %v510, %v394
        %513 = vrot.lane.b32.xlu0 %v511, 127
        %v514 = vpop.permute.xlu0 %513
        %v516 = vadd.f32 %v452, %v514
        %s517 = sld [smem:[#allocation10 + $0x6e]]
        %v518 = vstv %s517
        %v519 = vmul.f32 %v518, %v394
        %521 = vrot.lane.b32.xlu0 %v519, 127
        %v522 = vpop.permute.xlu0 %521
        %v524 = vadd.f32 %v460, %v522
        %s525 = sld [smem:[#allocation10 + $0x92]]
        %v526 = vstv %s525
        %v527 = vmul.f32 %v526, %v394
        %529 = vrot.lane.b32.xlu0 %v527, 127
        %v530 = vpop.permute.xlu0 %529
        %v532 = vadd.f32 %v468, %v530
        %s533 = sld [smem:[#allocation10 + $0xb6]]
        %v534 = vstv %s533
        %v535 = vmul.f32 %v534, %v394
        %537 = vrot.lane.b32.xlu0 %v535, 127
        %v538 = vpop.permute.xlu0 %537
        %v540 = vadd.f32 %v476, %v538
        %s541 = sld [smem:[#allocation10 + $0xda]]
        %v542 = vstv %s541
        %v543 = vmul.f32 %v542, %v394
        %545 = vrot.lane.b32.xlu0 %v543, 127
        %v546 = vpop.permute.xlu0 %545
        %v548 = vadd.f32 %v484, %v546
        %s549 = sld [smem:[#allocation10 + $0xfe]]
        %v550 = vstv %s549
        %v551 = vmul.f32 %v550, %v394
        %553 = vrot.lane.b32.xlu0 %v551, 127
        %v554 = vpop.permute.xlu0 %553
        %v556 = vadd.f32 %v492, %v554
        %v557 = vld [vmem:[#allocation2 + $0x1] sm:$0x1]
        %559 = vrot.lane.b32.xlu0 %v557, 120
        %v560 = vpop.permute.xlu0 %559
        %v562 = vsel %vm287, 0.0, %v560
        %s563 = sld [smem:[#allocation10 + $0x3]]
        %v564 = vstv %s563
        %v565 = vmul.f32 %v564, %v562
        %v566 = vadd.f32 %v500, %v565
        %s567 = sld [smem:[#allocation10 + $0x27]]
        %v568 = vstv %s567
        %v569 = vmul.f32 %v568, %v562
        %v570 = vadd.f32 %v508, %v569
        %s571 = sld [smem:[#allocation10 + $0x4b]]
        %v572 = vstv %s571
        %v573 = vmul.f32 %v572, %v562
        %v574 = vadd.f32 %v516, %v573
        %s575 = sld [smem:[#allocation10 + $0x6f]]
        %v576 = vstv %s575
        %v577 = vmul.f32 %v576, %v562
        %v578 = vadd.f32 %v524, %v577
        %s579 = sld [smem:[#allocation10 + $0x93]]
        %v580 = vstv %s579
        %v581 = vmul.f32 %v580, %v562
        %v582 = vadd.f32 %v532, %v581
        %s583 = sld [smem:[#allocation10 + $0xb7]]
        %v584 = vstv %s583
        %v585 = vmul.f32 %v584, %v562
        %v586 = vadd.f32 %v540, %v585
        %s587 = sld [smem:[#allocation10 + $0xdb]]
        %v588 = vstv %s587
        %v589 = vmul.f32 %v588, %v562
        %v590 = vadd.f32 %v548, %v589
        %s591 = sld [smem:[#allocation10 + $0xff]]
        %v592 = vstv %s591
        %v593 = vmul.f32 %v592, %v562
        %v594 = vadd.f32 %v556, %v593
        %v595 = vld [vmem:[#allocation2] sm:$0x1]
        %s596 = sld [smem:[#allocation10 + $0x4]]
        %v597 = vstv %s596
        %v598 = vmul.f32 %v597, %v595
        %600 = vrot.lane.b32.xlu0 %v598, 119
        %v601 = vpop.permute.xlu0 %600
        %v603 = vadd.f32 %v566, %v601
        %s604 = sld [smem:[#allocation10 + $0x28]]
        %v605 = vstv %s604
        %v606 = vmul.f32 %v605, %v595
        %608 = vrot.lane.b32.xlu0 %v606, 119
        %v609 = vpop.permute.xlu0 %608
        %v611 = vadd.f32 %v570, %v609
        %s612 = sld [smem:[#allocation10 + $0x4c]]
        %v613 = vstv %s612
        %v614 = vmul.f32 %v613, %v595
        %616 = vrot.lane.b32.xlu0 %v614, 119
        %v617 = vpop.permute.xlu0 %616
        %v619 = vadd.f32 %v574, %v617
        %s620 = sld [smem:[#allocation10 + $0x70]]
        %v621 = vstv %s620
        %v622 = vmul.f32 %v621, %v595
        %624 = vrot.lane.b32.xlu0 %v622, 119
        %v625 = vpop.permute.xlu0 %624
        %v627 = vadd.f32 %v578, %v625
        %s628 = sld [smem:[#allocation10 + $0x94]]
        %v629 = vstv %s628
        %v630 = vmul.f32 %v629, %v595
        %632 = vrot.lane.b32.xlu0 %v630, 119
        %v633 = vpop.permute.xlu0 %632
        %v635 = vadd.f32 %v582, %v633
        %s636 = sld [smem:[#allocation10 + $0xb8]]
        %v637 = vstv %s636
        %v638 = vmul.f32 %v637, %v595
        %640 = vrot.lane.b32.xlu0 %v638, 119
        %v641 = vpop.permute.xlu0 %640
        %v643 = vadd.f32 %v586, %v641
        %s644 = sld [smem:[#allocation10 + $0xdc]]
        %v645 = vstv %s644
        %v646 = vmul.f32 %v645, %v595
        %648 = vrot.lane.b32.xlu0 %v646, 119
        %v649 = vpop.permute.xlu0 %648
        %v651 = vadd.f32 %v590, %v649
        %s652 = sld [smem:[#allocation10 + $0x100]]
        %v653 = vstv %s652
        %v654 = vmul.f32 %v653, %v595
        %656 = vrot.lane.b32.xlu0 %v654, 119
        %v657 = vpop.permute.xlu0 %656
        %v659 = vadd.f32 %v594, %v657
        %s660 = sld [smem:[#allocation10 + $0x5]]
        %v661 = vstv %s660
        %v662 = vmul.f32 %v661, %v557
        %664 = vrot.lane.b32.xlu0 %v662, 119
        %v665 = vpop.permute.xlu0 %664
        %v667 = vadd.f32 %v603, %v665
        %s668 = sld [smem:[#allocation10 + $0x29]]
        %v669 = vstv %s668
        %v670 = vmul.f32 %v669, %v557
        %672 = vrot.lane.b32.xlu0 %v670, 119
        %v673 = vpop.permute.xlu0 %672
        %v675 = vadd.f32 %v611, %v673
        %s676 = sld [smem:[#allocation10 + $0x4d]]
        %v677 = vstv %s676
        %v678 = vmul.f32 %v677, %v557
        %680 = vrot.lane.b32.xlu0 %v678, 119
        %v681 = vpop.permute.xlu0 %680
        %v683 = vadd.f32 %v619, %v681
        %s684 = sld [smem:[#allocation10 + $0x71]]
        %v685 = vstv %s684
        %v686 = vmul.f32 %v685, %v557
        %688 = vrot.lane.b32.xlu0 %v686, 119
        %v689 = vpop.permute.xlu0 %688
        %v691 = vadd.f32 %v627, %v689
        %s692 = sld [smem:[#allocation10 + $0x95]]
        %v693 = vstv %s692
        %v694 = vmul.f32 %v693, %v557
        %696 = vrot.lane.b32.xlu0 %v694, 119
        %v697 = vpop.permute.xlu0 %696
        %v699 = vadd.f32 %v635, %v697
        %s700 = sld [smem:[#allocation10 + $0xb9]]
        %v701 = vstv %s700
        %v702 = vmul.f32 %v701, %v557
        %704 = vrot.lane.b32.xlu0 %v702, 119
        %v705 = vpop.permute.xlu0 %704
        %v707 = vadd.f32 %v643, %v705
        %s708 = sld [smem:[#allocation10 + $0xdd]]
        %v709 = vstv %s708
        %v710 = vmul.f32 %v709, %v557
        %712 = vrot.lane.b32.xlu0 %v710, 119
        %v713 = vpop.permute.xlu0 %712
        %v715 = vadd.f32 %v651, %v713
        %s716 = sld [smem:[#allocation10 + $0x101]]
        %v717 = vstv %s716
        %v718 = vmul.f32 %v717, %v557
        %720 = vrot.lane.b32.xlu0 %v718, 119
        %v721 = vpop.permute.xlu0 %720
        %v723 = vadd.f32 %v659, %v721
        %725 = vrot.lane.b32.xlu0 %v394, 120
        %v726 = vpop.permute.xlu0 %725
        %v728 = vsel %vm287, 0.0, %v726
        %s729 = sld [smem:[#allocation10 + $0x6]]
        %v730 = vstv %s729
        %v731 = vmul.f32 %v730, %v728
        %v732 = vadd.f32 %v667, %v731
        %s733 = sld [smem:[#allocation10 + $0x2a]]
        %v734 = vstv %s733
        %v735 = vmul.f32 %v734, %v728
        %v736 = vadd.f32 %v675, %v735
        %s737 = sld [smem:[#allocation10 + $0x4e]]
        %v738 = vstv %s737
        %v739 = vmul.f32 %v738, %v728
        %v740 = vadd.f32 %v683, %v739
        %s741 = sld [smem:[#allocation10 + $0x72]]
        %v742 = vstv %s741
        %v743 = vmul.f32 %v742, %v728
        %v744 = vadd.f32 %v691, %v743
        %s745 = sld [smem:[#allocation10 + $0x96]]
        %v746 = vstv %s745
        %v747 = vmul.f32 %v746, %v728
        %v748 = vadd.f32 %v699, %v747
        %s749 = sld [smem:[#allocation10 + $0xba]]
        %v750 = vstv %s749
        %v751 = vmul.f32 %v750, %v728
        %v752 = vadd.f32 %v707, %v751
        %s753 = sld [smem:[#allocation10 + $0xde]]
        %v754 = vstv %s753
        %v755 = vmul.f32 %v754, %v728
        %v756 = vadd.f32 %v715, %v755
        %s757 = sld [smem:[#allocation10 + $0x102]]
        %v758 = vstv %s757
        %v759 = vmul.f32 %v758, %v728
        %v760 = vadd.f32 %v723, %v759
        %s761 = sld [smem:[#allocation10 + $0x7]]
        %v762 = vstv %s761
        %v763 = vmul.f32 %v762, %v428
        %765 = vrot.lane.b32.xlu0 %v763, 119
        %v766 = vpop.permute.xlu0 %765
        %v768 = vadd.f32 %v732, %v766
        %s769 = sld [smem:[#allocation10 + $0x2b]]
        %v770 = vstv %s769
        %v771 = vmul.f32 %v770, %v428
        %773 = vrot.lane.b32.xlu0 %v771, 119
        %v774 = vpop.permute.xlu0 %773
        %v776 = vadd.f32 %v736, %v774
        %s777 = sld [smem:[#allocation10 + $0x4f]]
        %v778 = vstv %s777
        %v779 = vmul.f32 %v778, %v428
        %781 = vrot.lane.b32.xlu0 %v779, 119
        %v782 = vpop.permute.xlu0 %781
        %v784 = vadd.f32 %v740, %v782
        %s785 = sld [smem:[#allocation10 + $0x73]]
        %v786 = vstv %s785
        %v787 = vmul.f32 %v786, %v428
        %789 = vrot.lane.b32.xlu0 %v787, 119
        %v790 = vpop.permute.xlu0 %789
        %v792 = vadd.f32 %v744, %v790
        %s793 = sld [smem:[#allocation10 + $0x97]]
        %v794 = vstv %s793
        %v795 = vmul.f32 %v794, %v428
        %797 = vrot.lane.b32.xlu0 %v795, 119
        %v798 = vpop.permute.xlu0 %797
        %v800 = vadd.f32 %v748, %v798
        %s801 = sld [smem:[#allocation10 + $0xbb]]
        %v802 = vstv %s801
        %v803 = vmul.f32 %v802, %v428
        %805 = vrot.lane.b32.xlu0 %v803, 119
        %v806 = vpop.permute.xlu0 %805
        %v808 = vadd.f32 %v752, %v806
        %s809 = sld [smem:[#allocation10 + $0xdf]]
        %v810 = vstv %s809
        %v811 = vmul.f32 %v810, %v428
        %813 = vrot.lane.b32.xlu0 %v811, 119
        %v814 = vpop.permute.xlu0 %813
        %v816 = vadd.f32 %v756, %v814
        %s817 = sld [smem:[#allocation10 + $0x103]]
        %v818 = vstv %s817
        %v819 = vmul.f32 %v818, %v428
        %821 = vrot.lane.b32.xlu0 %v819, 119
        %v822 = vpop.permute.xlu0 %821
        %v824 = vadd.f32 %v760, %v822
        %s825 = sld [smem:[#allocation10 + $0x8]]
        %v826 = vstv %s825
        %v827 = vmul.f32 %v826, %v394
        %829 = vrot.lane.b32.xlu0 %v827, 119
        %v830 = vpop.permute.xlu0 %829
        %v832 = vadd.f32 %v768, %v830
        %s833 = sld [smem:[#allocation10 + $0x2c]]
        %v834 = vstv %s833
        %v835 = vmul.f32 %v834, %v394
        %837 = vrot.lane.b32.xlu0 %v835, 119
        %v838 = vpop.permute.xlu0 %837
        %v840 = vadd.f32 %v776, %v838
        %s841 = sld [smem:[#allocation10 + $0x50]]
        %v842 = vstv %s841
        %v843 = vmul.f32 %v842, %v394
        %845 = vrot.lane.b32.xlu0 %v843, 119
        %v846 = vpop.permute.xlu0 %845
        %v848 = vadd.f32 %v784, %v846
        %s849 = sld [smem:[#allocation10 + $0x74]]
        %v850 = vstv %s849
        %v851 = vmul.f32 %v850, %v394
        %853 = vrot.lane.b32.xlu0 %v851, 119
        %v854 = vpop.permute.xlu0 %853
        %v856 = vadd.f32 %v792, %v854
        %s857 = sld [smem:[#allocation10 + $0x98]]
        %v858 = vstv %s857
        %v859 = vmul.f32 %v858, %v394
        %861 = vrot.lane.b32.xlu0 %v859, 119
        %v862 = vpop.permute.xlu0 %861
        %v864 = vadd.f32 %v800, %v862
        %s865 = sld [smem:[#allocation10 + $0xbc]]
        %v866 = vstv %s865
        %v867 = vmul.f32 %v866, %v394
        %869 = vrot.lane.b32.xlu0 %v867, 119
        %v870 = vpop.permute.xlu0 %869
        %v872 = vadd.f32 %v808, %v870
        %s873 = sld [smem:[#allocation10 + $0xe0]]
        %v874 = vstv %s873
        %v875 = vmul.f32 %v874, %v394
        %877 = vrot.lane.b32.xlu0 %v875, 119
        %v878 = vpop.permute.xlu0 %877
        %v880 = vadd.f32 %v816, %v878
        %s881 = sld [smem:[#allocation10 + $0x104]]
        %v882 = vstv %s881
        %v883 = vmul.f32 %v882, %v394
        %885 = vrot.lane.b32.xlu0 %v883, 119
        %v886 = vpop.permute.xlu0 %885
        %v888 = vadd.f32 %v824, %v886
        %s889 = scalar_lea.vmem [#allocation3], 4
        %v890 = vld [vmem:[%s889] sm:$0xf]
        %v891 = vld [vmem:[%s889 + $0x10] sm:$0xf]
        %v892 = vsel %vm317, %v890, 0.0
        %v893 = vsel %vm317, %v891, 0.0
        %v894 = vadd.f32 %v892, %v893
        %895 = vadd.xlane.f32.xlu0 %v894
        %v896 = vpop.xlane.xlu0 %895
        %v897 = vrot.slane %v896, 4
        %v898 = vadd.f32 %v896, %v897
        %v899 = vrot.slane %v898, 2
        %v900 = vadd.f32 %v898, %v899
        %v901 = vrot.slane %v900, 1
        %v902 = vadd.f32 %v900, %v901
        %s903 = vtos %v902
        %v904 = vrcp.pop 512.0
        %v905 = vmul.f32 512.0, %v904
        %v906 = vsub.f32 1.0, %v905
        %v907 = vmul.f32 %v904, %v906
        %v908 = vadd.f32 %v904, %v907
        %vm909 = vweird.f32 %v904
        %v910 = vsel %vm909, %v904, %v908
        %s911 = vtos %v910
        %s912 = smul.f32 %s903, %s911
        %v913 = vstv %s912
        %v914 = vsub.f32 %v890, %v913
        %v915 = vsub.f32 %v891, %v913
        %v916 = vmul.f32 %v914, %v914
        %v917 = vmul.f32 %v915, %v915
        %v918 = vsel %vm317, %v916, 0.0
        %v919 = vsel %vm317, %v917, 0.0
        %v920 = vadd.f32 %v918, %v919
        %921 = vadd.xlane.f32.xlu0 %v920
        %v922 = vpop.xlane.xlu0 %921
        %v923 = vrot.slane %v922, 4
        %v924 = vadd.f32 %v922, %v923
        %v925 = vrot.slane %v924, 2
        %v926 = vadd.f32 %v924, %v925
        %v927 = vrot.slane %v926, 1
        %v928 = vadd.f32 %v926, %v927
        %s929 = vtos %v928
        %v930 = vrcp.pop 512.0
        %v931 = vmul.f32 512.0, %v930
        %v932 = vsub.f32 1.0, %v931
        %v933 = vmul.f32 %v930, %v932
        %v934 = vadd.f32 %v930, %v933
        %vm935 = vweird.f32 %v930
        %v936 = vsel %vm935, %v930, %v934
        %s937 = vtos %v936
        %s938 = smul.f32 %s929, %s937
        %s939 = sld [smem:[#allocation8 + $0x1]]
        %s940 = sadd.f32 %s938, 1e-05
        %v941 = vstv %s940
        %v942 = vrsqrt.pop %v941
        %v943 = vmul.f32 %v942, %v941
        %v944 = vmul.f32 %v943, %v942
        %v945 = vmul.f32 0.5, %v944
        %v946 = vsub.f32 1.5, %v945
        %v947 = vmul.f32 %v942, %v946
        %vm948 = vweird.f32 %v941
        %vm949 = vweird.f32 %v942
        %vm950 = vmor %vm948, %vm949
        %v951 = vsel %vm950, %v942, %v947
        %s952 = vtos %v951
        %s953 = smul.f32 %s939, %s952
        %s954 = sld [smem:[#allocation9 + $0x1]]
        %s955 = smul.f32 %s912, %s953
        %s956 = ssub.f32 %s954, %s955
        %v957 = vstv %s953
        %v958 = vmul.f32 %v296, %v957
        %v959 = vstv %s956
        %v960 = vadd.f32 %v958, %v959
        %v961 = vmax.f32 %v960, 0.0
        %963 = vrot.lane.b32.xlu0 %v961, 9
        %v964 = vpop.permute.xlu0 %963
        %s966 = scalar_lea.vmem [#allocation2], 4
        %967 = vst.msk [vmem:[%s966] sm:$0xf] %vm392, %v964
        %v968 = vld [vmem:[%s966 + $0x3] sm:$0x1]
        %v969 = vsel %vm287, 0.0, %v968
        %s970 = sld [smem:[#allocation10 + $0x9]]
        %v971 = vstv %s970
        %v972 = vmul.f32 %v971, %v969
        %v973 = vadd.f32 %v832, %v972
        %s974 = sld [smem:[#allocation10 + $0x2d]]
        %v975 = vstv %s974
        %v976 = vmul.f32 %v975, %v969
        %v977 = vadd.f32 %v840, %v976
        %s978 = sld [smem:[#allocation10 + $0x51]]
        %v979 = vstv %s978
        %v980 = vmul.f32 %v979, %v969
        %v981 = vadd.f32 %v848, %v980
        %s982 = sld [smem:[#allocation10 + $0x75]]
        %v983 = vstv %s982
        %v984 = vmul.f32 %v983, %v969
        %v985 = vadd.f32 %v856, %v984
        %s986 = sld [smem:[#allocation10 + $0x99]]
        %v987 = vstv %s986
        %v988 = vmul.f32 %v987, %v969
        %v989 = vadd.f32 %v864, %v988
        %s990 = sld [smem:[#allocation10 + $0xbd]]
        %v991 = vstv %s990
        %v992 = vmul.f32 %v991, %v969
        %v993 = vadd.f32 %v872, %v992
        %s994 = sld [smem:[#allocation10 + $0xe1]]
        %v995 = vstv %s994
        %v996 = vmul.f32 %v995, %v969
        %v997 = vadd.f32 %v880, %v996
        %s998 = sld [smem:[#allocation10 + $0x105]]
        %v999 = vstv %s998
        %v1000 = vmul.f32 %v999, %v969
        %v1001 = vadd.f32 %v888, %v1000
        %v1002 = vld [vmem:[%s966 + $0x2] sm:$0x1]
        %s1003 = sld [smem:[#allocation10 + $0xa]]
        %v1004 = vstv %s1003
        %v1005 = vmul.f32 %v1004, %v1002
        %1007 = vrot.lane.b32.xlu0 %v1005, 127
        %v1008 = vpop.permute.xlu0 %1007
        %v1010 = vadd.f32 %v973, %v1008
        %s1011 = sld [smem:[#allocation10 + $0x2e]]
        %v1012 = vstv %s1011
        %v1013 = vmul.f32 %v1012, %v1002
        %1015 = vrot.lane.b32.xlu0 %v1013, 127
        %v1016 = vpop.permute.xlu0 %1015
        %v1018 = vadd.f32 %v977, %v1016
        %s1019 = sld [smem:[#allocation10 + $0x52]]
        %v1020 = vstv %s1019
        %v1021 = vmul.f32 %v1020, %v1002
        %1023 = vrot.lane.b32.xlu0 %v1021, 127
        %v1024 = vpop.permute.xlu0 %1023
        %v1026 = vadd.f32 %v981, %v1024
        %s1027 = sld [smem:[#allocation10 + $0x76]]
        %v1028 = vstv %s1027
        %v1029 = vmul.f32 %v1028, %v1002
        %1031 = vrot.lane.b32.xlu0 %v1029, 127
        %v1032 = vpop.permute.xlu0 %1031
        %v1034 = vadd.f32 %v985, %v1032
        %s1035 = sld [smem:[#allocation10 + $0x9a]]
        %v1036 = vstv %s1035
        %v1037 = vmul.f32 %v1036, %v1002
        %1039 = vrot.lane.b32.xlu0 %v1037, 127
        %v1040 = vpop.permute.xlu0 %1039
        %v1042 = vadd.f32 %v989, %v1040
        %s1043 = sld [smem:[#allocation10 + $0xbe]]
        %v1044 = vstv %s1043
        %v1045 = vmul.f32 %v1044, %v1002
        %1047 = vrot.lane.b32.xlu0 %v1045, 127
        %v1048 = vpop.permute.xlu0 %1047
        %v1050 = vadd.f32 %v993, %v1048
        %s1051 = sld [smem:[#allocation10 + $0xe2]]
        %v1052 = vstv %s1051
        %v1053 = vmul.f32 %v1052, %v1002
        %1055 = vrot.lane.b32.xlu0 %v1053, 127
        %v1056 = vpop.permute.xlu0 %1055
        %v1058 = vadd.f32 %v997, %v1056
        %s1059 = sld [smem:[#allocation10 + $0x106]]
        %v1060 = vstv %s1059
        %v1061 = vmul.f32 %v1060, %v1002
        %1063 = vrot.lane.b32.xlu0 %v1061, 127
        %v1064 = vpop.permute.xlu0 %1063
        %v1066 = vadd.f32 %v1001, %v1064
        %s1067 = sld [smem:[#allocation10 + $0xb]]
        %v1068 = vstv %s1067
        %v1069 = vmul.f32 %v1068, %v968
        %1071 = vrot.lane.b32.xlu0 %v1069, 127
        %v1072 = vpop.permute.xlu0 %1071
        %v1074 = vadd.f32 %v1010, %v1072
        %s1075 = sld [smem:[#allocation10 + $0x2f]]
        %v1076 = vstv %s1075
        %v1077 = vmul.f32 %v1076, %v968
        %1079 = vrot.lane.b32.xlu0 %v1077, 127
        %v1080 = vpop.permute.xlu0 %1079
        %v1082 = vadd.f32 %v1018, %v1080
        %s1083 = sld [smem:[#allocation10 + $0x53]]
        %v1084 = vstv %s1083
        %v1085 = vmul.f32 %v1084, %v968
        %1087 = vrot.lane.b32.xlu0 %v1085, 127
        %v1088 = vpop.permute.xlu0 %1087
        %v1090 = vadd.f32 %v1026, %v1088
        %s1091 = sld [smem:[#allocation10 + $0x77]]
        %v1092 = vstv %s1091
        %v1093 = vmul.f32 %v1092, %v968
        %1095 = vrot.lane.b32.xlu0 %v1093, 127
        %v1096 = vpop.permute.xlu0 %1095
        %v1098 = vadd.f32 %v1034, %v1096
        %s1099 = sld [smem:[#allocation10 + $0x9b]]
        %v1100 = vstv %s1099
        %v1101 = vmul.f32 %v1100, %v968
        %1103 = vrot.lane.b32.xlu0 %v1101, 127
        %v1104 = vpop.permute.xlu0 %1103
        %v1106 = vadd.f32 %v1042, %v1104
        %s1107 = sld [smem:[#allocation10 + $0xbf]]
        %v1108 = vstv %s1107
        %v1109 = vmul.f32 %v1108, %v968
        %1111 = vrot.lane.b32.xlu0 %v1109, 127
        %v1112 = vpop.permute.xlu0 %1111
        %v1114 = vadd.f32 %v1050, %v1112
        %s1115 = sld [smem:[#allocation10 + $0xe3]]
        %v1116 = vstv %s1115
        %v1117 = vmul.f32 %v1116, %v968
        %1119 = vrot.lane.b32.xlu0 %v1117, 127
        %v1120 = vpop.permute.xlu0 %1119
        %v1122 = vadd.f32 %v1058, %v1120
        %s1123 = sld [smem:[#allocation10 + $0x107]]
        %v1124 = vstv %s1123
        %v1125 = vmul.f32 %v1124, %v968
        %1127 = vrot.lane.b32.xlu0 %v1125, 127
        %v1128 = vpop.permute.xlu0 %1127
        %v1130 = vadd.f32 %v1066, %v1128
        %v1131 = vld [vmem:[%s966 + $0x1] sm:$0x1]
        %1133 = vrot.lane.b32.xlu0 %v1131, 120
        %v1134 = vpop.permute.xlu0 %1133
        %v1136 = vsel %vm287, 0.0, %v1134
        %s1137 = sld [smem:[#allocation10 + $0xc]]
        %v1138 = vstv %s1137
        %v1139 = vmul.f32 %v1138, %v1136
        %v1140 = vadd.f32 %v1074, %v1139
        %s1141 = sld [smem:[#allocation10 + $0x30]]
        %v1142 = vstv %s1141
        %v1143 = vmul.f32 %v1142, %v1136
        %v1144 = vadd.f32 %v1082, %v1143
        %s1145 = sld [smem:[#allocation10 + $0x54]]
        %v1146 = vstv %s1145
        %v1147 = vmul.f32 %v1146, %v1136
        %v1148 = vadd.f32 %v1090, %v1147
        %s1149 = sld [smem:[#allocation10 + $0x78]]
        %v1150 = vstv %s1149
        %v1151 = vmul.f32 %v1150, %v1136
        %v1152 = vadd.f32 %v1098, %v1151
        %s1153 = sld [smem:[#allocation10 + $0x9c]]
        %v1154 = vstv %s1153
        %v1155 = vmul.f32 %v1154, %v1136
        %v1156 = vadd.f32 %v1106, %v1155
        %s1157 = sld [smem:[#allocation10 + $0xc0]]
        %v1158 = vstv %s1157
        %v1159 = vmul.f32 %v1158, %v1136
        %v1160 = vadd.f32 %v1114, %v1159
        %s1161 = sld [smem:[#allocation10 + $0xe4]]
        %v1162 = vstv %s1161
        %v1163 = vmul.f32 %v1162, %v1136
        %v1164 = vadd.f32 %v1122, %v1163
        %s1165 = sld [smem:[#allocation10 + $0x108]]
        %v1166 = vstv %s1165
        %v1167 = vmul.f32 %v1166, %v1136
        %v1168 = vadd.f32 %v1130, %v1167
        %v1169 = vld [vmem:[%s966] sm:$0x1]
        %s1170 = sld [smem:[#allocation10 + $0xd]]
        %v1171 = vstv %s1170
        %v1172 = vmul.f32 %v1171, %v1169
        %1174 = vrot.lane.b32.xlu0 %v1172, 119
        %v1175 = vpop.permute.xlu0 %1174
        %v1177 = vadd.f32 %v1140, %v1175
        %s1178 = sld [smem:[#allocation10 + $0x31]]
        %v1179 = vstv %s1178
        %v1180 = vmul.f32 %v1179, %v1169
        %1182 = vrot.lane.b32.xlu0 %v1180, 119
        %v1183 = vpop.permute.xlu0 %1182
        %v1185 = vadd.f32 %v1144, %v1183
        %s1186 = sld [smem:[#allocation10 + $0x55]]
        %v1187 = vstv %s1186
        %v1188 = vmul.f32 %v1187, %v1169
        %1190 = vrot.lane.b32.xlu0 %v1188, 119
        %v1191 = vpop.permute.xlu0 %1190
        %v1193 = vadd.f32 %v1148, %v1191
        %s1194 = sld [smem:[#allocation10 + $0x79]]
        %v1195 = vstv %s1194
        %v1196 = vmul.f32 %v1195, %v1169
        %1198 = vrot.lane.b32.xlu0 %v1196, 119
        %v1199 = vpop.permute.xlu0 %1198
        %v1201 = vadd.f32 %v1152, %v1199
        %s1202 = sld [smem:[#allocation10 + $0x9d]]
        %v1203 = vstv %s1202
        %v1204 = vmul.f32 %v1203, %v1169
        %1206 = vrot.lane.b32.xlu0 %v1204, 119
        %v1207 = vpop.permute.xlu0 %1206
        %v1209 = vadd.f32 %v1156, %v1207
        %s1210 = sld [smem:[#allocation10 + $0xc1]]
        %v1211 = vstv %s1210
        %v1212 = vmul.f32 %v1211, %v1169
        %1214 = vrot.lane.b32.xlu0 %v1212, 119
        %v1215 = vpop.permute.xlu0 %1214
        %v1217 = vadd.f32 %v1160, %v1215
        %s1218 = sld [smem:[#allocation10 + $0xe5]]
        %v1219 = vstv %s1218
        %v1220 = vmul.f32 %v1219, %v1169
        %1222 = vrot.lane.b32.xlu0 %v1220, 119
        %v1223 = vpop.permute.xlu0 %1222
        %v1225 = vadd.f32 %v1164, %v1223
        %s1226 = sld [smem:[#allocation10 + $0x109]]
        %v1227 = vstv %s1226
        %v1228 = vmul.f32 %v1227, %v1169
        %1230 = vrot.lane.b32.xlu0 %v1228, 119
        %v1231 = vpop.permute.xlu0 %1230
        %v1233 = vadd.f32 %v1168, %v1231
        %s1234 = sld [smem:[#allocation10 + $0xe]]
        %v1235 = vstv %s1234
        %v1236 = vmul.f32 %v1235, %v1131
        %1238 = vrot.lane.b32.xlu0 %v1236, 119
        %v1239 = vpop.permute.xlu0 %1238
        %v1241 = vadd.f32 %v1177, %v1239
        %s1242 = sld [smem:[#allocation10 + $0x32]]
        %v1243 = vstv %s1242
        %v1244 = vmul.f32 %v1243, %v1131
        %1246 = vrot.lane.b32.xlu0 %v1244, 119
        %v1247 = vpop.permute.xlu0 %1246
        %v1249 = vadd.f32 %v1185, %v1247
        %s1250 = sld [smem:[#allocation10 + $0x56]]
        %v1251 = vstv %s1250
        %v1252 = vmul.f32 %v1251, %v1131
        %1254 = vrot.lane.b32.xlu0 %v1252, 119
        %v1255 = vpop.permute.xlu0 %1254
        %v1257 = vadd.f32 %v1193, %v1255
        %s1258 = sld [smem:[#allocation10 + $0x7a]]
        %v1259 = vstv %s1258
        %v1260 = vmul.f32 %v1259, %v1131
        %1262 = vrot.lane.b32.xlu0 %v1260, 119
        %v1263 = vpop.permute.xlu0 %1262
        %v1265 = vadd.f32 %v1201, %v1263
        %s1266 = sld [smem:[#allocation10 + $0x9e]]
        %v1267 = vstv %s1266
        %v1268 = vmul.f32 %v1267, %v1131
        %1270 = vrot.lane.b32.xlu0 %v1268, 119
        %v1271 = vpop.permute.xlu0 %1270
        %v1273 = vadd.f32 %v1209, %v1271
        %s1274 = sld [smem:[#allocation10 + $0xc2]]
        %v1275 = vstv %s1274
        %v1276 = vmul.f32 %v1275, %v1131
        %1278 = vrot.lane.b32.xlu0 %v1276, 119
        %v1279 = vpop.permute.xlu0 %1278
        %v1281 = vadd.f32 %v1217, %v1279
        %s1282 = sld [smem:[#allocation10 + $0xe6]]
        %v1283 = vstv %s1282
        %v1284 = vmul.f32 %v1283, %v1131
        %1286 = vrot.lane.b32.xlu0 %v1284, 119
        %v1287 = vpop.permute.xlu0 %1286
        %v1289 = vadd.f32 %v1225, %v1287
        %s1290 = sld [smem:[#allocation10 + $0x10a]]
        %v1291 = vstv %s1290
        %v1292 = vmul.f32 %v1291, %v1131
        %1294 = vrot.lane.b32.xlu0 %v1292, 119
        %v1295 = vpop.permute.xlu0 %1294
        %v1297 = vadd.f32 %v1233, %v1295
        %1299 = vrot.lane.b32.xlu0 %v968, 120
        %v1300 = vpop.permute.xlu0 %1299
        %v1302 = vsel %vm287, 0.0, %v1300
        %s1303 = sld [smem:[#allocation10 + $0xf]]
        %v1304 = vstv %s1303
        %v1305 = vmul.f32 %v1304, %v1302
        %v1306 = vadd.f32 %v1241, %v1305
        %s1307 = sld [smem:[#allocation10 + $0x33]]
        %v1308 = vstv %s1307
        %v1309 = vmul.f32 %v1308, %v1302
        %v1310 = vadd.f32 %v1249, %v1309
        %s1311 = sld [smem:[#allocation10 + $0x57]]
        %v1312 = vstv %s1311
        %v1313 = vmul.f32 %v1312, %v1302
        %v1314 = vadd.f32 %v1257, %v1313
        %s1315 = sld [smem:[#allocation10 + $0x7b]]
        %v1316 = vstv %s1315
        %v1317 = vmul.f32 %v1316, %v1302
        %v1318 = vadd.f32 %v1265, %v1317
        %s1319 = sld [smem:[#allocation10 + $0x9f]]
        %v1320 = vstv %s1319
        %v1321 = vmul.f32 %v1320, %v1302
        %v1322 = vadd.f32 %v1273, %v1321
        %s1323 = sld [smem:[#allocation10 + $0xc3]]
        %v1324 = vstv %s1323
        %v1325 = vmul.f32 %v1324, %v1302
        %v1326 = vadd.f32 %v1281, %v1325
        %s1327 = sld [smem:[#allocation10 + $0xe7]]
        %v1328 = vstv %s1327
        %v1329 = vmul.f32 %v1328, %v1302
        %v1330 = vadd.f32 %v1289, %v1329
        %s1331 = sld [smem:[#allocation10 + $0x10b]]
        %v1332 = vstv %s1331
        %v1333 = vmul.f32 %v1332, %v1302
        %v1334 = vadd.f32 %v1297, %v1333
        %s1335 = sld [smem:[#allocation10 + $0x10]]
        %v1336 = vstv %s1335
        %v1337 = vmul.f32 %v1336, %v1002
        %1339 = vrot.lane.b32.xlu0 %v1337, 119
        %v1340 = vpop.permute.xlu0 %1339
        %v1342 = vadd.f32 %v1306, %v1340
        %s1343 = sld [smem:[#allocation10 + $0x34]]
        %v1344 = vstv %s1343
        %v1345 = vmul.f32 %v1344, %v1002
        %1347 = vrot.lane.b32.xlu0 %v1345, 119
        %v1348 = vpop.permute.xlu0 %1347
        %v1350 = vadd.f32 %v1310, %v1348
        %s1351 = sld [smem:[#allocation10 + $0x58]]
        %v1352 = vstv %s1351
        %v1353 = vmul.f32 %v1352, %v1002
        %1355 = vrot.lane.b32.xlu0 %v1353, 119
        %v1356 = vpop.permute.xlu0 %1355
        %v1358 = vadd.f32 %v1314, %v1356
        %s1359 = sld [smem:[#allocation10 + $0x7c]]
        %v1360 = vstv %s1359
        %v1361 = vmul.f32 %v1360, %v1002
        %1363 = vrot.lane.b32.xlu0 %v1361, 119
        %v1364 = vpop.permute.xlu0 %1363
        %v1366 = vadd.f32 %v1318, %v1364
        %s1367 = sld [smem:[#allocation10 + $0xa0]]
        %v1368 = vstv %s1367
        %v1369 = vmul.f32 %v1368, %v1002
        %1371 = vrot.lane.b32.xlu0 %v1369, 119
        %v1372 = vpop.permute.xlu0 %1371
        %v1374 = vadd.f32 %v1322, %v1372
        %s1375 = sld [smem:[#allocation10 + $0xc4]]
        %v1376 = vstv %s1375
        %v1377 = vmul.f32 %v1376, %v1002
        %1379 = vrot.lane.b32.xlu0 %v1377, 119
        %v1380 = vpop.permute.xlu0 %1379
        %v1382 = vadd.f32 %v1326, %v1380
        %s1383 = sld [smem:[#allocation10 + $0xe8]]
        %v1384 = vstv %s1383
        %v1385 = vmul.f32 %v1384, %v1002
        %1387 = vrot.lane.b32.xlu0 %v1385, 119
        %v1388 = vpop.permute.xlu0 %1387
        %v1390 = vadd.f32 %v1330, %v1388
        %s1391 = sld [smem:[#allocation10 + $0x10c]]
        %v1392 = vstv %s1391
        %v1393 = vmul.f32 %v1392, %v1002
        %1395 = vrot.lane.b32.xlu0 %v1393, 119
        %v1396 = vpop.permute.xlu0 %1395
        %v1398 = vadd.f32 %v1334, %v1396
        %s1399 = sld [smem:[#allocation10 + $0x11]]
        %v1400 = vstv %s1399
        %v1401 = vmul.f32 %v1400, %v968
        %1403 = vrot.lane.b32.xlu0 %v1401, 119
        %v1404 = vpop.permute.xlu0 %1403
        %v1406 = vadd.f32 %v1342, %v1404
        %s1407 = sld [smem:[#allocation10 + $0x35]]
        %v1408 = vstv %s1407
        %v1409 = vmul.f32 %v1408, %v968
        %1411 = vrot.lane.b32.xlu0 %v1409, 119
        %v1412 = vpop.permute.xlu0 %1411
        %v1414 = vadd.f32 %v1350, %v1412
        %s1415 = sld [smem:[#allocation10 + $0x59]]
        %v1416 = vstv %s1415
        %v1417 = vmul.f32 %v1416, %v968
        %1419 = vrot.lane.b32.xlu0 %v1417, 119
        %v1420 = vpop.permute.xlu0 %1419
        %v1422 = vadd.f32 %v1358, %v1420
        %s1423 = sld [smem:[#allocation10 + $0x7d]]
        %v1424 = vstv %s1423
        %v1425 = vmul.f32 %v1424, %v968
        %1427 = vrot.lane.b32.xlu0 %v1425, 119
        %v1428 = vpop.permute.xlu0 %1427
        %v1430 = vadd.f32 %v1366, %v1428
        %s1431 = sld [smem:[#allocation10 + $0xa1]]
        %v1432 = vstv %s1431
        %v1433 = vmul.f32 %v1432, %v968
        %1435 = vrot.lane.b32.xlu0 %v1433, 119
        %v1436 = vpop.permute.xlu0 %1435
        %v1438 = vadd.f32 %v1374, %v1436
        %s1439 = sld [smem:[#allocation10 + $0xc5]]
        %v1440 = vstv %s1439
        %v1441 = vmul.f32 %v1440, %v968
        %1443 = vrot.lane.b32.xlu0 %v1441, 119
        %v1444 = vpop.permute.xlu0 %1443
        %v1446 = vadd.f32 %v1382, %v1444
        %s1447 = sld [smem:[#allocation10 + $0xe9]]
        %v1448 = vstv %s1447
        %v1449 = vmul.f32 %v1448, %v968
        %1451 = vrot.lane.b32.xlu0 %v1449, 119
        %v1452 = vpop.permute.xlu0 %1451
        %v1454 = vadd.f32 %v1390, %v1452
        %s1455 = sld [smem:[#allocation10 + $0x10d]]
        %v1456 = vstv %s1455
        %v1457 = vmul.f32 %v1456, %v968
        %1459 = vrot.lane.b32.xlu0 %v1457, 119
        %v1460 = vpop.permute.xlu0 %1459
        %v1462 = vadd.f32 %v1398, %v1460
        %s1463 = scalar_lea.vmem [#allocation3], 8
        %v1464 = vld [vmem:[%s1463] sm:$0xf]
        %v1465 = vld [vmem:[%s1463 + $0x10] sm:$0xf]
        %v1466 = vsel %vm317, %v1464, 0.0
        %v1467 = vsel %vm317, %v1465, 0.0
        %v1468 = vadd.f32 %v1466, %v1467
        %1469 = vadd.xlane.f32.xlu0 %v1468
        %v1470 = vpop.xlane.xlu0 %1469
        %v1471 = vrot.slane %v1470, 4
        %v1472 = vadd.f32 %v1470, %v1471
        %v1473 = vrot.slane %v1472, 2
        %v1474 = vadd.f32 %v1472, %v1473
        %v1475 = vrot.slane %v1474, 1
        %v1476 = vadd.f32 %v1474, %v1475
        %s1477 = vtos %v1476
        %v1478 = vrcp.pop 512.0
        %v1479 = vmul.f32 512.0, %v1478
        %v1480 = vsub.f32 1.0, %v1479
        %v1481 = vmul.f32 %v1478, %v1480
        %v1482 = vadd.f32 %v1478, %v1481
        %vm1483 = vweird.f32 %v1478
        %v1484 = vsel %vm1483, %v1478, %v1482
        %s1485 = vtos %v1484
        %s1486 = smul.f32 %s1477, %s1485
        %v1487 = vstv %s1486
        %v1488 = vsub.f32 %v1464, %v1487
        %v1489 = vsub.f32 %v1465, %v1487
        %v1490 = vmul.f32 %v1488, %v1488
        %v1491 = vmul.f32 %v1489, %v1489
        %v1492 = vsel %vm317, %v1490, 0.0
        %v1493 = vsel %vm317, %v1491, 0.0
        %v1494 = vadd.f32 %v1492, %v1493
        %1495 = vadd.xlane.f32.xlu0 %v1494
        %v1496 = vpop.xlane.xlu0 %1495
        %v1497 = vrot.slane %v1496, 4
        %v1498 = vadd.f32 %v1496, %v1497
        %v1499 = vrot.slane %v1498, 2
        %v1500 = vadd.f32 %v1498, %v1499
        %v1501 = vrot.slane %v1500, 1
        %v1502 = vadd.f32 %v1500, %v1501
        %s1503 = vtos %v1502
        %v1504 = vrcp.pop 512.0
        %v1505 = vmul.f32 512.0, %v1504
        %v1506 = vsub.f32 1.0, %v1505
        %v1507 = vmul.f32 %v1504, %v1506
        %v1508 = vadd.f32 %v1504, %v1507
        %vm1509 = vweird.f32 %v1504
        %v1510 = vsel %vm1509, %v1504, %v1508
        %s1511 = vtos %v1510
        %s1512 = smul.f32 %s1503, %s1511
        %s1513 = sld [smem:[#allocation8 + $0x2]]
        %s1514 = sadd.f32 %s1512, 1e-05
        %v1515 = vstv %s1514
        %v1516 = vrsqrt.pop %v1515
        %v1517 = vmul.f32 %v1516, %v1515
        %v1518 = vmul.f32 %v1517, %v1516
        %v1519 = vmul.f32 0.5, %v1518
        %v1520 = vsub.f32 1.5, %v1519
        %v1521 = vmul.f32 %v1516, %v1520
        %vm1522 = vweird.f32 %v1515
        %vm1523 = vweird.f32 %v1516
        %vm1524 = vmor %vm1522, %vm1523
        %v1525 = vsel %vm1524, %v1516, %v1521
        %s1526 = vtos %v1525
        %s1527 = smul.f32 %s1513, %s1526
        %s1528 = sld [smem:[#allocation9 + $0x2]]
        %s1529 = smul.f32 %s1486, %s1527
        %s1530 = ssub.f32 %s1528, %s1529
        %v1531 = vstv %s1527
        %v1532 = vmul.f32 %v297, %v1531
        %v1533 = vstv %s1530
        %v1534 = vadd.f32 %v1532, %v1533
        %v1535 = vmax.f32 %v1534, 0.0
        %1537 = vrot.lane.b32.xlu0 %v1535, 9
        %v1538 = vpop.permute.xlu0 %1537
        %s1540 = scalar_lea.vmem [#allocation2], 8
        %1541 = vst.msk [vmem:[%s1540] sm:$0xf] %vm392, %v1538
        %v1542 = vld [vmem:[%s1540 + $0x3] sm:$0x1]
        %v1543 = vsel %vm287, 0.0, %v1542
        %s1544 = sld [smem:[#allocation10 + $0x12]]
        %v1545 = vstv %s1544
        %v1546 = vmul.f32 %v1545, %v1543
        %v1547 = vadd.f32 %v1406, %v1546
        %s1548 = sld [smem:[#allocation10 + $0x36]]
        %v1549 = vstv %s1548
        %v1550 = vmul.f32 %v1549, %v1543
        %v1551 = vadd.f32 %v1414, %v1550
        %s1552 = sld [smem:[#allocation10 + $0x5a]]
        %v1553 = vstv %s1552
        %v1554 = vmul.f32 %v1553, %v1543
        %v1555 = vadd.f32 %v1422, %v1554
        %s1556 = sld [smem:[#allocation10 + $0x7e]]
        %v1557 = vstv %s1556
        %v1558 = vmul.f32 %v1557, %v1543
        %v1559 = vadd.f32 %v1430, %v1558
        %s1560 = sld [smem:[#allocation10 + $0xa2]]
        %v1561 = vstv %s1560
        %v1562 = vmul.f32 %v1561, %v1543
        %v1563 = vadd.f32 %v1438, %v1562
        %s1564 = sld [smem:[#allocation10 + $0xc6]]
        %v1565 = vstv %s1564
        %v1566 = vmul.f32 %v1565, %v1543
        %v1567 = vadd.f32 %v1446, %v1566
        %s1568 = sld [smem:[#allocation10 + $0xea]]
        %v1569 = vstv %s1568
        %v1570 = vmul.f32 %v1569, %v1543
        %v1571 = vadd.f32 %v1454, %v1570
        %s1572 = sld [smem:[#allocation10 + $0x10e]]
        %v1573 = vstv %s1572
        %v1574 = vmul.f32 %v1573, %v1543
        %v1575 = vadd.f32 %v1462, %v1574
        %v1576 = vld [vmem:[%s1540 + $0x2] sm:$0x1]
        %s1577 = sld [smem:[#allocation10 + $0x13]]
        %v1578 = vstv %s1577
        %v1579 = vmul.f32 %v1578, %v1576
        %1581 = vrot.lane.b32.xlu0 %v1579, 127
        %v1582 = vpop.permute.xlu0 %1581
        %v1584 = vadd.f32 %v1547, %v1582
        %s1585 = sld [smem:[#allocation10 + $0x37]]
        %v1586 = vstv %s1585
        %v1587 = vmul.f32 %v1586, %v1576
        %1589 = vrot.lane.b32.xlu0 %v1587, 127
        %v1590 = vpop.permute.xlu0 %1589
        %v1592 = vadd.f32 %v1551, %v1590
        %s1593 = sld [smem:[#allocation10 + $0x5b]]
        %v1594 = vstv %s1593
        %v1595 = vmul.f32 %v1594, %v1576
        %1597 = vrot.lane.b32.xlu0 %v1595, 127
        %v1598 = vpop.permute.xlu0 %1597
        %v1600 = vadd.f32 %v1555, %v1598
        %s1601 = sld [smem:[#allocation10 + $0x7f]]
        %v1602 = vstv %s1601
        %v1603 = vmul.f32 %v1602, %v1576
        %1605 = vrot.lane.b32.xlu0 %v1603, 127
        %v1606 = vpop.permute.xlu0 %1605
        %v1608 = vadd.f32 %v1559, %v1606
        %s1609 = sld [smem:[#allocation10 + $0xa3]]
        %v1610 = vstv %s1609
        %v1611 = vmul.f32 %v1610, %v1576
        %1613 = vrot.lane.b32.xlu0 %v1611, 127
        %v1614 = vpop.permute.xlu0 %1613
        %v1616 = vadd.f32 %v1563, %v1614
        %s1617 = sld [smem:[#allocation10 + $0xc7]]
        %v1618 = vstv %s1617
        %v1619 = vmul.f32 %v1618, %v1576
        %1621 = vrot.lane.b32.xlu0 %v1619, 127
        %v1622 = vpop.permute.xlu0 %1621
        %v1624 = vadd.f32 %v1567, %v1622
        %s1625 = sld [smem:[#allocation10 + $0xeb]]
        %v1626 = vstv %s1625
        %v1627 = vmul.f32 %v1626, %v1576
        %1629 = vrot.lane.b32.xlu0 %v1627, 127
        %v1630 = vpop.permute.xlu0 %1629
        %v1632 = vadd.f32 %v1571, %v1630
        %s1633 = sld [smem:[#allocation10 + $0x10f]]
        %v1634 = vstv %s1633
        %v1635 = vmul.f32 %v1634, %v1576
        %1637 = vrot.lane.b32.xlu0 %v1635, 127
        %v1638 = vpop.permute.xlu0 %1637
        %v1640 = vadd.f32 %v1575, %v1638
        %s1641 = sld [smem:[#allocation10 + $0x14]]
        %v1642 = vstv %s1641
        %v1643 = vmul.f32 %v1642, %v1542
        %1645 = vrot.lane.b32.xlu0 %v1643, 127
        %v1646 = vpop.permute.xlu0 %1645
        %v1648 = vadd.f32 %v1584, %v1646
        %s1649 = sld [smem:[#allocation10 + $0x38]]
        %v1650 = vstv %s1649
        %v1651 = vmul.f32 %v1650, %v1542
        %1653 = vrot.lane.b32.xlu0 %v1651, 127
        %v1654 = vpop.permute.xlu0 %1653
        %v1656 = vadd.f32 %v1592, %v1654
        %s1657 = sld [smem:[#allocation10 + $0x5c]]
        %v1658 = vstv %s1657
        %v1659 = vmul.f32 %v1658, %v1542
        %1661 = vrot.lane.b32.xlu0 %v1659, 127
        %v1662 = vpop.permute.xlu0 %1661
        %v1664 = vadd.f32 %v1600, %v1662
        %s1665 = sld [smem:[#allocation10 + $0x80]]
        %v1666 = vstv %s1665
        %v1667 = vmul.f32 %v1666, %v1542
        %1669 = vrot.lane.b32.xlu0 %v1667, 127
        %v1670 = vpop.permute.xlu0 %1669
        %v1672 = vadd.f32 %v1608, %v1670
        %s1673 = sld [smem:[#allocation10 + $0xa4]]
        %v1674 = vstv %s1673
        %v1675 = vmul.f32 %v1674, %v1542
        %1677 = vrot.lane.b32.xlu0 %v1675, 127
        %v1678 = vpop.permute.xlu0 %1677
        %v1680 = vadd.f32 %v1616, %v1678
        %s1681 = sld [smem:[#allocation10 + $0xc8]]
        %v1682 = vstv %s1681
        %v1683 = vmul.f32 %v1682, %v1542
        %1685 = vrot.lane.b32.xlu0 %v1683, 127
        %v1686 = vpop.permute.xlu0 %1685
        %v1688 = vadd.f32 %v1624, %v1686
        %s1689 = sld [smem:[#allocation10 + $0xec]]
        %v1690 = vstv %s1689
        %v1691 = vmul.f32 %v1690, %v1542
        %1693 = vrot.lane.b32.xlu0 %v1691, 127
        %v1694 = vpop.permute.xlu0 %1693
        %v1696 = vadd.f32 %v1632, %v1694
        %s1697 = sld [smem:[#allocation10 + $0x110]]
        %v1698 = vstv %s1697
        %v1699 = vmul.f32 %v1698, %v1542
        %1701 = vrot.lane.b32.xlu0 %v1699, 127
        %v1702 = vpop.permute.xlu0 %1701
        %v1704 = vadd.f32 %v1640, %v1702
        %v1705 = vld [vmem:[%s1540 + $0x1] sm:$0x1]
        %1707 = vrot.lane.b32.xlu0 %v1705, 120
        %v1708 = vpop.permute.xlu0 %1707
        %v1710 = vsel %vm287, 0.0, %v1708
        %s1711 = sld [smem:[#allocation10 + $0x15]]
        %v1712 = vstv %s1711
        %v1713 = vmul.f32 %v1712, %v1710
        %v1714 = vadd.f32 %v1648, %v1713
        %s1715 = sld [smem:[#allocation10 + $0x39]]
        %v1716 = vstv %s1715
        %v1717 = vmul.f32 %v1716, %v1710
        %v1718 = vadd.f32 %v1656, %v1717
        %s1719 = sld [smem:[#allocation10 + $0x5d]]
        %v1720 = vstv %s1719
        %v1721 = vmul.f32 %v1720, %v1710
        %v1722 = vadd.f32 %v1664, %v1721
        %s1723 = sld [smem:[#allocation10 + $0x81]]
        %v1724 = vstv %s1723
        %v1725 = vmul.f32 %v1724, %v1710
        %v1726 = vadd.f32 %v1672, %v1725
        %s1727 = sld [smem:[#allocation10 + $0xa5]]
        %v1728 = vstv %s1727
        %v1729 = vmul.f32 %v1728, %v1710
        %v1730 = vadd.f32 %v1680, %v1729
        %s1731 = sld [smem:[#allocation10 + $0xc9]]
        %v1732 = vstv %s1731
        %v1733 = vmul.f32 %v1732, %v1710
        %v1734 = vadd.f32 %v1688, %v1733
        %s1735 = sld [smem:[#allocation10 + $0xed]]
        %v1736 = vstv %s1735
        %v1737 = vmul.f32 %v1736, %v1710
        %v1738 = vadd.f32 %v1696, %v1737
        %s1739 = sld [smem:[#allocation10 + $0x111]]
        %v1740 = vstv %s1739
        %v1741 = vmul.f32 %v1740, %v1710
        %v1742 = vadd.f32 %v1704, %v1741
        %v1743 = vld [vmem:[%s1540] sm:$0x1]
        %s1744 = sld [smem:[#allocation10 + $0x16]]
        %v1745 = vstv %s1744
        %v1746 = vmul.f32 %v1745, %v1743
        %1748 = vrot.lane.b32.xlu0 %v1746, 119
        %v1749 = vpop.permute.xlu0 %1748
        %v1751 = vadd.f32 %v1714, %v1749
        %s1752 = sld [smem:[#allocation10 + $0x3a]]
        %v1753 = vstv %s1752
        %v1754 = vmul.f32 %v1753, %v1743
        %1756 = vrot.lane.b32.xlu0 %v1754, 119
        %v1757 = vpop.permute.xlu0 %1756
        %v1759 = vadd.f32 %v1718, %v1757
        %s1760 = sld [smem:[#allocation10 + $0x5e]]
        %v1761 = vstv %s1760
        %v1762 = vmul.f32 %v1761, %v1743
        %1764 = vrot.lane.b32.xlu0 %v1762, 119
        %v1765 = vpop.permute.xlu0 %1764
        %v1767 = vadd.f32 %v1722, %v1765
        %s1768 = sld [smem:[#allocation10 + $0x82]]
        %v1769 = vstv %s1768
        %v1770 = vmul.f32 %v1769, %v1743
        %1772 = vrot.lane.b32.xlu0 %v1770, 119
        %v1773 = vpop.permute.xlu0 %1772
        %v1775 = vadd.f32 %v1726, %v1773
        %s1776 = sld [smem:[#allocation10 + $0xa6]]
        %v1777 = vstv %s1776
        %v1778 = vmul.f32 %v1777, %v1743
        %1780 = vrot.lane.b32.xlu0 %v1778, 119
        %v1781 = vpop.permute.xlu0 %1780
        %v1783 = vadd.f32 %v1730, %v1781
        %s1784 = sld [smem:[#allocation10 + $0xca]]
        %v1785 = vstv %s1784
        %v1786 = vmul.f32 %v1785, %v1743
        %1788 = vrot.lane.b32.xlu0 %v1786, 119
        %v1789 = vpop.permute.xlu0 %1788
        %v1791 = vadd.f32 %v1734, %v1789
        %s1792 = sld [smem:[#allocation10 + $0xee]]
        %v1793 = vstv %s1792
        %v1794 = vmul.f32 %v1793, %v1743
        %1796 = vrot.lane.b32.xlu0 %v1794, 119
        %v1797 = vpop.permute.xlu0 %1796
        %v1799 = vadd.f32 %v1738, %v1797
        %s1800 = sld [smem:[#allocation10 + $0x112]]
        %v1801 = vstv %s1800
        %v1802 = vmul.f32 %v1801, %v1743
        %1804 = vrot.lane.b32.xlu0 %v1802, 119
        %v1805 = vpop.permute.xlu0 %1804
        %v1807 = vadd.f32 %v1742, %v1805
        %s1808 = sld [smem:[#allocation10 + $0x17]]
        %v1809 = vstv %s1808
        %v1810 = vmul.f32 %v1809, %v1705
        %1812 = vrot.lane.b32.xlu0 %v1810, 119
        %v1813 = vpop.permute.xlu0 %1812
        %v1815 = vadd.f32 %v1751, %v1813
        %s1816 = sld [smem:[#allocation10 + $0x3b]]
        %v1817 = vstv %s1816
        %v1818 = vmul.f32 %v1817, %v1705
        %1820 = vrot.lane.b32.xlu0 %v1818, 119
        %v1821 = vpop.permute.xlu0 %1820
        %v1823 = vadd.f32 %v1759, %v1821
        %s1824 = sld [smem:[#allocation10 + $0x5f]]
        %v1825 = vstv %s1824
        %v1826 = vmul.f32 %v1825, %v1705
        %1828 = vrot.lane.b32.xlu0 %v1826, 119
        %v1829 = vpop.permute.xlu0 %1828
        %v1831 = vadd.f32 %v1767, %v1829
        %s1832 = sld [smem:[#allocation10 + $0x83]]
        %v1833 = vstv %s1832
        %v1834 = vmul.f32 %v1833, %v1705
        %1836 = vrot.lane.b32.xlu0 %v1834, 119
        %v1837 = vpop.permute.xlu0 %1836
        %v1839 = vadd.f32 %v1775, %v1837
        %s1840 = sld [smem:[#allocation10 + $0xa7]]
        %v1841 = vstv %s1840
        %v1842 = vmul.f32 %v1841, %v1705
        %1844 = vrot.lane.b32.xlu0 %v1842, 119
        %v1845 = vpop.permute.xlu0 %1844
        %v1847 = vadd.f32 %v1783, %v1845
        %s1848 = sld [smem:[#allocation10 + $0xcb]]
        %v1849 = vstv %s1848
        %v1850 = vmul.f32 %v1849, %v1705
        %1852 = vrot.lane.b32.xlu0 %v1850, 119
        %v1853 = vpop.permute.xlu0 %1852
        %v1855 = vadd.f32 %v1791, %v1853
        %s1856 = sld [smem:[#allocation10 + $0xef]]
        %v1857 = vstv %s1856
        %v1858 = vmul.f32 %v1857, %v1705
        %1860 = vrot.lane.b32.xlu0 %v1858, 119
        %v1861 = vpop.permute.xlu0 %1860
        %v1863 = vadd.f32 %v1799, %v1861
        %s1864 = sld [smem:[#allocation10 + $0x113]]
        %v1865 = vstv %s1864
        %v1866 = vmul.f32 %v1865, %v1705
        %1868 = vrot.lane.b32.xlu0 %v1866, 119
        %v1869 = vpop.permute.xlu0 %1868
        %v1871 = vadd.f32 %v1807, %v1869
        %1873 = vrot.lane.b32.xlu0 %v1542, 120
        %v1874 = vpop.permute.xlu0 %1873
        %v1876 = vsel %vm287, 0.0, %v1874
        %s1877 = sld [smem:[#allocation10 + $0x18]]
        %v1878 = vstv %s1877
        %v1879 = vmul.f32 %v1878, %v1876
        %v1880 = vadd.f32 %v1815, %v1879
        %s1881 = sld [smem:[#allocation10 + $0x3c]]
        %v1882 = vstv %s1881
        %v1883 = vmul.f32 %v1882, %v1876
        %v1884 = vadd.f32 %v1823, %v1883
        %s1885 = sld [smem:[#allocation10 + $0x60]]
        %v1886 = vstv %s1885
        %v1887 = vmul.f32 %v1886, %v1876
        %v1888 = vadd.f32 %v1831, %v1887
        %s1889 = sld [smem:[#allocation10 + $0x84]]
        %v1890 = vstv %s1889
        %v1891 = vmul.f32 %v1890, %v1876
        %v1892 = vadd.f32 %v1839, %v1891
        %s1893 = sld [smem:[#allocation10 + $0xa8]]
        %v1894 = vstv %s1893
        %v1895 = vmul.f32 %v1894, %v1876
        %v1896 = vadd.f32 %v1847, %v1895
        %s1897 = sld [smem:[#allocation10 + $0xcc]]
        %v1898 = vstv %s1897
        %v1899 = vmul.f32 %v1898, %v1876
        %v1900 = vadd.f32 %v1855, %v1899
        %s1901 = sld [smem:[#allocation10 + $0xf0]]
        %v1902 = vstv %s1901
        %v1903 = vmul.f32 %v1902, %v1876
        %v1904 = vadd.f32 %v1863, %v1903
        %s1905 = sld [smem:[#allocation10 + $0x114]]
        %v1906 = vstv %s1905
        %v1907 = vmul.f32 %v1906, %v1876
        %v1908 = vadd.f32 %v1871, %v1907
        %s1909 = sld [smem:[#allocation10 + $0x19]]
        %v1910 = vstv %s1909
        %v1911 = vmul.f32 %v1910, %v1576
        %1913 = vrot.lane.b32.xlu0 %v1911, 119
        %v1914 = vpop.permute.xlu0 %1913
        %v1916 = vadd.f32 %v1880, %v1914
        %s1917 = sld [smem:[#allocation10 + $0x3d]]
        %v1918 = vstv %s1917
        %v1919 = vmul.f32 %v1918, %v1576
        %1921 = vrot.lane.b32.xlu0 %v1919, 119
        %v1922 = vpop.permute.xlu0 %1921
        %v1924 = vadd.f32 %v1884, %v1922
        %s1925 = sld [smem:[#allocation10 + $0x61]]
        %v1926 = vstv %s1925
        %v1927 = vmul.f32 %v1926, %v1576
        %1929 = vrot.lane.b32.xlu0 %v1927, 119
        %v1930 = vpop.permute.xlu0 %1929
        %v1932 = vadd.f32 %v1888, %v1930
        %s1933 = sld [smem:[#allocation10 + $0x85]]
        %v1934 = vstv %s1933
        %v1935 = vmul.f32 %v1934, %v1576
        %1937 = vrot.lane.b32.xlu0 %v1935, 119
        %v1938 = vpop.permute.xlu0 %1937
        %v1940 = vadd.f32 %v1892, %v1938
        %s1941 = sld [smem:[#allocation10 + $0xa9]]
        %v1942 = vstv %s1941
        %v1943 = vmul.f32 %v1942, %v1576
        %1945 = vrot.lane.b32.xlu0 %v1943, 119
        %v1946 = vpop.permute.xlu0 %1945
        %v1948 = vadd.f32 %v1896, %v1946
        %s1949 = sld [smem:[#allocation10 + $0xcd]]
        %v1950 = vstv %s1949
        %v1951 = vmul.f32 %v1950, %v1576
        %1953 = vrot.lane.b32.xlu0 %v1951, 119
        %v1954 = vpop.permute.xlu0 %1953
        %v1956 = vadd.f32 %v1900, %v1954
        %s1957 = sld [smem:[#allocation10 + $0xf1]]
        %v1958 = vstv %s1957
        %v1959 = vmul.f32 %v1958, %v1576
        %1961 = vrot.lane.b32.xlu0 %v1959, 119
        %v1962 = vpop.permute.xlu0 %1961
        %v1964 = vadd.f32 %v1904, %v1962
        %s1965 = sld [smem:[#allocation10 + $0x115]]
        %v1966 = vstv %s1965
        %v1967 = vmul.f32 %v1966, %v1576
        %1969 = vrot.lane.b32.xlu0 %v1967, 119
        %v1970 = vpop.permute.xlu0 %1969
        %v1972 = vadd.f32 %v1908, %v1970
        %s1973 = sld [smem:[#allocation10 + $0x1a]]
        %v1974 = vstv %s1973
        %v1975 = vmul.f32 %v1974, %v1542
        %1977 = vrot.lane.b32.xlu0 %v1975, 119
        %v1978 = vpop.permute.xlu0 %1977
        %v1980 = vadd.f32 %v1916, %v1978
        %s1981 = sld [smem:[#allocation10 + $0x3e]]
        %v1982 = vstv %s1981
        %v1983 = vmul.f32 %v1982, %v1542
        %1985 = vrot.lane.b32.xlu0 %v1983, 119
        %v1986 = vpop.permute.xlu0 %1985
        %v1988 = vadd.f32 %v1924, %v1986
        %s1989 = sld [smem:[#allocation10 + $0x62]]
        %v1990 = vstv %s1989
        %v1991 = vmul.f32 %v1990, %v1542
        %1993 = vrot.lane.b32.xlu0 %v1991, 119
        %v1994 = vpop.permute.xlu0 %1993
        %v1996 = vadd.f32 %v1932, %v1994
        %s1997 = sld [smem:[#allocation10 + $0x86]]
        %v1998 = vstv %s1997
        %v1999 = vmul.f32 %v1998, %v1542
        %2001 = vrot.lane.b32.xlu0 %v1999, 119
        %v2002 = vpop.permute.xlu0 %2001
        %v2004 = vadd.f32 %v1940, %v2002
        %s2005 = sld [smem:[#allocation10 + $0xaa]]
        %v2006 = vstv %s2005
        %v2007 = vmul.f32 %v2006, %v1542
        %2009 = vrot.lane.b32.xlu0 %v2007, 119
        %v2010 = vpop.permute.xlu0 %2009
        %v2012 = vadd.f32 %v1948, %v2010
        %s2013 = sld [smem:[#allocation10 + $0xce]]
        %v2014 = vstv %s2013
        %v2015 = vmul.f32 %v2014, %v1542
        %2017 = vrot.lane.b32.xlu0 %v2015, 119
        %v2018 = vpop.permute.xlu0 %2017
        %v2020 = vadd.f32 %v1956, %v2018
        %s2021 = sld [smem:[#allocation10 + $0xf2]]
        %v2022 = vstv %s2021
        %v2023 = vmul.f32 %v2022, %v1542
        %2025 = vrot.lane.b32.xlu0 %v2023, 119
        %v2026 = vpop.permute.xlu0 %2025
        %v2028 = vadd.f32 %v1964, %v2026
        %s2029 = sld [smem:[#allocation10 + $0x116]]
        %v2030 = vstv %s2029
        %v2031 = vmul.f32 %v2030, %v1542
        %2033 = vrot.lane.b32.xlu0 %v2031, 119
        %v2034 = vpop.permute.xlu0 %2033
        %v2036 = vadd.f32 %v1972, %v2034
        %s2037 = scalar_lea.vmem [#allocation3], 12
        %v2038 = vld [vmem:[%s2037] sm:$0xf]
        %v2039 = vld [vmem:[%s2037 + $0x10] sm:$0xf]
        %v2040 = vsel %vm317, %v2038, 0.0
        %v2041 = vsel %vm317, %v2039, 0.0
        %v2042 = vadd.f32 %v2040, %v2041
        %2043 = vadd.xlane.f32.xlu0 %v2042
        %v2044 = vpop.xlane.xlu0 %2043
        %v2045 = vrot.slane %v2044, 4
        %v2046 = vadd.f32 %v2044, %v2045
        %v2047 = vrot.slane %v2046, 2
        %v2048 = vadd.f32 %v2046, %v2047
        %v2049 = vrot.slane %v2048, 1
        %v2050 = vadd.f32 %v2048, %v2049
        %s2051 = vtos %v2050
        %v2052 = vrcp.pop 512.0
        %v2053 = vmul.f32 512.0, %v2052
        %v2054 = vsub.f32 1.0, %v2053
        %v2055 = vmul.f32 %v2052, %v2054
        %v2056 = vadd.f32 %v2052, %v2055
        %vm2057 = vweird.f32 %v2052
        %v2058 = vsel %vm2057, %v2052, %v2056
        %s2059 = vtos %v2058
        %s2060 = smul.f32 %s2051, %s2059
        %v2061 = vstv %s2060
        %v2062 = vsub.f32 %v2038, %v2061
        %v2063 = vsub.f32 %v2039, %v2061
        %v2064 = vmul.f32 %v2062, %v2062
        %v2065 = vmul.f32 %v2063, %v2063
        %v2066 = vsel %vm317, %v2064, 0.0
        %v2067 = vsel %vm317, %v2065, 0.0
        %v2068 = vadd.f32 %v2066, %v2067
        %2069 = vadd.xlane.f32.xlu0 %v2068
        %v2070 = vpop.xlane.xlu0 %2069
        %v2071 = vrot.slane %v2070, 4
        %v2072 = vadd.f32 %v2070, %v2071
        %v2073 = vrot.slane %v2072, 2
        %v2074 = vadd.f32 %v2072, %v2073
        %v2075 = vrot.slane %v2074, 1
        %v2076 = vadd.f32 %v2074, %v2075
        %s2077 = vtos %v2076
        %v2078 = vrcp.pop 512.0
        %v2079 = vmul.f32 512.0, %v2078
        %v2080 = vsub.f32 1.0, %v2079
        %v2081 = vmul.f32 %v2078, %v2080
        %v2082 = vadd.f32 %v2078, %v2081
        %vm2083 = vweird.f32 %v2078
        %v2084 = vsel %vm2083, %v2078, %v2082
        %s2085 = vtos %v2084
        %s2086 = smul.f32 %s2077, %s2085
        %s2087 = sld [smem:[#allocation8 + $0x3]]
        %s2088 = sadd.f32 %s2086, 1e-05
        %v2089 = vstv %s2088
        %v2090 = vrsqrt.pop %v2089
        %v2091 = vmul.f32 %v2090, %v2089
        %v2092 = vmul.f32 %v2091, %v2090
        %v2093 = vmul.f32 0.5, %v2092
        %v2094 = vsub.f32 1.5, %v2093
        %v2095 = vmul.f32 %v2090, %v2094
        %vm2096 = vweird.f32 %v2089
        %vm2097 = vweird.f32 %v2090
        %vm2098 = vmor %vm2096, %vm2097
        %v2099 = vsel %vm2098, %v2090, %v2095
        %s2100 = vtos %v2099
        %s2101 = smul.f32 %s2087, %s2100
        %s2102 = sld [smem:[#allocation9 + $0x3]]
        %s2103 = smul.f32 %s2060, %s2101
        %s2104 = ssub.f32 %s2102, %s2103
        %v2105 = vstv %s2101
        %v2106 = vmul.f32 %v298, %v2105
        %v2107 = vstv %s2104
        %v2108 = vadd.f32 %v2106, %v2107
        %v2109 = vmax.f32 %v2108, 0.0
        %2111 = vrot.lane.b32.xlu0 %v2109, 9
        %v2112 = vpop.permute.xlu0 %2111
        %s2114 = scalar_lea.vmem [#allocation2], 12
        %2115 = vst.msk [vmem:[%s2114] sm:$0xf] %vm392, %v2112
        %v2116 = vld [vmem:[%s2114 + $0x3] sm:$0x1]
        %v2117 = vsel %vm287, 0.0, %v2116
        %s2118 = sld [smem:[#allocation10 + $0x1b]]
        %v2119 = vstv %s2118
        %v2120 = vmul.f32 %v2119, %v2117
        %v2121 = vadd.f32 %v1980, %v2120
        %s2122 = sld [smem:[#allocation10 + $0x3f]]
        %v2123 = vstv %s2122
        %v2124 = vmul.f32 %v2123, %v2117
        %v2125 = vadd.f32 %v1988, %v2124
        %s2126 = sld [smem:[#allocation10 + $0x63]]
        %v2127 = vstv %s2126
        %v2128 = vmul.f32 %v2127, %v2117
        %v2129 = vadd.f32 %v1996, %v2128
        %s2130 = sld [smem:[#allocation10 + $0x87]]
        %v2131 = vstv %s2130
        %v2132 = vmul.f32 %v2131, %v2117
        %v2133 = vadd.f32 %v2004, %v2132
        %s2134 = sld [smem:[#allocation10 + $0xab]]
        %v2135 = vstv %s2134
        %v2136 = vmul.f32 %v2135, %v2117
        %v2137 = vadd.f32 %v2012, %v2136
        %s2138 = sld [smem:[#allocation10 + $0xcf]]
        %v2139 = vstv %s2138
        %v2140 = vmul.f32 %v2139, %v2117
        %v2141 = vadd.f32 %v2020, %v2140
        %s2142 = sld [smem:[#allocation10 + $0xf3]]
        %v2143 = vstv %s2142
        %v2144 = vmul.f32 %v2143, %v2117
        %v2145 = vadd.f32 %v2028, %v2144
        %s2146 = sld [smem:[#allocation10 + $0x117]]
        %v2147 = vstv %s2146
        %v2148 = vmul.f32 %v2147, %v2117
        %v2149 = vadd.f32 %v2036, %v2148
        %v2150 = vld [vmem:[%s2114 + $0x2] sm:$0x1]
        %s2151 = sld [smem:[#allocation10 + $0x1c]]
        %v2152 = vstv %s2151
        %v2153 = vmul.f32 %v2152, %v2150
        %2155 = vrot.lane.b32.xlu0 %v2153, 127
        %v2156 = vpop.permute.xlu0 %2155
        %v2158 = vadd.f32 %v2121, %v2156
        %s2159 = sld [smem:[#allocation10 + $0x40]]
        %v2160 = vstv %s2159
        %v2161 = vmul.f32 %v2160, %v2150
        %2163 = vrot.lane.b32.xlu0 %v2161, 127
        %v2164 = vpop.permute.xlu0 %2163
        %v2166 = vadd.f32 %v2125, %v2164
        %s2167 = sld [smem:[#allocation10 + $0x64]]
        %v2168 = vstv %s2167
        %v2169 = vmul.f32 %v2168, %v2150
        %2171 = vrot.lane.b32.xlu0 %v2169, 127
        %v2172 = vpop.permute.xlu0 %2171
        %v2174 = vadd.f32 %v2129, %v2172
        %s2175 = sld [smem:[#allocation10 + $0x88]]
        %v2176 = vstv %s2175
        %v2177 = vmul.f32 %v2176, %v2150
        %2179 = vrot.lane.b32.xlu0 %v2177, 127
        %v2180 = vpop.permute.xlu0 %2179
        %v2182 = vadd.f32 %v2133, %v2180
        %s2183 = sld [smem:[#allocation10 + $0xac]]
        %v2184 = vstv %s2183
        %v2185 = vmul.f32 %v2184, %v2150
        %2187 = vrot.lane.b32.xlu0 %v2185, 127
        %v2188 = vpop.permute.xlu0 %2187
        %v2190 = vadd.f32 %v2137, %v2188
        %s2191 = sld [smem:[#allocation10 + $0xd0]]
        %v2192 = vstv %s2191
        %v2193 = vmul.f32 %v2192, %v2150
        %2195 = vrot.lane.b32.xlu0 %v2193, 127
        %v2196 = vpop.permute.xlu0 %2195
        %v2198 = vadd.f32 %v2141, %v2196
        %s2199 = sld [smem:[#allocation10 + $0xf4]]
        %v2200 = vstv %s2199
        %v2201 = vmul.f32 %v2200, %v2150
        %2203 = vrot.lane.b32.xlu0 %v2201, 127
        %v2204 = vpop.permute.xlu0 %2203
        %v2206 = vadd.f32 %v2145, %v2204
        %s2207 = sld [smem:[#allocation10 + $0x118]]
        %v2208 = vstv %s2207
        %v2209 = vmul.f32 %v2208, %v2150
        %2211 = vrot.lane.b32.xlu0 %v2209, 127
        %v2212 = vpop.permute.xlu0 %2211
        %v2214 = vadd.f32 %v2149, %v2212
        %s2215 = sld [smem:[#allocation10 + $0x1d]]
        %v2216 = vstv %s2215
        %v2217 = vmul.f32 %v2216, %v2116
        %2219 = vrot.lane.b32.xlu0 %v2217, 127
        %v2220 = vpop.permute.xlu0 %2219
        %v2222 = vadd.f32 %v2158, %v2220
        %s2223 = sld [smem:[#allocation10 + $0x41]]
        %v2224 = vstv %s2223
        %v2225 = vmul.f32 %v2224, %v2116
        %2227 = vrot.lane.b32.xlu0 %v2225, 127
        %v2228 = vpop.permute.xlu0 %2227
        %v2230 = vadd.f32 %v2166, %v2228
        %s2231 = sld [smem:[#allocation10 + $0x65]]
        %v2232 = vstv %s2231
        %v2233 = vmul.f32 %v2232, %v2116
        %2235 = vrot.lane.b32.xlu0 %v2233, 127
        %v2236 = vpop.permute.xlu0 %2235
        %v2238 = vadd.f32 %v2174, %v2236
        %s2239 = sld [smem:[#allocation10 + $0x89]]
        %v2240 = vstv %s2239
        %v2241 = vmul.f32 %v2240, %v2116
        %2243 = vrot.lane.b32.xlu0 %v2241, 127
        %v2244 = vpop.permute.xlu0 %2243
        %v2246 = vadd.f32 %v2182, %v2244
        %s2247 = sld [smem:[#allocation10 + $0xad]]
        %v2248 = vstv %s2247
        %v2249 = vmul.f32 %v2248, %v2116
        %2251 = vrot.lane.b32.xlu0 %v2249, 127
        %v2252 = vpop.permute.xlu0 %2251
        %v2254 = vadd.f32 %v2190, %v2252
        %s2255 = sld [smem:[#allocation10 + $0xd1]]
        %v2256 = vstv %s2255
        %v2257 = vmul.f32 %v2256, %v2116
        %2259 = vrot.lane.b32.xlu0 %v2257, 127
        %v2260 = vpop.permute.xlu0 %2259
        %v2262 = vadd.f32 %v2198, %v2260
        %s2263 = sld [smem:[#allocation10 + $0xf5]]
        %v2264 = vstv %s2263
        %v2265 = vmul.f32 %v2264, %v2116
        %2267 = vrot.lane.b32.xlu0 %v2265, 127
        %v2268 = vpop.permute.xlu0 %2267
        %v2270 = vadd.f32 %v2206, %v2268
        %s2271 = sld [smem:[#allocation10 + $0x119]]
        %v2272 = vstv %s2271
        %v2273 = vmul.f32 %v2272, %v2116
        %2275 = vrot.lane.b32.xlu0 %v2273, 127
        %v2276 = vpop.permute.xlu0 %2275
        %v2278 = vadd.f32 %v2214, %v2276
        %v2279 = vld [vmem:[%s2114 + $0x1] sm:$0x1]
        %2281 = vrot.lane.b32.xlu0 %v2279, 120
        %v2282 = vpop.permute.xlu0 %2281
        %v2284 = vsel %vm287, 0.0, %v2282
        %s2285 = sld [smem:[#allocation10 + $0x1e]]
        %v2286 = vstv %s2285
        %v2287 = vmul.f32 %v2286, %v2284
        %v2288 = vadd.f32 %v2222, %v2287
        %s2289 = sld [smem:[#allocation10 + $0x42]]
        %v2290 = vstv %s2289
        %v2291 = vmul.f32 %v2290, %v2284
        %v2292 = vadd.f32 %v2230, %v2291
        %s2293 = sld [smem:[#allocation10 + $0x66]]
        %v2294 = vstv %s2293
        %v2295 = vmul.f32 %v2294, %v2284
        %v2296 = vadd.f32 %v2238, %v2295
        %s2297 = sld [smem:[#allocation10 + $0x8a]]
        %v2298 = vstv %s2297
        %v2299 = vmul.f32 %v2298, %v2284
        %v2300 = vadd.f32 %v2246, %v2299
        %s2301 = sld [smem:[#allocation10 + $0xae]]
        %v2302 = vstv %s2301
        %v2303 = vmul.f32 %v2302, %v2284
        %v2304 = vadd.f32 %v2254, %v2303
        %s2305 = sld [smem:[#allocation10 + $0xd2]]
        %v2306 = vstv %s2305
        %v2307 = vmul.f32 %v2306, %v2284
        %v2308 = vadd.f32 %v2262, %v2307
        %s2309 = sld [smem:[#allocation10 + $0xf6]]
        %v2310 = vstv %s2309
        %v2311 = vmul.f32 %v2310, %v2284
        %v2312 = vadd.f32 %v2270, %v2311
        %s2313 = sld [smem:[#allocation10 + $0x11a]]
        %v2314 = vstv %s2313
        %v2315 = vmul.f32 %v2314, %v2284
        %v2316 = vadd.f32 %v2278, %v2315
        %v2317 = vld [vmem:[%s2114] sm:$0x1]
        %s2318 = sld [smem:[#allocation10 + $0x1f]]
        %v2319 = vstv %s2318
        %v2320 = vmul.f32 %v2319, %v2317
        %2322 = vrot.lane.b32.xlu0 %v2320, 119
        %v2323 = vpop.permute.xlu0 %2322
        %v2325 = vadd.f32 %v2288, %v2323
        %s2326 = sld [smem:[#allocation10 + $0x43]]
        %v2327 = vstv %s2326
        %v2328 = vmul.f32 %v2327, %v2317
        %2330 = vrot.lane.b32.xlu0 %v2328, 119
        %v2331 = vpop.permute.xlu0 %2330
        %v2333 = vadd.f32 %v2292, %v2331
        %s2334 = sld [smem:[#allocation10 + $0x67]]
        %v2335 = vstv %s2334
        %v2336 = vmul.f32 %v2335, %v2317
        %2338 = vrot.lane.b32.xlu0 %v2336, 119
        %v2339 = vpop.permute.xlu0 %2338
        %v2341 = vadd.f32 %v2296, %v2339
        %s2342 = sld [smem:[#allocation10 + $0x8b]]
        %v2343 = vstv %s2342
        %v2344 = vmul.f32 %v2343, %v2317
        %2346 = vrot.lane.b32.xlu0 %v2344, 119
        %v2347 = vpop.permute.xlu0 %2346
        %v2349 = vadd.f32 %v2300, %v2347
        %s2350 = sld [smem:[#allocation10 + $0xaf]]
        %v2351 = vstv %s2350
        %v2352 = vmul.f32 %v2351, %v2317
        %2354 = vrot.lane.b32.xlu0 %v2352, 119
        %v2355 = vpop.permute.xlu0 %2354
        %v2357 = vadd.f32 %v2304, %v2355
        %s2358 = sld [smem:[#allocation10 + $0xd3]]
        %v2359 = vstv %s2358
        %v2360 = vmul.f32 %v2359, %v2317
        %2362 = vrot.lane.b32.xlu0 %v2360, 119
        %v2363 = vpop.permute.xlu0 %2362
        %v2365 = vadd.f32 %v2308, %v2363
        %s2366 = sld [smem:[#allocation10 + $0xf7]]
        %v2367 = vstv %s2366
        %v2368 = vmul.f32 %v2367, %v2317
        %2370 = vrot.lane.b32.xlu0 %v2368, 119
        %v2371 = vpop.permute.xlu0 %2370
        %v2373 = vadd.f32 %v2312, %v2371
        %s2374 = sld [smem:[#allocation10 + $0x11b]]
        %v2375 = vstv %s2374
        %v2376 = vmul.f32 %v2375, %v2317
        %2378 = vrot.lane.b32.xlu0 %v2376, 119
        %v2379 = vpop.permute.xlu0 %2378
        %v2381 = vadd.f32 %v2316, %v2379
        %s2382 = sld [smem:[#allocation10 + $0x20]]
        %v2383 = vstv %s2382
        %v2384 = vmul.f32 %v2383, %v2279
        %2386 = vrot.lane.b32.xlu0 %v2384, 119
        %v2387 = vpop.permute.xlu0 %2386
        %v2389 = vadd.f32 %v2325, %v2387
        %s2390 = sld [smem:[#allocation10 + $0x44]]
        %v2391 = vstv %s2390
        %v2392 = vmul.f32 %v2391, %v2279
        %2394 = vrot.lane.b32.xlu0 %v2392, 119
        %v2395 = vpop.permute.xlu0 %2394
        %v2397 = vadd.f32 %v2333, %v2395
        %s2398 = sld [smem:[#allocation10 + $0x68]]
        %v2399 = vstv %s2398
        %v2400 = vmul.f32 %v2399, %v2279
        %2402 = vrot.lane.b32.xlu0 %v2400, 119
        %v2403 = vpop.permute.xlu0 %2402
        %v2405 = vadd.f32 %v2341, %v2403
        %s2406 = sld [smem:[#allocation10 + $0x8c]]
        %v2407 = vstv %s2406
        %v2408 = vmul.f32 %v2407, %v2279
        %2410 = vrot.lane.b32.xlu0 %v2408, 119
        %v2411 = vpop.permute.xlu0 %2410
        %v2413 = vadd.f32 %v2349, %v2411
        %s2414 = sld [smem:[#allocation10 + $0xb0]]
        %v2415 = vstv %s2414
        %v2416 = vmul.f32 %v2415, %v2279
        %2418 = vrot.lane.b32.xlu0 %v2416, 119
        %v2419 = vpop.permute.xlu0 %2418
        %v2421 = vadd.f32 %v2357, %v2419
        %s2422 = sld [smem:[#allocation10 + $0xd4]]
        %v2423 = vstv %s2422
        %v2424 = vmul.f32 %v2423, %v2279
        %2426 = vrot.lane.b32.xlu0 %v2424, 119
        %v2427 = vpop.permute.xlu0 %2426
        %v2429 = vadd.f32 %v2365, %v2427
        %s2430 = sld [smem:[#allocation10 + $0xf8]]
        %v2431 = vstv %s2430
        %v2432 = vmul.f32 %v2431, %v2279
        %2434 = vrot.lane.b32.xlu0 %v2432, 119
        %v2435 = vpop.permute.xlu0 %2434
        %v2437 = vadd.f32 %v2373, %v2435
        %s2438 = sld [smem:[#allocation10 + $0x11c]]
        %v2439 = vstv %s2438
        %v2440 = vmul.f32 %v2439, %v2279
        %2442 = vrot.lane.b32.xlu0 %v2440, 119
        %v2443 = vpop.permute.xlu0 %2442
        %v2445 = vadd.f32 %v2381, %v2443
        %2447 = vrot.lane.b32.xlu0 %v2116, 120
        %v2448 = vpop.permute.xlu0 %2447
        %v2450 = vsel %vm287, 0.0, %v2448
        %s2451 = sld [smem:[#allocation10 + $0x21]]
        %v2452 = vstv %s2451
        %v2453 = vmul.f32 %v2452, %v2450
        %v2454 = vadd.f32 %v2389, %v2453
        %s2455 = sld [smem:[#allocation10 + $0x45]]
        %v2456 = vstv %s2455
        %v2457 = vmul.f32 %v2456, %v2450
        %v2458 = vadd.f32 %v2397, %v2457
        %s2459 = sld [smem:[#allocation10 + $0x69]]
        %v2460 = vstv %s2459
        %v2461 = vmul.f32 %v2460, %v2450
        %v2462 = vadd.f32 %v2405, %v2461
        %s2463 = sld [smem:[#allocation10 + $0x8d]]
        %v2464 = vstv %s2463
        %v2465 = vmul.f32 %v2464, %v2450
        %v2466 = vadd.f32 %v2413, %v2465
        %s2467 = sld [smem:[#allocation10 + $0xb1]]
        %v2468 = vstv %s2467
        %v2469 = vmul.f32 %v2468, %v2450
        %v2470 = vadd.f32 %v2421, %v2469
        %s2471 = sld [smem:[#allocation10 + $0xd5]]
        %v2472 = vstv %s2471
        %v2473 = vmul.f32 %v2472, %v2450
        %v2474 = vadd.f32 %v2429, %v2473
        %s2475 = sld [smem:[#allocation10 + $0xf9]]
        %v2476 = vstv %s2475
        %v2477 = vmul.f32 %v2476, %v2450
        %v2478 = vadd.f32 %v2437, %v2477
        %s2479 = sld [smem:[#allocation10 + $0x11d]]
        %v2480 = vstv %s2479
        %v2481 = vmul.f32 %v2480, %v2450
        %v2482 = vadd.f32 %v2445, %v2481
        %s2483 = sld [smem:[#allocation10 + $0x22]]
        %v2484 = vstv %s2483
        %v2485 = vmul.f32 %v2484, %v2150
        %2487 = vrot.lane.b32.xlu0 %v2485, 119
        %v2488 = vpop.permute.xlu0 %2487
        %v2490 = vadd.f32 %v2454, %v2488
        %s2491 = sld [smem:[#allocation10 + $0x46]]
        %v2492 = vstv %s2491
        %v2493 = vmul.f32 %v2492, %v2150
        %2495 = vrot.lane.b32.xlu0 %v2493, 119
        %v2496 = vpop.permute.xlu0 %2495
        %v2498 = vadd.f32 %v2458, %v2496
        %s2499 = sld [smem:[#allocation10 + $0x6a]]
        %v2500 = vstv %s2499
        %v2501 = vmul.f32 %v2500, %v2150
        %2503 = vrot.lane.b32.xlu0 %v2501, 119
        %v2504 = vpop.permute.xlu0 %2503
        %v2506 = vadd.f32 %v2462, %v2504
        %s2507 = sld [smem:[#allocation10 + $0x8e]]
        %v2508 = vstv %s2507
        %v2509 = vmul.f32 %v2508, %v2150
        %2511 = vrot.lane.b32.xlu0 %v2509, 119
        %v2512 = vpop.permute.xlu0 %2511
        %v2514 = vadd.f32 %v2466, %v2512
        %s2515 = sld [smem:[#allocation10 + $0xb2]]
        %v2516 = vstv %s2515
        %v2517 = vmul.f32 %v2516, %v2150
        %2519 = vrot.lane.b32.xlu0 %v2517, 119
        %v2520 = vpop.permute.xlu0 %2519
        %v2522 = vadd.f32 %v2470, %v2520
        %s2523 = sld [smem:[#allocation10 + $0xd6]]
        %v2524 = vstv %s2523
        %v2525 = vmul.f32 %v2524, %v2150
        %2527 = vrot.lane.b32.xlu0 %v2525, 119
        %v2528 = vpop.permute.xlu0 %2527
        %v2530 = vadd.f32 %v2474, %v2528
        %s2531 = sld [smem:[#allocation10 + $0xfa]]
        %v2532 = vstv %s2531
        %v2533 = vmul.f32 %v2532, %v2150
        %2535 = vrot.lane.b32.xlu0 %v2533, 119
        %v2536 = vpop.permute.xlu0 %2535
        %v2538 = vadd.f32 %v2478, %v2536
        %s2539 = sld [smem:[#allocation10 + $0x11e]]
        %v2540 = vstv %s2539
        %v2541 = vmul.f32 %v2540, %v2150
        %2543 = vrot.lane.b32.xlu0 %v2541, 119
        %v2544 = vpop.permute.xlu0 %2543
        %v2546 = vadd.f32 %v2482, %v2544
        %s2547 = sld [smem:[#allocation10 + $0x23]]
        %v2548 = vstv %s2547
        %v2549 = vmul.f32 %v2548, %v2116
        %2551 = vrot.lane.b32.xlu0 %v2549, 119
        %v2552 = vpop.permute.xlu0 %2551
        %v2554 = vadd.f32 %v2490, %v2552
        %s2555 = sld [smem:[#allocation10 + $0x47]]
        %v2556 = vstv %s2555
        %v2557 = vmul.f32 %v2556, %v2116
        %2559 = vrot.lane.b32.xlu0 %v2557, 119
        %v2560 = vpop.permute.xlu0 %2559
        %v2562 = vadd.f32 %v2498, %v2560
        %s2563 = sld [smem:[#allocation10 + $0x6b]]
        %v2564 = vstv %s2563
        %v2565 = vmul.f32 %v2564, %v2116
        %2567 = vrot.lane.b32.xlu0 %v2565, 119
        %v2568 = vpop.permute.xlu0 %2567
        %v2570 = vadd.f32 %v2506, %v2568
        %s2571 = sld [smem:[#allocation10 + $0x8f]]
        %v2572 = vstv %s2571
        %v2573 = vmul.f32 %v2572, %v2116
        %2575 = vrot.lane.b32.xlu0 %v2573, 119
        %v2576 = vpop.permute.xlu0 %2575
        %v2578 = vadd.f32 %v2514, %v2576
        %s2579 = sld [smem:[#allocation10 + $0xb3]]
        %v2580 = vstv %s2579
        %v2581 = vmul.f32 %v2580, %v2116
        %2583 = vrot.lane.b32.xlu0 %v2581, 119
        %v2584 = vpop.permute.xlu0 %2583
        %v2586 = vadd.f32 %v2522, %v2584
        %s2587 = sld [smem:[#allocation10 + $0xd7]]
        %v2588 = vstv %s2587
        %v2589 = vmul.f32 %v2588, %v2116
        %2591 = vrot.lane.b32.xlu0 %v2589, 119
        %v2592 = vpop.permute.xlu0 %2591
        %v2594 = vadd.f32 %v2530, %v2592
        %s2595 = sld [smem:[#allocation10 + $0xfb]]
        %v2596 = vstv %s2595
        %v2597 = vmul.f32 %v2596, %v2116
        %2599 = vrot.lane.b32.xlu0 %v2597, 119
        %v2600 = vpop.permute.xlu0 %2599
        %v2602 = vadd.f32 %v2538, %v2600
        %s2603 = sld [smem:[#allocation10 + $0x11f]]
        %v2604 = vstv %s2603
        %v2605 = vmul.f32 %v2604, %v2116
        %2607 = vrot.lane.b32.xlu0 %v2605, 119
        %v2608 = vpop.permute.xlu0 %2607
        %v2610 = vadd.f32 %v2546, %v2608
        %vm2611 = vcmask 516096
        %2612 = vst.msk [vmem:[%s272] sm:$0x1] %vm2611, %v2554
        %2613 = vst.msk [vmem:[%s272 + $0x1] sm:$0x1] %vm2611, %v2562
        %2614 = vst.msk [vmem:[%s272 + $0x2] sm:$0x1] %vm2611, %v2570
        %2615 = vst.msk [vmem:[%s272 + $0x3] sm:$0x1] %vm2611, %v2578
        %2616 = vst.msk [vmem:[%s272 + $0x4] sm:$0x1] %vm2611, %v2586
        %2617 = vst.msk [vmem:[%s272 + $0x5] sm:$0x1] %vm2611, %v2594
        %2618 = vst.msk [vmem:[%s272 + $0x6] sm:$0x1] %vm2611, %v2602
        %2619 = vst.msk [vmem:[%s272 + $0x7] sm:$0x1] %vm2611, %v2610
        %s2620 = sand.u32 %s137, 1
        %s2621 = scalar_lea.sflag [#allocation5], %s2620
        %s2622 = sand.u32 %s137, 1
        %s2623 = smul.addr %s2622, 8
        %s2624 = scalar_lea.vmem [#allocation14], %s2623
        // Predicated region
        $region61: #{tpu_custom_call.1} parent=39 // pred_check
          %p2625 = pneg %p147
        $region62: #{tpu_custom_call.1} parent=39 // pred_check_branch
          %2627 = sbr.rel (%p2625) target = $region64
        $region63: #{tpu_custom_call.1} parent=39 // pred_region
          %2629 = vsyncadd %s2621, 0
          %s2630 = smul.addr %s24, 8
          %s2631 = scalar_lea.hbm %s5, %s2630
          %s2633 = sshll.u32 %s2624, 4
          %s2634 = int_to_ptr.vmem [resolvable:$true] %s2633
          %s2635 = sshll.u32 %s2631, 4
          %s2636 = int_to_ptr.hbm [resolvable:$true] %s2635
          %2638 = dma.vmem_to_hbm [thread:$0]  %s2634, 128, %s2636, %s2621
        $region64: #{tpu_custom_call.1} parent=39 // pred_fallthru
          _
      $region40: #{tpu_custom_call.1} parent=5 // pred_fallthru
        _
      %p2639 = scmp.le.s32.totalorder 2, %s19
      // Predicated region
      $region65: #{tpu_custom_call.1} parent=5 // pred_check
        %p2640 = pneg %p2639
      $region66: #{tpu_custom_call.1} parent=5 // pred_check_branch
        %2642 = sbr.rel (%p2640) target = $region68
      $region67: #{tpu_custom_call.1} parent=5 // pred_region
        %s2643 = ssub.s32 %s19, 2
        // Predicated region
        $region69: #{tpu_custom_call.1} parent=67 // pred_check
          %p2644 = pneg %p153
        $region70: #{tpu_custom_call.1} parent=67 // pred_check_branch
          %2646 = sbr.rel (%p2644) target = $region72
        $region71: #{tpu_custom_call.1} parent=67 // pred_region
          %s2647 = sand.u32 %s138, 1
          %s2648 = scalar_lea.sflag [#allocation5], %s2647
          %s2649 = sand.u32 %s138, 1
          %s2650 = smul.addr %s2649, 8
          %s2651 = scalar_lea.vmem [#allocation14], %s2650
          %2653 = dma.done %s2648, 128
        $region72: #{tpu_custom_call.1} parent=67 // pred_fallthru
          _
      $region68: #{tpu_custom_call.1} parent=5 // pred_fallthru
        _
    $region6: #{tpu_custom_call.1} parent=1 // loop_footer
      %s23 = sadd.s32 1, %s19
    $region7: #{tpu_custom_call.1} parent=1 // loop_footer_branch
      %18 = sbr.rel target = $region3
    $region8: #{tpu_custom_call.1} parent=1 // loop_exit
      _
    %2654 = vsyncpa [#allocation4], 1
    %s2655 = scalar_lea.sflag [#allocation4], 1
    %2656 = vsyncpa %s2655, 1
    %2657 = vsyncpa [#allocation5], 1
    %s2658 = scalar_lea.sflag [#allocation5], 1
    %2659 = vsyncpa %s2658, 1
    %2660 = vsyncpa [#allocation6], 1
    %s2661 = scalar_lea.sflag [#allocation6], 1
    %2662 = vsyncpa %s2661, 1
    %2663 = vsyncpa [#allocation11], 1
    %2664 = vsyncpa [#allocation7], 1
    %s2665 = scalar_lea.sflag [#allocation7], 1
    %2666 = vsyncpa %s2665, 1
    %2667 = vsyncpa [#allocation13], 1

</llo_original>
